<compile_context>
chip_gen: v7x
topology: tpu7x:2x2x1
jax: 0.10.0
libtpu: 0.0.40
codegen_flags: <defaults>
</compile_context>

<pallas_src>
from functools import partial

import jax
import jax.numpy as jnp
from jax.experimental import pallas as pl
from jax.experimental.pallas import tpu as pltpu

LANE = 128


def _round_up(n, m):
    return ((n + m - 1) // m) * m


def _pick_row_tile(H, W, row_tile=None):
    """Row tile so that M_tile = row_tile*W is roughly 256-1024 and divides H."""
    if row_tile is None:
        row_tile = max(1, min(H, 512 // max(W, 1)))
    row_tile = max(1, min(row_tile, H))
    while H % row_tile != 0:
        row_tile -= 1
    return row_tile


def _pick_vmem_limit():
    """Per-generation scoped-VMEM limit: headroom on 64 MiB parts, big on 128 MiB."""
    try:
        phys = int(pltpu.get_tpu_info().vmem_capacity_bytes)
    except Exception:
        phys = 64 * 1024 * 1024  # unknown -> assume the small (v7x-like) part
    if phys <= 64 * 1024 * 1024:
        return 48 * 1024 * 1024
    return 96 * 1024 * 1024


def bottleneck_kernel(x_ref, xu_ref, xd_ref, w1_ref, b1_ref, w2_ref, b2_ref,
                      w3_ref, b3_ref, o_ref, pad_ref, *, TR, W, C1p, C2p):
    r = pl.program_id(1)
    num_r = pl.num_programs(1)
    M = TR * W

    x_main = x_ref[0].reshape(M, C1p)        # f32; residual kept exact
    x_up = xu_ref[0, 0]                      # (W, C1p) row above the tile (clamped)
    x_dn = xd_ref[0, 0]                      # (W, C1p) row below the tile (clamped)

    # conv1: 1x1 conv + BN + ReLU on tile rows + both halo rows, one bf16 matmul.
    x_all = jnp.concatenate([x_main, x_up, x_dn], axis=0).astype(jnp.bfloat16)
    h1 = jnp.dot(x_all, w1_ref[...], preferred_element_type=jnp.float32)
    h1 = jnp.maximum(h1 + b1_ref[...], 0.0).astype(jnp.bfloat16)   # ((TR+2)*W, C2p)

    h1_main = h1[:M].reshape(TR, W, C2p)
    h1_up = h1[M:M + W].reshape(1, W, C2p)
    h1_dn = h1[M + W:].reshape(1, W, C2p)
    # Halo rows that fall outside the image are conv2's zero padding.
    h1_up = jnp.where(r > 0, h1_up, jnp.zeros_like(h1_up))
    h1_dn = jnp.where(r < num_r - 1, h1_dn, jnp.zeros_like(h1_dn))

    # Assemble the (TR+2, W+2, C2p) zero-padded h1 block in registers and do a
    # single aligned full-block store into the bf16 halo scratch.
    core = jnp.concatenate([h1_up, h1_main, h1_dn], axis=0)         # (TR+2, W, C2p)
    zcol = jnp.zeros((TR + 2, 1, C2p), jnp.bfloat16)
    pad_ref[...] = jnp.concatenate([zcol, core, zcol], axis=1)

    # conv2: 3x3, stride 1, pad 1, + BN + ReLU as 9 accumulating dots
    # (no im2col slab; f32 accumulation).
    acc = jnp.zeros((M, C2p), jnp.float32)
    for ky in range(3):
        for kx in range(3):
            win = pad_ref[ky:ky + TR, kx:kx + W, :].reshape(M, C2p)   # bf16
            acc = acc + jnp.dot(win, w2_ref[ky * 3 + kx],
                                preferred_element_type=jnp.float32)
    h2 = jnp.maximum(acc + b2_ref[...], 0.0)                          # (M, C2p) f32

    # conv3: 1x1 conv + BN (no activation), identity residual, final ReLU.
    h3 = jnp.dot(h2.astype(jnp.bfloat16), w3_ref[...],
                 preferred_element_type=jnp.float32)
    out = jnp.maximum(h3 + b3_ref[...] + x_main, 0.0)                 # (M, C1p)
    o_ref[0] = out.reshape(TR, W, C1p).astype(o_ref.dtype)


def bottleneck_forward(x, w1f, b1, w2f, b2, w3f, b3, *, row_tile=None):
    """x: (N, H, W, C1) f32 NHWC; w*: BN-folded HWIO conv weights; b*: (Cout,)."""
    N, H, W, C1 = x.shape
    C2 = w1f.shape[-1]
    assert w3f.shape[-1] == C1, "identity residual requires c1 == expansion*c2"

    C1p = _round_up(C1, LANE)
    C2p = _round_up(C2, LANE)
    TR = _pick_row_tile(H, W, row_tile)
    R = H // TR

    # Channel pad only when needed: production DDRNet channels are already
    # multiples of 128, so this pad (and the trailing slice) disappears there;
    # padded channels carry zero weights/biases/inputs so they stay exactly 0.
    xp = x if C1p == C1 else jnp.pad(x, ((0, 0), (0, 0), (0, 0), (0, C1p - C1)))

    w1k = jnp.pad(w1f.reshape(C1, C2),
                  ((0, C1p - C1), (0, C2p - C2))).astype(jnp.bfloat16)
    w2k = jnp.pad(w2f, ((0, 0), (0, 0), (0, C2p - C2), (0, C2p - C2))
                  ).reshape(9, C2p, C2p).astype(jnp.bfloat16)
    w3k = jnp.pad(w3f.reshape(C2, C1),
                  ((0, C2p - C2), (0, C1p - C1))).astype(jnp.bfloat16)
    b1k = jnp.pad(b1, (0, C2p - C2)).reshape(1, C2p)
    b2k = jnp.pad(b2, (0, C2p - C2)).reshape(1, C2p)
    b3k = jnp.pad(b3, (0, C1p - C1)).reshape(1, C1p)

    kernel = partial(bottleneck_kernel, TR=TR, W=W, C1p=C1p, C2p=C2p)

    flops = 2 * N * H * W * (C1p * C2p + 9 * C2p * C2p + C2p * C1p)
    bytes_accessed = int(
        xp.size * 4 + N * H * W * C1p * 4
        + (w1k.size + w2k.size + w3k.size) * 2
        + (b1k.size + b2k.size + b3k.size) * 4)
    cost = pl.CostEstimate(flops=int(flops), transcendentals=0,
                           bytes_accessed=bytes_accessed)
    vmem_limit = _pick_vmem_limit()

    def build(single_buffer_consts):
        def const_spec(a):
            nd = a.ndim
            idx = lambda n, r, _nd=nd: (0,) * _nd
            if single_buffer_consts:
                # Constant index_map -> no need to double-buffer the weights.
                return pl.BlockSpec(a.shape, idx, pipeline_mode=pl.Buffered(1))
            return pl.BlockSpec(a.shape, idx)

        return pl.pallas_call(
            kernel,
            out_shape=jax.ShapeDtypeStruct((N, H, W, C1p), x.dtype),
            grid=(N, R),
            in_specs=[
                # current row tile
                pl.BlockSpec((1, TR, W, C1p), lambda n, r: (n, r, 0, 0)),
                # 1-row halo above (clamped at the top border, masked in-kernel)
                pl.BlockSpec((1, 1, W, C1p),
                             lambda n, r: (n, jnp.maximum(r * TR - 1, 0), 0, 0)),
                # 1-row halo below (clamped at the bottom border, masked in-kernel)
                pl.BlockSpec((1, 1, W, C1p),
                             lambda n, r: (n, jnp.minimum(r * TR + TR, H - 1), 0, 0)),
                const_spec(w1k), const_spec(b1k),
                const_spec(w2k), const_spec(b2k),
                const_spec(w3k), const_spec(b3k),
            ],
            out_specs=pl.BlockSpec((1, TR, W, C1p), lambda n, r: (n, r, 0, 0)),
            scratch_shapes=[
                pltpu.VMEM((TR + 2, W + 2, C2p), jnp.bfloat16),  # zero-halo h1
            ],
            compiler_params=pltpu.CompilerParams(
                dimension_semantics=("parallel", "parallel"),
                vmem_limit_bytes=vmem_limit),
            cost_estimate=cost,
        )

    args = (xp, xp, xp, w1k, b1k, w2k, b2k, w3k, b3k)
    try:
        outp = build(True)(*args)
    except Exception:
        # TODO(synk): pipeline_mode=pl.Buffered(1) not accepted by this JAX
        # build; constants fall back to default double-buffering.
        outp = build(False)(*args)

    return outp if C1p == C1 else outp[..., :C1]


# ---------------- parameter setup (deterministic, BN folded) ----------------

def fold_bn(w_hwio, gamma, beta, mean, var, eps=1e-5):
    scale = gamma / jnp.sqrt(var + eps)          # (Cout,)
    return w_hwio * scale, beta - mean * scale   # scale broadcasts over O dim


def make_params(key, c1, c2):
    ks = jax.random.split(key, 12)

    def bn(kg, kb, km, kv, c):
        gamma = 0.5 + jax.random.uniform(kg, (c,), jnp.float32)
        beta = 0.1 * jax.random.normal(kb, (c,), jnp.float32)
        mean = 0.1 * jax.random.normal(km, (c,), jnp.float32)
        var = 0.5 + jax.random.uniform(kv, (c,), jnp.float32)
        return gamma, beta, mean, var

    w1 = 0.2 * jax.random.normal(ks[0], (1, 1, c1, c2), jnp.float32)
    w2 = 0.2 * jax.random.normal(ks[1], (3, 3, c2, c2), jnp.float32)
    w3 = 0.2 * jax.random.normal(ks[2], (1, 1, c2, 2 * c2), jnp.float32)

    w1f, b1 = fold_bn(w1, *bn(ks[3], ks[4], ks[5], ks[6], c2))
    w2f, b2 = fold_bn(w2, *bn(ks[7], ks[8], ks[9], ks[10], c2))
    g3, be3, m3, v3 = bn(*jax.random.split(ks[11], 4), 2 * c2)
    w3f, b3 = fold_bn(w3, g3, be3, m3, v3)
    return w1f, b1, w2f, b2, w3f, b3


def ref_bottleneck(x, w1f, b1, w2f, b2, w3f, b3):
    """Pure-JAX f32 reference (NHWC convs, full precision)."""
    def conv(h, w, pad):
        return jax.lax.conv_general_dilated(
            h, w, (1, 1), [(pad, pad), (pad, pad)],
            dimension_numbers=("NHWC", "HWIO", "NHWC"),
            precision=jax.lax.Precision.HIGHEST)
    h = jax.nn.relu(conv(x, w1f, 0) + b1)
    h = jax.nn.relu(conv(h, w2f, 1) + b2)
    h = conv(h, w3f, 0) + b3
    return jax.nn.relu(h + x)


if __name__ == "__main__":
    N, H, W = 2, 16, 16
    C2 = 4
    C1 = 2 * C2     # c1 == c2 * expansion -> identity residual, no downsample

    key = jax.random.PRNGKey(0)
    kx, kp = jax.random.split(key)
    x = jax.random.normal(kx, (N, H, W, C1), jnp.float32)
    w1f, b1, w2f, b2, w3f, b3 = make_params(kp, C1, C2)

    # row_tile=4 -> 4 row tiles per image, exercising both halo directions and
    # interior tiles (default row_tile sizing targets M_tile ~= 512).
    out = jax.block_until_ready(
        bottleneck_forward(x, w1f, b1, w2f, b2, w3f, b3, row_tile=4))
    ref = jax.block_until_ready(
        ref_bottleneck(x, w1f, b1, w2f, b2, w3f, b3))

    assert out.shape == (N, H, W, C1)
    max_err = float(jnp.max(jnp.abs(out - ref)))
    # Tolerance loosened vs. the f32 reference because matmul operands are
    # cast to bf16 (f32 accumulation) for full-rate MXU throughput.
    assert jnp.allclose(out, ref, atol=5e-2, rtol=5e-2), max_err
    print("KERNEL_OK")
</pallas_src>

<mosaic_0001>
module attributes {stable_mosaic.version = 11 : i64} {
  func.func @bottleneck_kernel(%arg0: i32, %arg1: i32, %arg2: memref<1x4x16x128xf32, #tpu.memory_space<vmem>>, %arg3: memref<1x1x16x128xf32, #tpu.memory_space<vmem>>, %arg4: memref<1x1x16x128xf32, #tpu.memory_space<vmem>>, %arg5: memref<128x128xbf16, #tpu.memory_space<vmem>>, %arg6: memref<1x128xf32, #tpu.memory_space<vmem>>, %arg7: memref<9x128x128xbf16, #tpu.memory_space<vmem>>, %arg8: memref<1x128xf32, #tpu.memory_space<vmem>>, %arg9: memref<128x128xbf16, #tpu.memory_space<vmem>>, %arg10: memref<1x128xf32, #tpu.memory_space<vmem>>, %arg11: memref<1x4x16x128xf32, #tpu.memory_space<vmem>>, %arg12: memref<6x18x128xbf16, #tpu.memory_space<vmem>>) attributes {dimension_semantics = [#tpu.dimension_semantics<parallel>, #tpu.dimension_semantics<parallel>], iteration_bounds = array<i64: 2, 4>, scalar_prefetch = 0 : i64, scratch_operands = 1 : i64, tpu.core_type = #tpu.core_type<tc>, window_params = [{transform_indices = @transform_0, window_bounds = array<i64: 1, 4, 16, 128>}, {transform_indices = @transform_1, window_bounds = array<i64: 1, 1, 16, 128>}, {transform_indices = @transform_2, window_bounds = array<i64: 1, 1, 16, 128>}, {pipeline_mode = #tpu.pipeline_mode<synchronous>, transform_indices = @transform_3, window_bounds = array<i64: 128, 128>}, {pipeline_mode = #tpu.pipeline_mode<synchronous>, transform_indices = @transform_4, window_bounds = array<i64: 1, 128>}, {pipeline_mode = #tpu.pipeline_mode<synchronous>, transform_indices = @transform_5, window_bounds = array<i64: 9, 128, 128>}, {pipeline_mode = #tpu.pipeline_mode<synchronous>, transform_indices = @transform_6, window_bounds = array<i64: 1, 128>}, {pipeline_mode = #tpu.pipeline_mode<synchronous>, transform_indices = @transform_7, window_bounds = array<i64: 128, 128>}, {pipeline_mode = #tpu.pipeline_mode<synchronous>, transform_indices = @transform_8, window_bounds = array<i64: 1, 128>}, {transform_indices = @transform_9, window_bounds = array<i64: 1, 4, 16, 128>}]} {
    %c0 = arith.constant 0 : index
    %c0_0 = arith.constant 0 : index
    %c0_1 = arith.constant 0 : index
    %c0_2 = arith.constant 0 : index
    %0 = vector.load %arg2[%c0, %c0_0, %c0_1, %c0_2] : memref<1x4x16x128xf32, #tpu.memory_space<vmem>>, vector<1x4x16x128xf32>
    %1 = vector.shape_cast %0 : vector<1x4x16x128xf32> to vector<4x16x128xf32>
    %2 = vector.shape_cast %1 : vector<4x16x128xf32> to vector<64x128xf32>
    %c0_3 = arith.constant 0 : index
    %c0_4 = arith.constant 0 : index
    %c0_5 = arith.constant 0 : index
    %c0_6 = arith.constant 0 : index
    %3 = vector.load %arg3[%c0_3, %c0_4, %c0_5, %c0_6] : memref<1x1x16x128xf32, #tpu.memory_space<vmem>>, vector<1x1x16x128xf32>
    %4 = vector.shape_cast %3 : vector<1x1x16x128xf32> to vector<16x128xf32>
    %c0_7 = arith.constant 0 : index
    %c0_8 = arith.constant 0 : index
    %c0_9 = arith.constant 0 : index
    %c0_10 = arith.constant 0 : index
    %5 = vector.load %arg4[%c0_7, %c0_8, %c0_9, %c0_10] : memref<1x1x16x128xf32, #tpu.memory_space<vmem>>, vector<1x1x16x128xf32>
    %6 = vector.shape_cast %5 : vector<1x1x16x128xf32> to vector<16x128xf32>
    %7 = tpu.concatenate %2, %4, %6 in 0 : vector<64x128xf32>, vector<16x128xf32>, vector<16x128xf32> -> vector<96x128xf32>
    %8 = arith.truncf %7 : vector<96x128xf32> to vector<96x128xbf16>
    %c0_11 = arith.constant 0 : index
    %c0_12 = arith.constant 0 : index
    %9 = vector.load %arg5[%c0_11, %c0_12] : memref<128x128xbf16, #tpu.memory_space<vmem>>, vector<128x128xbf16>
    %cst = arith.constant dense<0.000000e+00> : vector<96x128xf32>
    %10 = tpu.matmul %8, %9, %cst {dimension_numbers = #tpu.dot_dimension_numbers<[1], [0], [0], [1], [0, 0, 1, 1], [], []>} : vector<96x128xbf16>, vector<128x128xbf16>, vector<96x128xf32> -> vector<96x128xf32>
    %c0_13 = arith.constant 0 : index
    %c0_14 = arith.constant 0 : index
    %11 = vector.load %arg6[%c0_13, %c0_14] : memref<1x128xf32, #tpu.memory_space<vmem>>, vector<1x128xf32>
    %12 = vector.broadcast %11 : vector<1x128xf32> to vector<96x128xf32>
    %13 = arith.addf %10, %12 : vector<96x128xf32>
    %cst_15 = arith.constant 0.000000e+00 : f32
    %14 = vector.broadcast %cst_15 : f32 to vector<96x128xf32>
    %15 = arith.maximumf %13, %14 : vector<96x128xf32>
    %16 = arith.truncf %15 : vector<96x128xf32> to vector<96x128xbf16>
    %17 = vector.extract_strided_slice %16 {offsets = [0, 0], sizes = [64, 128], strides = [1, 1]} : vector<96x128xbf16> to vector<64x128xbf16>
    %18 = vector.shape_cast %17 : vector<64x128xbf16> to vector<4x16x128xbf16>
    %19 = vector.extract_strided_slice %16 {offsets = [64, 0], sizes = [16, 128], strides = [1, 1]} : vector<96x128xbf16> to vector<16x128xbf16>
    %20 = vector.shape_cast %19 : vector<16x128xbf16> to vector<1x16x128xbf16>
    %21 = vector.extract_strided_slice %16 {offsets = [80, 0], sizes = [16, 128], strides = [1, 1]} : vector<96x128xbf16> to vector<16x128xbf16>
    %22 = vector.shape_cast %21 : vector<16x128xbf16> to vector<1x16x128xbf16>
    %c0_i32 = arith.constant 0 : i32
    %23 = arith.cmpi sgt, %arg1, %c0_i32 : i32
    %cst_16 = arith.constant 0.000000e+00 : bf16
    %24 = vector.broadcast %cst_16 : bf16 to vector<1x16x128xbf16>
    %25 = arith.select %23, %20, %24 : vector<1x16x128xbf16>
    %c3_i32 = arith.constant 3 : i32
    %26 = arith.cmpi slt, %arg1, %c3_i32 : i32
    %cst_17 = arith.constant 0.000000e+00 : bf16
    %27 = vector.broadcast %cst_17 : bf16 to vector<1x16x128xbf16>
    %28 = arith.select %26, %22, %27 : vector<1x16x128xbf16>
    %29 = tpu.concatenate %25, %18, %28 in 0 : vector<1x16x128xbf16>, vector<4x16x128xbf16>, vector<1x16x128xbf16> -> vector<6x16x128xbf16>
    %cst_18 = arith.constant 0.000000e+00 : bf16
    %30 = vector.broadcast %cst_18 : bf16 to vector<6x1x128xbf16>
    %31 = tpu.concatenate %30, %29, %30 in 1 : vector<6x1x128xbf16>, vector<6x16x128xbf16>, vector<6x1x128xbf16> -> vector<6x18x128xbf16>
    %c0_19 = arith.constant 0 : index
    %c0_20 = arith.constant 0 : index
    %c0_21 = arith.constant 0 : index
    %32 = vector.load %arg12[%c0_19, %c0_20, %c0_21] : memref<6x18x128xbf16, #tpu.memory_space<vmem>>, vector<6x18x128xbf16>
    tpu.vector_store %arg12[%c0_19, %c0_20, %c0_21], %31 {strides = array<i32>} : memref<6x18x128xbf16, #tpu.memory_space<vmem>>, vector<6x18x128xbf16>,
    %cst_22 = arith.constant 0.000000e+00 : f32
    %33 = vector.broadcast %cst_22 : f32 to vector<64x128xf32>
    %c0_23 = arith.constant 0 : index
    %c0_24 = arith.constant 0 : index
    %c0_25 = arith.constant 0 : index
    %34 = vector.load %arg12[%c0_23, %c0_24, %c0_25] : memref<6x18x128xbf16, #tpu.memory_space<vmem>>, vector<4x16x128xbf16>
    %35 = vector.shape_cast %34 : vector<4x16x128xbf16> to vector<64x128xbf16>
    %c0_26 = arith.constant 0 : index
    %c0_27 = arith.constant 0 : index
    %c0_28 = arith.constant 0 : index
    %36 = vector.load %arg7[%c0_26, %c0_27, %c0_28] : memref<9x128x128xbf16, #tpu.memory_space<vmem>>, vector<1x128x128xbf16>
    %37 = vector.shape_cast %36 : vector<1x128x128xbf16> to vector<128x128xbf16>
    %cst_29 = arith.constant dense<0.000000e+00> : vector<64x128xf32>
    %38 = tpu.matmul %35, %37, %cst_29 {dimension_numbers = #tpu.dot_dimension_numbers<[1], [0], [0], [1], [0, 0, 1, 1], [], []>} : vector<64x128xbf16>, vector<128x128xbf16>, vector<64x128xf32> -> vector<64x128xf32>
    %39 = arith.addf %33, %38 : vector<64x128xf32>
    %c0_30 = arith.constant 0 : index
    %c1 = arith.constant 1 : index
    %c0_31 = arith.constant 0 : index
    %40 = vector.load %arg12[%c0_30, %c1, %c0_31] : memref<6x18x128xbf16, #tpu.memory_space<vmem>>, vector<4x16x128xbf16>
    %41 = vector.shape_cast %40 : vector<4x16x128xbf16> to vector<64x128xbf16>
    %c1_32 = arith.constant 1 : index
    %c0_33 = arith.constant 0 : index
    %c0_34 = arith.constant 0 : index
    %42 = vector.load %arg7[%c1_32, %c0_33, %c0_34] : memref<9x128x128xbf16, #tpu.memory_space<vmem>>, vector<1x128x128xbf16>
    %43 = vector.shape_cast %42 : vector<1x128x128xbf16> to vector<128x128xbf16>
    %cst_35 = arith.constant dense<0.000000e+00> : vector<64x128xf32>
    %44 = tpu.matmul %41, %43, %cst_35 {dimension_numbers = #tpu.dot_dimension_numbers<[1], [0], [0], [1], [0, 0, 1, 1], [], []>} : vector<64x128xbf16>, vector<128x128xbf16>, vector<64x128xf32> -> vector<64x128xf32>
    %45 = arith.addf %39, %44 : vector<64x128xf32>
    %c0_36 = arith.constant 0 : index
    %c2 = arith.constant 2 : index
    %c0_37 = arith.constant 0 : index
    %46 = vector.load %arg12[%c0_36, %c2, %c0_37] : memref<6x18x128xbf16, #tpu.memory_space<vmem>>, vector<4x16x128xbf16>
    %47 = vector.shape_cast %46 : vector<4x16x128xbf16> to vector<64x128xbf16>
    %c2_38 = arith.constant 2 : index
    %c0_39 = arith.constant 0 : index
    %c0_40 = arith.constant 0 : index
    %48 = vector.load %arg7[%c2_38, %c0_39, %c0_40] : memref<9x128x128xbf16, #tpu.memory_space<vmem>>, vector<1x128x128xbf16>
    %49 = vector.shape_cast %48 : vector<1x128x128xbf16> to vector<128x128xbf16>
    %cst_41 = arith.constant dense<0.000000e+00> : vector<64x128xf32>
    %50 = tpu.matmul %47, %49, %cst_41 {dimension_numbers = #tpu.dot_dimension_numbers<[1], [0], [0], [1], [0, 0, 1, 1], [], []>} : vector<64x128xbf16>, vector<128x128xbf16>, vector<64x128xf32> -> vector<64x128xf32>
    %51 = arith.addf %45, %50 : vector<64x128xf32>
    %c1_42 = arith.constant 1 : index
    %c0_43 = arith.constant 0 : index
    %c0_44 = arith.constant 0 : index
    %52 = vector.load %arg12[%c1_42, %c0_43, %c0_44] : memref<6x18x128xbf16, #tpu.memory_space<vmem>>, vector<4x16x128xbf16>
    %53 = vector.shape_cast %52 : vector<4x16x128xbf16> to vector<64x128xbf16>
    %c3 = arith.constant 3 : index
    %c0_45 = arith.constant 0 : index
    %c0_46 = arith.constant 0 : index
    %54 = vector.load %arg7[%c3, %c0_45, %c0_46] : memref<9x128x128xbf16, #tpu.memory_space<vmem>>, vector<1x128x128xbf16>
    %55 = vector.shape_cast %54 : vector<1x128x128xbf16> to vector<128x128xbf16>
    %cst_47 = arith.constant dense<0.000000e+00> : vector<64x128xf32>
    %56 = tpu.matmul %53, %55, %cst_47 {dimension_numbers = #tpu.dot_dimension_numbers<[1], [0], [0], [1], [0, 0, 1, 1], [], []>} : vector<64x128xbf16>, vector<128x128xbf16>, vector<64x128xf32> -> vector<64x128xf32>
    %57 = arith.addf %51, %56 : vector<64x128xf32>
    %c1_48 = arith.constant 1 : index
    %c1_49 = arith.constant 1 : index
    %c0_50 = arith.constant 0 : index
    %58 = vector.load %arg12[%c1_48, %c1_49, %c0_50] : memref<6x18x128xbf16, #tpu.memory_space<vmem>>, vector<4x16x128xbf16>
    %59 = vector.shape_cast %58 : vector<4x16x128xbf16> to vector<64x128xbf16>
    %c4 = arith.constant 4 : index
    %c0_51 = arith.constant 0 : index
    %c0_52 = arith.constant 0 : index
    %60 = vector.load %arg7[%c4, %c0_51, %c0_52] : memref<9x128x128xbf16, #tpu.memory_space<vmem>>, vector<1x128x128xbf16>
    %61 = vector.shape_cast %60 : vector<1x128x128xbf16> to vector<128x128xbf16>
    %cst_53 = arith.constant dense<0.000000e+00> : vector<64x128xf32>
    %62 = tpu.matmul %59, %61, %cst_53 {dimension_numbers = #tpu.dot_dimension_numbers<[1], [0], [0], [1], [0, 0, 1, 1], [], []>} : vector<64x128xbf16>, vector<128x128xbf16>, vector<64x128xf32> -> vector<64x128xf32>
    %63 = arith.addf %57, %62 : vector<64x128xf32>
    %c1_54 = arith.constant 1 : index
    %c2_55 = arith.constant 2 : index
    %c0_56 = arith.constant 0 : index
    %64 = vector.load %arg12[%c1_54, %c2_55, %c0_56] : memref<6x18x128xbf16, #tpu.memory_space<vmem>>, vector<4x16x128xbf16>
    %65 = vector.shape_cast %64 : vector<4x16x128xbf16> to vector<64x128xbf16>
    %c5 = arith.constant 5 : index
    %c0_57 = arith.constant 0 : index
    %c0_58 = arith.constant 0 : index
    %66 = vector.load %arg7[%c5, %c0_57, %c0_58] : memref<9x128x128xbf16, #tpu.memory_space<vmem>>, vector<1x128x128xbf16>
    %67 = vector.shape_cast %66 : vector<1x128x128xbf16> to vector<128x128xbf16>
    %cst_59 = arith.constant dense<0.000000e+00> : vector<64x128xf32>
    %68 = tpu.matmul %65, %67, %cst_59 {dimension_numbers = #tpu.dot_dimension_numbers<[1], [0], [0], [1], [0, 0, 1, 1], [], []>} : vector<64x128xbf16>, vector<128x128xbf16>, vector<64x128xf32> -> vector<64x128xf32>
    %69 = arith.addf %63, %68 : vector<64x128xf32>
    %c2_60 = arith.constant 2 : index
    %c0_61 = arith.constant 0 : index
    %c0_62 = arith.constant 0 : index
    %70 = vector.load %arg12[%c2_60, %c0_61, %c0_62] : memref<6x18x128xbf16, #tpu.memory_space<vmem>>, vector<4x16x128xbf16>
    %71 = vector.shape_cast %70 : vector<4x16x128xbf16> to vector<64x128xbf16>
    %c6 = arith.constant 6 : index
    %c0_63 = arith.constant 0 : index
    %c0_64 = arith.constant 0 : index
    %72 = vector.load %arg7[%c6, %c0_63, %c0_64] : memref<9x128x128xbf16, #tpu.memory_space<vmem>>, vector<1x128x128xbf16>
    %73 = vector.shape_cast %72 : vector<1x128x128xbf16> to vector<128x128xbf16>
    %cst_65 = arith.constant dense<0.000000e+00> : vector<64x128xf32>
    %74 = tpu.matmul %71, %73, %cst_65 {dimension_numbers = #tpu.dot_dimension_numbers<[1], [0], [0], [1], [0, 0, 1, 1], [], []>} : vector<64x128xbf16>, vector<128x128xbf16>, vector<64x128xf32> -> vector<64x128xf32>
    %75 = arith.addf %69, %74 : vector<64x128xf32>
    %c2_66 = arith.constant 2 : index
    %c1_67 = arith.constant 1 : index
    %c0_68 = arith.constant 0 : index
    %76 = vector.load %arg12[%c2_66, %c1_67, %c0_68] : memref<6x18x128xbf16, #tpu.memory_space<vmem>>, vector<4x16x128xbf16>
    %77 = vector.shape_cast %76 : vector<4x16x128xbf16> to vector<64x128xbf16>
    %c7 = arith.constant 7 : index
    %c0_69 = arith.constant 0 : index
    %c0_70 = arith.constant 0 : index
    %78 = vector.load %arg7[%c7, %c0_69, %c0_70] : memref<9x128x128xbf16, #tpu.memory_space<vmem>>, vector<1x128x128xbf16>
    %79 = vector.shape_cast %78 : vector<1x128x128xbf16> to vector<128x128xbf16>
    %cst_71 = arith.constant dense<0.000000e+00> : vector<64x128xf32>
    %80 = tpu.matmul %77, %79, %cst_71 {dimension_numbers = #tpu.dot_dimension_numbers<[1], [0], [0], [1], [0, 0, 1, 1], [], []>} : vector<64x128xbf16>, vector<128x128xbf16>, vector<64x128xf32> -> vector<64x128xf32>
    %81 = arith.addf %75, %80 : vector<64x128xf32>
    %c2_72 = arith.constant 2 : index
    %c2_73 = arith.constant 2 : index
    %c0_74 = arith.constant 0 : index
    %82 = vector.load %arg12[%c2_72, %c2_73, %c0_74] : memref<6x18x128xbf16, #tpu.memory_space<vmem>>, vector<4x16x128xbf16>
    %83 = vector.shape_cast %82 : vector<4x16x128xbf16> to vector<64x128xbf16>
    %c8 = arith.constant 8 : index
    %c0_75 = arith.constant 0 : index
    %c0_76 = arith.constant 0 : index
    %84 = vector.load %arg7[%c8, %c0_75, %c0_76] : memref<9x128x128xbf16, #tpu.memory_space<vmem>>, vector<1x128x128xbf16>
    %85 = vector.shape_cast %84 : vector<1x128x128xbf16> to vector<128x128xbf16>
    %cst_77 = arith.constant dense<0.000000e+00> : vector<64x128xf32>
    %86 = tpu.matmul %83, %85, %cst_77 {dimension_numbers = #tpu.dot_dimension_numbers<[1], [0], [0], [1], [0, 0, 1, 1], [], []>} : vector<64x128xbf16>, vector<128x128xbf16>, vector<64x128xf32> -> vector<64x128xf32>
    %87 = arith.addf %81, %86 : vector<64x128xf32>
    %c0_78 = arith.constant 0 : index
    %c0_79 = arith.constant 0 : index
    %88 = vector.load %arg8[%c0_78, %c0_79] : memref<1x128xf32, #tpu.memory_space<vmem>>, vector<1x128xf32>
    %89 = vector.broadcast %88 : vector<1x128xf32> to vector<64x128xf32>
    %90 = arith.addf %87, %89 : vector<64x128xf32>
    %cst_80 = arith.constant 0.000000e+00 : f32
    %91 = vector.broadcast %cst_80 : f32 to vector<64x128xf32>
    %92 = arith.maximumf %90, %91 : vector<64x128xf32>
    %93 = arith.truncf %92 : vector<64x128xf32> to vector<64x128xbf16>
    %c0_81 = arith.constant 0 : index
    %c0_82 = arith.constant 0 : index
    %94 = vector.load %arg9[%c0_81, %c0_82] : memref<128x128xbf16, #tpu.memory_space<vmem>>, vector<128x128xbf16>
    %cst_83 = arith.constant dense<0.000000e+00> : vector<64x128xf32>
    %95 = tpu.matmul %93, %94, %cst_83 {dimension_numbers = #tpu.dot_dimension_numbers<[1], [0], [0], [1], [0, 0, 1, 1], [], []>} : vector<64x128xbf16>, vector<128x128xbf16>, vector<64x128xf32> -> vector<64x128xf32>
    %c0_84 = arith.constant 0 : index
    %c0_85 = arith.constant 0 : index
    %96 = vector.load %arg10[%c0_84, %c0_85] : memref<1x128xf32, #tpu.memory_space<vmem>>, vector<1x128xf32>
    %97 = vector.broadcast %96 : vector<1x128xf32> to vector<64x128xf32>
    %98 = arith.addf %95, %97 : vector<64x128xf32>
    %99 = arith.addf %98, %2 : vector<64x128xf32>
    %cst_86 = arith.constant 0.000000e+00 : f32
    %100 = vector.broadcast %cst_86 : f32 to vector<64x128xf32>
    %101 = arith.maximumf %99, %100 : vector<64x128xf32>
    %102 = vector.shape_cast %101 : vector<64x128xf32> to vector<4x16x128xf32>
    %c0_87 = arith.constant 0 : index
    %c0_88 = arith.constant 0 : index
    %c0_89 = arith.constant 0 : index
    %c0_90 = arith.constant 0 : index
    %103 = vector.load %arg11[%c0_87, %c0_88, %c0_89, %c0_90] : memref<1x4x16x128xf32, #tpu.memory_space<vmem>>, vector<1x4x16x128xf32>
    %104 = vector.shape_cast %103 : vector<1x4x16x128xf32> to vector<4x16x128xf32>
    %105 = vector.shape_cast %102 : vector<4x16x128xf32> to vector<1x4x16x128xf32>
    tpu.vector_store %arg11[%c0_87, %c0_88, %c0_89, %c0_90], %105 {strides = array<i32>} : memref<1x4x16x128xf32, #tpu.memory_space<vmem>>, vector<1x4x16x128xf32>,
    return
  }
  func.func @transform_0(%arg0: i32, %arg1: i32) -> (i32, i32, i32, i32) {
    %c0_i32 = arith.constant 0 : i32
    %c0_i32_0 = arith.constant 0 : i32
    %c0_i32_1 = arith.constant 0 : i32
    return %arg0, %arg1, %c0_i32, %c0_i32_0 : i32, i32, i32, i32
  }
  func.func @transform_1(%arg0: i32, %arg1: i32) -> (i32, i32, i32, i32) {
    %c4_i32 = arith.constant 4 : i32
    %0 = arith.muli %arg1, %c4_i32 : i32
    %c1_i32 = arith.constant 1 : i32
    %1 = arith.subi %0, %c1_i32 : i32
    %c0_i32 = arith.constant 0 : i32
    %2 = arith.maxsi %1, %c0_i32 : i32
    %c0_i32_0 = arith.constant 0 : i32
    %c0_i32_1 = arith.constant 0 : i32
    %c0_i32_2 = arith.constant 0 : i32
    return %arg0, %2, %c0_i32_0, %c0_i32_1 : i32, i32, i32, i32
  }
  func.func @transform_2(%arg0: i32, %arg1: i32) -> (i32, i32, i32, i32) {
    %c4_i32 = arith.constant 4 : i32
    %0 = arith.muli %arg1, %c4_i32 : i32
    %c4_i32_0 = arith.constant 4 : i32
    %1 = arith.addi %0, %c4_i32_0 : i32
    %c15_i32 = arith.constant 15 : i32
    %2 = arith.minsi %1, %c15_i32 : i32
    %c0_i32 = arith.constant 0 : i32
    %c0_i32_1 = arith.constant 0 : i32
    %c0_i32_2 = arith.constant 0 : i32
    return %arg0, %2, %c0_i32, %c0_i32_1 : i32, i32, i32, i32
  }
  func.func @transform_3(%arg0: i32, %arg1: i32) -> (i32, i32) {
    %c0_i32 = arith.constant 0 : i32
    %c0_i32_0 = arith.constant 0 : i32
    %c0_i32_1 = arith.constant 0 : i32
    return %c0_i32, %c0_i32_0 : i32, i32
  }
  func.func @transform_4(%arg0: i32, %arg1: i32) -> (i32, i32) {
    %c0_i32 = arith.constant 0 : i32
    %c0_i32_0 = arith.constant 0 : i32
    %c0_i32_1 = arith.constant 0 : i32
    return %c0_i32, %c0_i32_0 : i32, i32
  }
  func.func @transform_5(%arg0: i32, %arg1: i32) -> (i32, i32, i32) {
    %c0_i32 = arith.constant 0 : i32
    %c0_i32_0 = arith.constant 0 : i32
    %c0_i32_1 = arith.constant 0 : i32
    %c0_i32_2 = arith.constant 0 : i32
    return %c0_i32, %c0_i32_0, %c0_i32_1 : i32, i32, i32
  }
  func.func @transform_6(%arg0: i32, %arg1: i32) -> (i32, i32) {
    %c0_i32 = arith.constant 0 : i32
    %c0_i32_0 = arith.constant 0 : i32
    %c0_i32_1 = arith.constant 0 : i32
    return %c0_i32, %c0_i32_0 : i32, i32
  }
  func.func @transform_7(%arg0: i32, %arg1: i32) -> (i32, i32) {
    %c0_i32 = arith.constant 0 : i32
    %c0_i32_0 = arith.constant 0 : i32
    %c0_i32_1 = arith.constant 0 : i32
    return %c0_i32, %c0_i32_0 : i32, i32
  }
  func.func @transform_8(%arg0: i32, %arg1: i32) -> (i32, i32) {
    %c0_i32 = arith.constant 0 : i32
    %c0_i32_0 = arith.constant 0 : i32
    %c0_i32_1 = arith.constant 0 : i32
    return %c0_i32, %c0_i32_0 : i32, i32
  }
  func.func @transform_9(%arg0: i32, %arg1: i32) -> (i32, i32, i32, i32) {
    %c0_i32 = arith.constant 0 : i32
    %c0_i32_0 = arith.constant 0 : i32
    %c0_i32_1 = arith.constant 0 : i32
    return %arg0, %arg1, %c0_i32, %c0_i32_0 : i32, i32, i32, i32
  }
}

module attributes {stable_mosaic.version = 11 : i64} {
  func.func @bottleneck_kernel(%arg0: i32, %arg1: i32, %arg2: memref<1x4x16x128xf32, #tpu.memory_space<vmem>>, %arg3: memref<1x1x16x128xf32, #tpu.memory_space<vmem>>, %arg4: memref<1x1x16x128xf32, #tpu.memory_space<vmem>>, %arg5: memref<128x128xbf16, #tpu.memory_space<vmem>>, %arg6: memref<1x128xf32, #tpu.memory_space<vmem>>, %arg7: memref<9x128x128xbf16, #tpu.memory_space<vmem>>, %arg8: memref<1x128xf32, #tpu.memory_space<vmem>>, %arg9: memref<128x128xbf16, #tpu.memory_space<vmem>>, %arg10: memref<1x128xf32, #tpu.memory_space<vmem>>, %arg11: memref<1x4x16x128xf32, #tpu.memory_space<vmem>>, %arg12: memref<6x18x128xbf16, #tpu.memory_space<vmem>>) attributes {dimension_semantics = [#tpu.dimension_semantics<parallel>, #tpu.dimension_semantics<parallel>], iteration_bounds = array<i64: 2, 4>, scalar_prefetch = 0 : i64, scratch_operands = 1 : i64, tpu.core_type = #tpu.core_type<tc>, window_params = [{transform_indices = @transform_0, window_bounds = array<i64: 1, 4, 16, 128>}, {transform_indices = @transform_1, window_bounds = array<i64: 1, 1, 16, 128>}, {transform_indices = @transform_2, window_bounds = array<i64: 1, 1, 16, 128>}, {pipeline_mode = #tpu.pipeline_mode<synchronous>, transform_indices = @transform_3, window_bounds = array<i64: 128, 128>}, {pipeline_mode = #tpu.pipeline_mode<synchronous>, transform_indices = @transform_4, window_bounds = array<i64: 1, 128>}, {pipeline_mode = #tpu.pipeline_mode<synchronous>, transform_indices = @transform_5, window_bounds = array<i64: 9, 128, 128>}, {pipeline_mode = #tpu.pipeline_mode<synchronous>, transform_indices = @transform_6, window_bounds = array<i64: 1, 128>}, {pipeline_mode = #tpu.pipeline_mode<synchronous>, transform_indices = @transform_7, window_bounds = array<i64: 128, 128>}, {pipeline_mode = #tpu.pipeline_mode<synchronous>, transform_indices = @transform_8, window_bounds = array<i64: 1, 128>}, {transform_indices = @transform_9, window_bounds = array<i64: 1, 4, 16, 128>}]} {
    %c0 = arith.constant 0 : index
    %c0_0 = arith.constant 0 : index
    %c0_1 = arith.constant 0 : index
    %c0_2 = arith.constant 0 : index
    %0 = vector.load %arg2[%c0, %c0_0, %c0_1, %c0_2] : memref<1x4x16x128xf32, #tpu.memory_space<vmem>>, vector<1x4x16x128xf32>
    %1 = vector.shape_cast %0 : vector<1x4x16x128xf32> to vector<4x16x128xf32>
    %2 = vector.shape_cast %1 : vector<4x16x128xf32> to vector<64x128xf32>
    %c0_3 = arith.constant 0 : index
    %c0_4 = arith.constant 0 : index
    %c0_5 = arith.constant 0 : index
    %c0_6 = arith.constant 0 : index
    %3 = vector.load %arg3[%c0_3, %c0_4, %c0_5, %c0_6] : memref<1x1x16x128xf32, #tpu.memory_space<vmem>>, vector<1x1x16x128xf32>
    %4 = vector.shape_cast %3 : vector<1x1x16x128xf32> to vector<16x128xf32>
    %c0_7 = arith.constant 0 : index
    %c0_8 = arith.constant 0 : index
    %c0_9 = arith.constant 0 : index
    %c0_10 = arith.constant 0 : index
    %5 = vector.load %arg4[%c0_7, %c0_8, %c0_9, %c0_10] : memref<1x1x16x128xf32, #tpu.memory_space<vmem>>, vector<1x1x16x128xf32>
    %6 = vector.shape_cast %5 : vector<1x1x16x128xf32> to vector<16x128xf32>
    %7 = tpu.concatenate %2, %4, %6 in 0 : vector<64x128xf32>, vector<16x128xf32>, vector<16x128xf32> -> vector<96x128xf32>
    %8 = arith.truncf %7 : vector<96x128xf32> to vector<96x128xbf16>
    %c0_11 = arith.constant 0 : index
    %c0_12 = arith.constant 0 : index
    %9 = vector.load %arg5[%c0_11, %c0_12] : memref<128x128xbf16, #tpu.memory_space<vmem>>, vector<128x128xbf16>
    %cst = arith.constant dense<0.000000e+00> : vector<96x128xf32>
    %10 = tpu.matmul %8, %9, %cst {dimension_numbers = #tpu.dot_dimension_numbers<[1], [0], [0], [1], [0, 0, 1, 1], [], []>} : vector<96x128xbf16>, vector<128x128xbf16>, vector<96x128xf32> -> vector<96x128xf32>
    %c0_13 = arith.constant 0 : index
    %c0_14 = arith.constant 0 : index
    %11 = vector.load %arg6[%c0_13, %c0_14] : memref<1x128xf32, #tpu.memory_space<vmem>>, vector<1x128xf32>
    %12 = vector.broadcast %11 : vector<1x128xf32> to vector<96x128xf32>
    %13 = arith.addf %10, %12 : vector<96x128xf32>
    %cst_15 = arith.constant 0.000000e+00 : f32
    %14 = vector.broadcast %cst_15 : f32 to vector<96x128xf32>
    %15 = arith.maximumf %13, %14 : vector<96x128xf32>
    %16 = arith.truncf %15 : vector<96x128xf32> to vector<96x128xbf16>
    %17 = vector.extract_strided_slice %16 {offsets = [0, 0], sizes = [64, 128], strides = [1, 1]} : vector<96x128xbf16> to vector<64x128xbf16>
    %18 = vector.shape_cast %17 : vector<64x128xbf16> to vector<4x16x128xbf16>
    %19 = vector.extract_strided_slice %16 {offsets = [64, 0], sizes = [16, 128], strides = [1, 1]} : vector<96x128xbf16> to vector<16x128xbf16>
    %20 = vector.shape_cast %19 : vector<16x128xbf16> to vector<1x16x128xbf16>
    %21 = vector.extract_strided_slice %16 {offsets = [80, 0], sizes = [16, 128], strides = [1, 1]} : vector<96x128xbf16> to vector<16x128xbf16>
    %22 = vector.shape_cast %21 : vector<16x128xbf16> to vector<1x16x128xbf16>
    %c0_i32 = arith.constant 0 : i32
    %23 = arith.cmpi sgt, %arg1, %c0_i32 : i32
    %cst_16 = arith.constant 0.000000e+00 : bf16
    %24 = vector.broadcast %cst_16 : bf16 to vector<1x16x128xbf16>
    %25 = arith.select %23, %20, %24 : vector<1x16x128xbf16>
    %c3_i32 = arith.constant 3 : i32
    %26 = arith.cmpi slt, %arg1, %c3_i32 : i32
    %cst_17 = arith.constant 0.000000e+00 : bf16
    %27 = vector.broadcast %cst_17 : bf16 to vector<1x16x128xbf16>
    %28 = arith.select %26, %22, %27 : vector<1x16x128xbf16>
    %29 = tpu.concatenate %25, %18, %28 in 0 : vector<1x16x128xbf16>, vector<4x16x128xbf16>, vector<1x16x128xbf16> -> vector<6x16x128xbf16>
    %cst_18 = arith.constant 0.000000e+00 : bf16
    %30 = vector.broadcast %cst_18 : bf16 to vector<6x1x128xbf16>
    %31 = tpu.concatenate %30, %29, %30 in 1 : vector<6x1x128xbf16>, vector<6x16x128xbf16>, vector<6x1x128xbf16> -> vector<6x18x128xbf16>
    %c0_19 = arith.constant 0 : index
    %c0_20 = arith.constant 0 : index
    %c0_21 = arith.constant 0 : index
    %32 = vector.load %arg12[%c0_19, %c0_20, %c0_21] : memref<6x18x128xbf16, #tpu.memory_space<vmem>>, vector<6x18x128xbf16>
    tpu.vector_store %arg12[%c0_19, %c0_20, %c0_21], %31 {strides = array<i32>} : memref<6x18x128xbf16, #tpu.memory_space<vmem>>, vector<6x18x128xbf16>,
    %cst_22 = arith.constant 0.000000e+00 : f32
    %33 = vector.broadcast %cst_22 : f32 to vector<64x128xf32>
    %c0_23 = arith.constant 0 : index
    %c0_24 = arith.constant 0 : index
    %c0_25 = arith.constant 0 : index
    %34 = vector.load %arg12[%c0_23, %c0_24, %c0_25] : memref<6x18x128xbf16, #tpu.memory_space<vmem>>, vector<4x16x128xbf16>
    %35 = vector.shape_cast %34 : vector<4x16x128xbf16> to vector<64x128xbf16>
    %c0_26 = arith.constant 0 : index
    %c0_27 = arith.constant 0 : index
    %c0_28 = arith.constant 0 : index
    %36 = vector.load %arg7[%c0_26, %c0_27, %c0_28] : memref<9x128x128xbf16, #tpu.memory_space<vmem>>, vector<1x128x128xbf16>
    %37 = vector.shape_cast %36 : vector<1x128x128xbf16> to vector<128x128xbf16>
    %cst_29 = arith.constant dense<0.000000e+00> : vector<64x128xf32>
    %38 = tpu.matmul %35, %37, %cst_29 {dimension_numbers = #tpu.dot_dimension_numbers<[1], [0], [0], [1], [0, 0, 1, 1], [], []>} : vector<64x128xbf16>, vector<128x128xbf16>, vector<64x128xf32> -> vector<64x128xf32>
    %39 = arith.addf %33, %38 : vector<64x128xf32>
    %c0_30 = arith.constant 0 : index
    %c1 = arith.constant 1 : index
    %c0_31 = arith.constant 0 : index
    %40 = vector.load %arg12[%c0_30, %c1, %c0_31] : memref<6x18x128xbf16, #tpu.memory_space<vmem>>, vector<4x16x128xbf16>
    %41 = vector.shape_cast %40 : vector<4x16x128xbf16> to vector<64x128xbf16>
    %c1_32 = arith.constant 1 : index
    %c0_33 = arith.constant 0 : index
    %c0_34 = arith.constant 0 : index
    %42 = vector.load %arg7[%c1_32, %c0_33, %c0_34] : memref<9x128x128xbf16, #tpu.memory_space<vmem>>, vector<1x128x128xbf16>
    %43 = vector.shape_cast %42 : vector<1x128x128xbf16> to vector<128x128xbf16>
    %cst_35 = arith.constant dense<0.000000e+00> : vector<64x128xf32>
    %44 = tpu.matmul %41, %43, %cst_35 {dimension_numbers = #tpu.dot_dimension_numbers<[1], [0], [0], [1], [0, 0, 1, 1], [], []>} : vector<64x128xbf16>, vector<128x128xbf16>, vector<64x128xf32> -> vector<64x128xf32>
    %45 = arith.addf %39, %44 : vector<64x128xf32>
    %c0_36 = arith.constant 0 : index
    %c2 = arith.constant 2 : index
    %c0_37 = arith.constant 0 : index
    %46 = vector.load %arg12[%c0_36, %c2, %c0_37] : memref<6x18x128xbf16, #tpu.memory_space<vmem>>, vector<4x16x128xbf16>
    %47 = vector.shape_cast %46 : vector<4x16x128xbf16> to vector<64x128xbf16>
    %c2_38 = arith.constant 2 : index
    %c0_39 = arith.constant 0 : index
    %c0_40 = arith.constant 0 : index
    %48 = vector.load %arg7[%c2_38, %c0_39, %c0_40] : memref<9x128x128xbf16, #tpu.memory_space<vmem>>, vector<1x128x128xbf16>
    %49 = vector.shape_cast %48 : vector<1x128x128xbf16> to vector<128x128xbf16>
    %cst_41 = arith.constant dense<0.000000e+00> : vector<64x128xf32>
    %50 = tpu.matmul %47, %49, %cst_41 {dimension_numbers = #tpu.dot_dimension_numbers<[1], [0], [0], [1], [0, 0, 1, 1], [], []>} : vector<64x128xbf16>, vector<128x128xbf16>, vector<64x128xf32> -> vector<64x128xf32>
    %51 = arith.addf %45, %50 : vector<64x128xf32>
    %c1_42 = arith.constant 1 : index
    %c0_43 = arith.constant 0 : index
    %c0_44 = arith.constant 0 : index
    %52 = vector.load %arg12[%c1_42, %c0_43, %c0_44] : memref<6x18x128xbf16, #tpu.memory_space<vmem>>, vector<4x16x128xbf16>
    %53 = vector.shape_cast %52 : vector<4x16x128xbf16> to vector<64x128xbf16>
    %c3 = arith.constant 3 : index
    %c0_45 = arith.constant 0 : index
    %c0_46 = arith.constant 0 : index
    %54 = vector.load %arg7[%c3, %c0_45, %c0_46] : memref<9x128x128xbf16, #tpu.memory_space<vmem>>, vector<1x128x128xbf16>
    %55 = vector.shape_cast %54 : vector<1x128x128xbf16> to vector<128x128xbf16>
    %cst_47 = arith.constant dense<0.000000e+00> : vector<64x128xf32>
    %56 = tpu.matmul %53, %55, %cst_47 {dimension_numbers = #tpu.dot_dimension_numbers<[1], [0], [0], [1], [0, 0, 1, 1], [], []>} : vector<64x128xbf16>, vector<128x128xbf16>, vector<64x128xf32> -> vector<64x128xf32>
    %57 = arith.addf %51, %56 : vector<64x128xf32>
    %c1_48 = arith.constant 1 : index
    %c1_49 = arith.constant 1 : index
    %c0_50 = arith.constant 0 : index
    %58 = vector.load %arg12[%c1_48, %c1_49, %c0_50] : memref<6x18x128xbf16, #tpu.memory_space<vmem>>, vector<4x16x128xbf16>
    %59 = vector.shape_cast %58 : vector<4x16x128xbf16> to vector<64x128xbf16>
    %c4 = arith.constant 4 : index
    %c0_51 = arith.constant 0 : index
    %c0_52 = arith.constant 0 : index
    %60 = vector.load %arg7[%c4, %c0_51, %c0_52] : memref<9x128x128xbf16, #tpu.memory_space<vmem>>, vector<1x128x128xbf16>
    %61 = vector.shape_cast %60 : vector<1x128x128xbf16> to vector<128x128xbf16>
    %cst_53 = arith.constant dense<0.000000e+00> : vector<64x128xf32>
    %62 = tpu.matmul %59, %61, %cst_53 {dimension_numbers = #tpu.dot_dimension_numbers<[1], [0], [0], [1], [0, 0, 1, 1], [], []>} : vector<64x128xbf16>, vector<128x128xbf16>, vector<64x128xf32> -> vector<64x128xf32>
    %63 = arith.addf %57, %62 : vector<64x128xf32>
    %c1_54 = arith.constant 1 : index
    %c2_55 = arith.constant 2 : index
    %c0_56 = arith.constant 0 : index
    %64 = vector.load %arg12[%c1_54, %c2_55, %c0_56] : memref<6x18x128xbf16, #tpu.memory_space<vmem>>, vector<4x16x128xbf16>
    %65 = vector.shape_cast %64 : vector<4x16x128xbf16> to vector<64x128xbf16>
    %c5 = arith.constant 5 : index
    %c0_57 = arith.constant 0 : index
    %c0_58 = arith.constant 0 : index
    %66 = vector.load %arg7[%c5, %c0_57, %c0_58] : memref<9x128x128xbf16, #tpu.memory_space<vmem>>, vector<1x128x128xbf16>
    %67 = vector.shape_cast %66 : vector<1x128x128xbf16> to vector<128x128xbf16>
    %cst_59 = arith.constant dense<0.000000e+00> : vector<64x128xf32>
    %68 = tpu.matmul %65, %67, %cst_59 {dimension_numbers = #tpu.dot_dimension_numbers<[1], [0], [0], [1], [0, 0, 1, 1], [], []>} : vector<64x128xbf16>, vector<128x128xbf16>, vector<64x128xf32> -> vector<64x128xf32>
    %69 = arith.addf %63, %68 : vector<64x128xf32>
    %c2_60 = arith.constant 2 : index
    %c0_61 = arith.constant 0 : index
    %c0_62 = arith.constant 0 : index
    %70 = vector.load %arg12[%c2_60, %c0_61, %c0_62] : memref<6x18x128xbf16, #tpu.memory_space<vmem>>, vector<4x16x128xbf16>
    %71 = vector.shape_cast %70 : vector<4x16x128xbf16> to vector<64x128xbf16>
    %c6 = arith.constant 6 : index
    %c0_63 = arith.constant 0 : index
    %c0_64 = arith.constant 0 : index
    %72 = vector.load %arg7[%c6, %c0_63, %c0_64] : memref<9x128x128xbf16, #tpu.memory_space<vmem>>, vector<1x128x128xbf16>
    %73 = vector.shape_cast %72 : vector<1x128x128xbf16> to vector<128x128xbf16>
    %cst_65 = arith.constant dense<0.000000e+00> : vector<64x128xf32>
    %74 = tpu.matmul %71, %73, %cst_65 {dimension_numbers = #tpu.dot_dimension_numbers<[1], [0], [0], [1], [0, 0, 1, 1], [], []>} : vector<64x128xbf16>, vector<128x128xbf16>, vector<64x128xf32> -> vector<64x128xf32>
    %75 = arith.addf %69, %74 : vector<64x128xf32>
    %c2_66 = arith.constant 2 : index
    %c1_67 = arith.constant 1 : index
    %c0_68 = arith.constant 0 : index
    %76 = vector.load %arg12[%c2_66, %c1_67, %c0_68] : memref<6x18x128xbf16, #tpu.memory_space<vmem>>, vector<4x16x128xbf16>
    %77 = vector.shape_cast %76 : vector<4x16x128xbf16> to vector<64x128xbf16>
    %c7 = arith.constant 7 : index
    %c0_69 = arith.constant 0 : index
    %c0_70 = arith.constant 0 : index
    %78 = vector.load %arg7[%c7, %c0_69, %c0_70] : memref<9x128x128xbf16, #tpu.memory_space<vmem>>, vector<1x128x128xbf16>
    %79 = vector.shape_cast %78 : vector<1x128x128xbf16> to vector<128x128xbf16>
    %cst_71 = arith.constant dense<0.000000e+00> : vector<64x128xf32>
    %80 = tpu.matmul %77, %79, %cst_71 {dimension_numbers = #tpu.dot_dimension_numbers<[1], [0], [0], [1], [0, 0, 1, 1], [], []>} : vector<64x128xbf16>, vector<128x128xbf16>, vector<64x128xf32> -> vector<64x128xf32>
    %81 = arith.addf %75, %80 : vector<64x128xf32>
    %c2_72 = arith.constant 2 : index
    %c2_73 = arith.constant 2 : index
    %c0_74 = arith.constant 0 : index
    %82 = vector.load %arg12[%c2_72, %c2_73, %c0_74] : memref<6x18x128xbf16, #tpu.memory_space<vmem>>, vector<4x16x128xbf16>
    %83 = vector.shape_cast %82 : vector<4x16x128xbf16> to vector<64x128xbf16>
    %c8 = arith.constant 8 : index
    %c0_75 = arith.constant 0 : index
    %c0_76 = arith.constant 0 : index
    %84 = vector.load %arg7[%c8, %c0_75, %c0_76] : memref<9x128x128xbf16, #tpu.memory_space<vmem>>, vector<1x128x128xbf16>
    %85 = vector.shape_cast %84 : vector<1x128x128xbf16> to vector<128x128xbf16>
    %cst_77 = arith.constant dense<0.000000e+00> : vector<64x128xf32>
    %86 = tpu.matmul %83, %85, %cst_77 {dimension_numbers = #tpu.dot_dimension_numbers<[1], [0], [0], [1], [0, 0, 1, 1], [], []>} : vector<64x128xbf16>, vector<128x128xbf16>, vector<64x128xf32> -> vector<64x128xf32>
    %87 = arith.addf %81, %86 : vector<64x128xf32>
    %c0_78 = arith.constant 0 : index
    %c0_79 = arith.constant 0 : index
    %88 = vector.load %arg8[%c0_78, %c0_79] : memref<1x128xf32, #tpu.memory_space<vmem>>, vector<1x128xf32>
    %89 = vector.broadcast %88 : vector<1x128xf32> to vector<64x128xf32>
    %90 = arith.addf %87, %89 : vector<64x128xf32>
    %cst_80 = arith.constant 0.000000e+00 : f32
    %91 = vector.broadcast %cst_80 : f32 to vector<64x128xf32>
    %92 = arith.maximumf %90, %91 : vector<64x128xf32>
    %93 = arith.truncf %92 : vector<64x128xf32> to vector<64x128xbf16>
    %c0_81 = arith.constant 0 : index
    %c0_82 = arith.constant 0 : index
    %94 = vector.load %arg9[%c0_81, %c0_82] : memref<128x128xbf16, #tpu.memory_space<vmem>>, vector<128x128xbf16>
    %cst_83 = arith.constant dense<0.000000e+00> : vector<64x128xf32>
    %95 = tpu.matmul %93, %94, %cst_83 {dimension_numbers = #tpu.dot_dimension_numbers<[1], [0], [0], [1], [0, 0, 1, 1], [], []>} : vector<64x128xbf16>, vector<128x128xbf16>, vector<64x128xf32> -> vector<64x128xf32>
    %c0_84 = arith.constant 0 : index
    %c0_85 = arith.constant 0 : index
    %96 = vector.load %arg10[%c0_84, %c0_85] : memref<1x128xf32, #tpu.memory_space<vmem>>, vector<1x128xf32>
    %97 = vector.broadcast %96 : vector<1x128xf32> to vector<64x128xf32>
    %98 = arith.addf %95, %97 : vector<64x128xf32>
    %99 = arith.addf %98, %2 : vector<64x128xf32>
    %cst_86 = arith.constant 0.000000e+00 : f32
    %100 = vector.broadcast %cst_86 : f32 to vector<64x128xf32>
    %101 = arith.maximumf %99, %100 : vector<64x128xf32>
    %102 = vector.shape_cast %101 : vector<64x128xf32> to vector<4x16x128xf32>
    %c0_87 = arith.constant 0 : index
    %c0_88 = arith.constant 0 : index
    %c0_89 = arith.constant 0 : index
    %c0_90 = arith.constant 0 : index
    %103 = vector.load %arg11[%c0_87, %c0_88, %c0_89, %c0_90] : memref<1x4x16x128xf32, #tpu.memory_space<vmem>>, vector<1x4x16x128xf32>
    %104 = vector.shape_cast %103 : vector<1x4x16x128xf32> to vector<4x16x128xf32>
    %105 = vector.shape_cast %102 : vector<4x16x128xf32> to vector<1x4x16x128xf32>
    tpu.vector_store %arg11[%c0_87, %c0_88, %c0_89, %c0_90], %105 {strides = array<i32>} : memref<1x4x16x128xf32, #tpu.memory_space<vmem>>, vector<1x4x16x128xf32>,
    return
  }
  func.func @transform_0(%arg0: i32, %arg1: i32) -> (i32, i32, i32, i32) {
    %c0_i32 = arith.constant 0 : i32
    %c0_i32_0 = arith.constant 0 : i32
    %c0_i32_1 = arith.constant 0 : i32
    return %arg0, %arg1, %c0_i32, %c0_i32_0 : i32, i32, i32, i32
  }
  func.func @transform_1(%arg0: i32, %arg1: i32) -> (i32, i32, i32, i32) {
    %c4_i32 = arith.constant 4 : i32
    %0 = arith.muli %arg1, %c4_i32 : i32
    %c1_i32 = arith.constant 1 : i32
    %1 = arith.subi %0, %c1_i32 : i32
    %c0_i32 = arith.constant 0 : i32
    %2 = arith.maxsi %1, %c0_i32 : i32
    %c0_i32_0 = arith.constant 0 : i32
    %c0_i32_1 = arith.constant 0 : i32
    %c0_i32_2 = arith.constant 0 : i32
    return %arg0, %2, %c0_i32_0, %c0_i32_1 : i32, i32, i32, i32
  }
  func.func @transform_2(%arg0: i32, %arg1: i32) -> (i32, i32, i32, i32) {
    %c4_i32 = arith.constant 4 : i32
    %0 = arith.muli %arg1, %c4_i32 : i32
    %c4_i32_0 = arith.constant 4 : i32
    %1 = arith.addi %0, %c4_i32_0 : i32
    %c15_i32 = arith.constant 15 : i32
    %2 = arith.minsi %1, %c15_i32 : i32
    %c0_i32 = arith.constant 0 : i32
    %c0_i32_1 = arith.constant 0 : i32
    %c0_i32_2 = arith.constant 0 : i32
    return %arg0, %2, %c0_i32, %c0_i32_1 : i32, i32, i32, i32
  }
  func.func @transform_3(%arg0: i32, %arg1: i32) -> (i32, i32) {
    %c0_i32 = arith.constant 0 : i32
    %c0_i32_0 = arith.constant 0 : i32
    %c0_i32_1 = arith.constant 0 : i32
    return %c0_i32, %c0_i32_0 : i32, i32
  }
  func.func @transform_4(%arg0: i32, %arg1: i32) -> (i32, i32) {
    %c0_i32 = arith.constant 0 : i32
    %c0_i32_0 = arith.constant 0 : i32
    %c0_i32_1 = arith.constant 0 : i32
    return %c0_i32, %c0_i32_0 : i32, i32
  }
  func.func @transform_5(%arg0: i32, %arg1: i32) -> (i32, i32, i32) {
    %c0_i32 = arith.constant 0 : i32
    %c0_i32_0 = arith.constant 0 : i32
    %c0_i32_1 = arith.constant 0 : i32
    %c0_i32_2 = arith.constant 0 : i32
    return %c0_i32, %c0_i32_0, %c0_i32_1 : i32, i32, i32
  }
  func.func @transform_6(%arg0: i32, %arg1: i32) -> (i32, i32) {
    %c0_i32 = arith.constant 0 : i32
    %c0_i32_0 = arith.constant 0 : i32
    %c0_i32_1 = arith.constant 0 : i32
    return %c0_i32, %c0_i32_0 : i32, i32
  }
  func.func @transform_7(%arg0: i32, %arg1: i32) -> (i32, i32) {
    %c0_i32 = arith.constant 0 : i32
    %c0_i32_0 = arith.constant 0 : i32
    %c0_i32_1 = arith.constant 0 : i32
    return %c0_i32, %c0_i32_0 : i32, i32
  }
  func.func @transform_8(%arg0: i32, %arg1: i32) -> (i32, i32) {
    %c0_i32 = arith.constant 0 : i32
    %c0_i32_0 = arith.constant 0 : i32
    %c0_i32_1 = arith.constant 0 : i32
    return %c0_i32, %c0_i32_0 : i32, i32
  }
  func.func @transform_9(%arg0: i32, %arg1: i32) -> (i32, i32, i32, i32) {
    %c0_i32 = arith.constant 0 : i32
    %c0_i32_0 = arith.constant 0 : i32
    %c0_i32_1 = arith.constant 0 : i32
    return %arg0, %arg1, %c0_i32, %c0_i32_0 : i32, i32, i32, i32
  }
}

</mosaic_0001>

<llo_original>
// kernel: tpu_custom_call.1
$region0: #{tpu_custom_call.1}
  #allocation0 [shape = 'u32[]', space=smem, size = 0x4, offset = 0x4, fixed_abs, tag = 'smem constant byte address 0x4 - core index']
  #allocation1 [shape = 'u32[144,128]{1,0:T(1,128)}', space=vmem, size = 0x12000, scoped, tag = 'internal scratch']
  #allocation2 [shape = 'bf16[6,18,128]{2,1,0:T(8,128)(2,1)}', space=vmem, size = 0x9000, scoped, tag = 'scratch operand']
  %s0 = inlined_call_operand.hbm [shape: f32[2,16,16,128], index: 0, kind: input, shape index: {}]
  %s1 = inlined_call_operand.hbm [shape: f32[2,16,16,128], index: 1, kind: input, shape index: {}]
  %s2 = inlined_call_operand.hbm [shape: f32[2,16,16,128], index: 2, kind: input, shape index: {}]
  %s3 = inlined_call_operand.hbm [shape: bf16[128,128], index: 3, kind: input, shape index: {}]
  %s4 = inlined_call_operand.vmem [shape: f32[1,128], index: 4, kind: input, shape index: {}]
  %s5 = inlined_call_operand.hbm [shape: bf16[9,128,128], index: 5, kind: input, shape index: {}]
  %s6 = inlined_call_operand.vmem [shape: f32[1,128], index: 6, kind: input, shape index: {}]
  %s7 = inlined_call_operand.hbm [shape: bf16[128,128], index: 7, kind: input, shape index: {}]
  %s8 = inlined_call_operand.vmem [shape: f32[1,128], index: 8, kind: input, shape index: {}]
  %s9 = inlined_call_operand.hbm [shape: f32[2,16,16,128], index: 9, kind: output, shape index: {}]
  %s10 = sld [smem:[#allocation0]]
  $region93: #{tpu_custom_call.1} parent=0
    _
  %s12 = ssub.s32 1, %s10
  %s13 = scalar_select 0, %s12, %s10
  $region1: #{tpu_custom_call.1} parent=0
    #allocation3 [shape = 'u8[65536]{0}', space=vmem, size = 0x10000, scoped, tag = 'input window, operand 0']
    #allocation4 [shape = 's32[2]{0}', space=sflag, size = 0x8, scoped, tag = 'scoped memory for tpu_custom_call.1']
    #allocation5 [shape = 's32[2]{0}', space=sflag, size = 0x8, scoped, tag = 'scoped memory for tpu_custom_call.1']
    #allocation6 [shape = 'u8[16384]{0}', space=vmem, size = 0x4000, scoped, tag = 'input window, operand 1']
    #allocation7 [shape = 's32[2]{0}', space=sflag, size = 0x8, scoped, tag = 'scoped memory for tpu_custom_call.1']
    #allocation8 [shape = 'u8[16384]{0}', space=vmem, size = 0x4000, scoped, tag = 'input window, operand 2']
    #allocation9 [shape = 'u8[32768]{0}', space=vmem, size = 0x8000, scoped, tag = 'input window, operand 3, single buffered']
    #allocation10 [shape = 's32[1]{0}', space=sflag, size = 0x4, scoped, tag = 'scoped memory for tpu_custom_call.1']
    #allocation11 [shape = 'u8[294912]{0}', space=vmem, size = 0x48000, scoped, tag = 'input window, operand 5, single buffered']
    #allocation12 [shape = 'u8[32768]{0}', space=vmem, size = 0x8000, scoped, tag = 'input window, operand 7, single buffered']
    #allocation13 [shape = 's32[1]{0}', space=sflag, size = 0x4, scoped, tag = 'scoped memory for tpu_custom_call.1']
    #allocation14 [shape = 'u8[65536]{0}', space=vmem, size = 0x10000, scoped, tag = 'output window, operand 0']
    %14 = vsyncpa [#allocation4], 0
    %s15 = scalar_lea.sflag [#allocation4], 1
    %16 = vsyncpa %s15, 0
    %17 = vsyncpa [#allocation7], 0
    %s18 = scalar_lea.sflag [#allocation7], 1
    %19 = vsyncpa %s18, 0
    %20 = vsyncpa [#allocation10], 0
    %21 = vsyncpa [#allocation13], 0
    %22 = vsyncpa [#allocation5], 0
    %s23 = scalar_lea.sflag [#allocation5], 1
    %24 = vsyncpa %s23, 0
    loop: start=0, step=1, limit=10
    $region2: #{tpu_custom_call.1} parent=1 // loop_pre_header
      _
    $region3: #{tpu_custom_call.1} parent=1 // loop_header
      %s26 = sphi 0, %s30
      %p27 = scmp.ge.s32.totalorder %s26, 10
      %s33 = sphi 0, %s45
      %s34 = sphi 0, %s41
      %s35 = sphi 0, %s33
      %s36 = sphi 0, %s34
      %s37 = sphi 0, %s35
      %s38 = sphi 0, %s36
      %s50 = sphi 0, %s52
      %s53 = sphi 0, %s50
      %s54 = sphi 0, %s53
      %s70 = sphi 0, %s54
      %s86 = sphi 0, %s88
      %s89 = sphi 0, %s86
      %s90 = sphi 0, %s89
      %s106 = sphi 0, %s90
      %s122 = sphi 0, %s124
      %s125 = sphi 0, %s122
      %s126 = sphi 0, %s125
      %s142 = sphi 0, %s126
      %s146 = sphi 0, %s146
      %s148 = sphi 0, %s146
      %s149 = sphi 0, %s148
      %s163 = sphi 0, %s149
      %s167 = sphi 0, %s167
      %s169 = sphi 0, %s167
      %s170 = sphi 0, %s169
      %s184 = sphi 0, %s170
      %s188 = sphi 0, %s188
      %s190 = sphi 0, %s188
      %s191 = sphi 0, %s190
      %s205 = sphi 0, %s191
      %s209 = sphi 0, %s209
      %s211 = sphi 0, %s209
      %s212 = sphi 0, %s211
      %s226 = sphi 0, %s212
      %s230 = sphi 0, %s230
      %s232 = sphi 0, %s230
      %s233 = sphi 0, %s232
      %s247 = sphi 0, %s233
      %s251 = sphi 0, %s251
      %s253 = sphi 0, %s251
      %s254 = sphi 0, %s253
      %s268 = sphi 0, %s254
      %s276 = sphi 0, %s278
      %s279 = sphi 0, %s276
      %s280 = sphi 0, %s279
      %s296 = sphi 0, %s280
    $region4: #{tpu_custom_call.1} parent=1 // loop_header_branch
      %29 = sbr.rel (%p27) target = $region8
    $region5: #{tpu_custom_call.1} parent=1 // loop_body
      %s31 = ssub.s32 %s26, 1
      %s32 = ssub.s32 %s26, 2
      %s39 = sadd.s32 1, %s34
      %p40 = scmp.ge.s32.totalorder %s39, 4
      %s41 = scalar_select %p40, 0, %s39
      %s42 = sadd.s32 1, %s33
      %s43 = scalar_select %p40, %s42, %s33
      %p44 = scmp.ge.s32.totalorder %s43, 2
      %s45 = scalar_select %p44, 0, %s43
      %s46 = ssub.s32 %s33, %s45
      %s47 = ssub.s32 %s34, %s41
      %s48 = sor.u32 %s46, %s47
      %p49 = scmp.eq.s32.totalorder %s48, 0
      %s51 = sadd.s32 %s50, 1
      %s52 = scalar_select %p49, %s50, %s51
      %p55 = pneg %p49
      %p56 = scmp.eq.s32.totalorder %s26, 7
      %p57 = por %p55, %p56
      %p58 = scmp.ne.s32.totalorder %s50, %s53
      %p59 = scmp.eq.s32.totalorder %s26, 0
      %p60 = por %p58, %p59
      %p61 = scmp.ne.s32.totalorder %s50, %s53
      %p62 = scmp.eq.s32.totalorder %s31, 7
      %p63 = por %p61, %p62
      %p64 = scmp.ne.s32.totalorder %s53, %s54
      %p65 = scmp.eq.s32.totalorder %s31, 0
      %p66 = por %p64, %p65
      %p67 = scmp.ne.s32.totalorder %s53, %s54
      %p68 = scmp.eq.s32.totalorder %s32, 7
      %p69 = por %p67, %p68
      %p71 = scmp.ne.s32.totalorder %s54, %s70
      %p72 = scmp.eq.s32.totalorder %s32, 0
      %p73 = por %p71, %p72
      %s74 = smul.u32 %s34, 4
      %s75 = ssub.s32 %s74, 1
      %p76 = scmp.gt.s32.totalorder %s75, 0
      %s77 = scalar_select %p76, %s75, 0
      %s78 = smul.u32 %s41, 4
      %s79 = ssub.s32 %s78, 1
      %p80 = scmp.gt.s32.totalorder %s79, 0
      %s81 = scalar_select %p80, %s79, 0
      %s82 = ssub.s32 %s33, %s45
      %s83 = ssub.s32 %s77, %s81
      %s84 = sor.u32 %s82, %s83
      %p85 = scmp.eq.s32.totalorder %s84, 0
      %s87 = sadd.s32 %s86, 1
      %s88 = scalar_select %p85, %s86, %s87
      %p91 = pneg %p85
      %p92 = scmp.eq.s32.totalorder %s26, 7
      %p93 = por %p91, %p92
      %p94 = scmp.ne.s32.totalorder %s86, %s89
      %p95 = scmp.eq.s32.totalorder %s26, 0
      %p96 = por %p94, %p95
      %p97 = scmp.ne.s32.totalorder %s86, %s89
      %p98 = scmp.eq.s32.totalorder %s31, 7
      %p99 = por %p97, %p98
      %p100 = scmp.ne.s32.totalorder %s89, %s90
      %p101 = scmp.eq.s32.totalorder %s31, 0
      %p102 = por %p100, %p101
      %p103 = scmp.ne.s32.totalorder %s89, %s90
      %p104 = scmp.eq.s32.totalorder %s32, 7
      %p105 = por %p103, %p104
      %p107 = scmp.ne.s32.totalorder %s90, %s106
      %p108 = scmp.eq.s32.totalorder %s32, 0
      %p109 = por %p107, %p108
      %s110 = smul.u32 %s34, 4
      %s111 = sadd.s32 %s110, 4
      %p112 = scmp.lt.s32.totalorder %s111, 15
      %s113 = scalar_select %p112, %s111, 15
      %s114 = smul.u32 %s41, 4
      %s115 = sadd.s32 %s114, 4
      %p116 = scmp.lt.s32.totalorder %s115, 15
      %s117 = scalar_select %p116, %s115, 15
      %s118 = ssub.s32 %s33, %s45
      %s119 = ssub.s32 %s113, %s117
      %s120 = sor.u32 %s118, %s119
      %p121 = scmp.eq.s32.totalorder %s120, 0
      %s123 = sadd.s32 %s122, 1
      %s124 = scalar_select %p121, %s122, %s123
      %p127 = pneg %p121
      %p128 = scmp.eq.s32.totalorder %s26, 7
      %p129 = por %p127, %p128
      %p130 = scmp.ne.s32.totalorder %s122, %s125
      %p131 = scmp.eq.s32.totalorder %s26, 0
      %p132 = por %p130, %p131
      %p133 = scmp.ne.s32.totalorder %s122, %s125
      %p134 = scmp.eq.s32.totalorder %s31, 7
      %p135 = por %p133, %p134
      %p136 = scmp.ne.s32.totalorder %s125, %s126
      %p137 = scmp.eq.s32.totalorder %s31, 0
      %p138 = por %p136, %p137
      %p139 = scmp.ne.s32.totalorder %s125, %s126
      %p140 = scmp.eq.s32.totalorder %s32, 7
      %p141 = por %p139, %p140
      %p143 = scmp.ne.s32.totalorder %s126, %s142
      %p144 = scmp.eq.s32.totalorder %s32, 0
      %p145 = por %p143, %p144
      %s147 = sadd.s32 %s146, 1
      %p150 = scmp.eq.s32.totalorder %s26, 7
      %p151 = scmp.ne.s32.totalorder %s146, %s148
      %p152 = scmp.eq.s32.totalorder %s26, 0
      %p153 = por %p151, %p152
      %p154 = scmp.ne.s32.totalorder %s146, %s148
      %p155 = scmp.eq.s32.totalorder %s31, 7
      %p156 = por %p154, %p155
      %p157 = scmp.ne.s32.totalorder %s148, %s149
      %p158 = scmp.eq.s32.totalorder %s31, 0
      %p159 = por %p157, %p158
      %p160 = scmp.ne.s32.totalorder %s148, %s149
      %p161 = scmp.eq.s32.totalorder %s32, 7
      %p162 = por %p160, %p161
      %p164 = scmp.ne.s32.totalorder %s149, %s163
      %p165 = scmp.eq.s32.totalorder %s32, 0
      %p166 = por %p164, %p165
      %s168 = sadd.s32 %s167, 1
      %p171 = scmp.eq.s32.totalorder %s26, 7
      %p172 = scmp.ne.s32.totalorder %s167, %s169
      %p173 = scmp.eq.s32.totalorder %s26, 0
      %p174 = por %p172, %p173
      %p175 = scmp.ne.s32.totalorder %s167, %s169
      %p176 = scmp.eq.s32.totalorder %s31, 7
      %p177 = por %p175, %p176
      %p178 = scmp.ne.s32.totalorder %s169, %s170
      %p179 = scmp.eq.s32.totalorder %s31, 0
      %p180 = por %p178, %p179
      %p181 = scmp.ne.s32.totalorder %s169, %s170
      %p182 = scmp.eq.s32.totalorder %s32, 7
      %p183 = por %p181, %p182
      %p185 = scmp.ne.s32.totalorder %s170, %s184
      %p186 = scmp.eq.s32.totalorder %s32, 0
      %p187 = por %p185, %p186
      %s189 = sadd.s32 %s188, 1
      %p192 = scmp.eq.s32.totalorder %s26, 7
      %p193 = scmp.ne.s32.totalorder %s188, %s190
      %p194 = scmp.eq.s32.totalorder %s26, 0
      %p195 = por %p193, %p194
      %p196 = scmp.ne.s32.totalorder %s188, %s190
      %p197 = scmp.eq.s32.totalorder %s31, 7
      %p198 = por %p196, %p197
      %p199 = scmp.ne.s32.totalorder %s190, %s191
      %p200 = scmp.eq.s32.totalorder %s31, 0
      %p201 = por %p199, %p200
      %p202 = scmp.ne.s32.totalorder %s190, %s191
      %p203 = scmp.eq.s32.totalorder %s32, 7
      %p204 = por %p202, %p203
      %p206 = scmp.ne.s32.totalorder %s191, %s205
      %p207 = scmp.eq.s32.totalorder %s32, 0
      %p208 = por %p206, %p207
      %s210 = sadd.s32 %s209, 1
      %p213 = scmp.eq.s32.totalorder %s26, 7
      %p214 = scmp.ne.s32.totalorder %s209, %s211
      %p215 = scmp.eq.s32.totalorder %s26, 0
      %p216 = por %p214, %p215
      %p217 = scmp.ne.s32.totalorder %s209, %s211
      %p218 = scmp.eq.s32.totalorder %s31, 7
      %p219 = por %p217, %p218
      %p220 = scmp.ne.s32.totalorder %s211, %s212
      %p221 = scmp.eq.s32.totalorder %s31, 0
      %p222 = por %p220, %p221
      %p223 = scmp.ne.s32.totalorder %s211, %s212
      %p224 = scmp.eq.s32.totalorder %s32, 7
      %p225 = por %p223, %p224
      %p227 = scmp.ne.s32.totalorder %s212, %s226
      %p228 = scmp.eq.s32.totalorder %s32, 0
      %p229 = por %p227, %p228
      %s231 = sadd.s32 %s230, 1
      %p234 = scmp.eq.s32.totalorder %s26, 7
      %p235 = scmp.ne.s32.totalorder %s230, %s232
      %p236 = scmp.eq.s32.totalorder %s26, 0
      %p237 = por %p235, %p236
      %p238 = scmp.ne.s32.totalorder %s230, %s232
      %p239 = scmp.eq.s32.totalorder %s31, 7
      %p240 = por %p238, %p239
      %p241 = scmp.ne.s32.totalorder %s232, %s233
      %p242 = scmp.eq.s32.totalorder %s31, 0
      %p243 = por %p241, %p242
      %p244 = scmp.ne.s32.totalorder %s232, %s233
      %p245 = scmp.eq.s32.totalorder %s32, 7
      %p246 = por %p244, %p245
      %p248 = scmp.ne.s32.totalorder %s233, %s247
      %p249 = scmp.eq.s32.totalorder %s32, 0
      %p250 = por %p248, %p249
      %s252 = sadd.s32 %s251, 1
      %p255 = scmp.eq.s32.totalorder %s26, 7
      %p256 = scmp.ne.s32.totalorder %s251, %s253
      %p257 = scmp.eq.s32.totalorder %s26, 0
      %p258 = por %p256, %p257
      %p259 = scmp.ne.s32.totalorder %s251, %s253
      %p260 = scmp.eq.s32.totalorder %s31, 7
      %p261 = por %p259, %p260
      %p262 = scmp.ne.s32.totalorder %s253, %s254
      %p263 = scmp.eq.s32.totalorder %s31, 0
      %p264 = por %p262, %p263
      %p265 = scmp.ne.s32.totalorder %s253, %s254
      %p266 = scmp.eq.s32.totalorder %s32, 7
      %p267 = por %p265, %p266
      %p269 = scmp.ne.s32.totalorder %s254, %s268
      %p270 = scmp.eq.s32.totalorder %s32, 0
      %p271 = por %p269, %p270
      %s272 = ssub.s32 %s33, %s45
      %s273 = ssub.s32 %s34, %s41
      %s274 = sor.u32 %s272, %s273
      %p275 = scmp.eq.s32.totalorder %s274, 0
      %s277 = sadd.s32 %s276, 1
      %s278 = scalar_select %p275, %s276, %s277
      %p281 = pneg %p275
      %p282 = scmp.eq.s32.totalorder %s26, 7
      %p283 = por %p281, %p282
      %p284 = scmp.ne.s32.totalorder %s276, %s279
      %p285 = scmp.eq.s32.totalorder %s26, 0
      %p286 = por %p284, %p285
      %p287 = scmp.ne.s32.totalorder %s276, %s279
      %p288 = scmp.eq.s32.totalorder %s31, 7
      %p289 = por %p287, %p288
      %p290 = scmp.ne.s32.totalorder %s279, %s280
      %p291 = scmp.eq.s32.totalorder %s31, 0
      %p292 = por %p290, %p291
      %p293 = scmp.ne.s32.totalorder %s279, %s280
      %p294 = scmp.eq.s32.totalorder %s32, 7
      %p295 = por %p293, %p294
      %p297 = scmp.ne.s32.totalorder %s280, %s296
      %p298 = scmp.eq.s32.totalorder %s32, 0
      %p299 = por %p297, %p298
      %p300 = scmp.le.s32.totalorder 1, %s26
      %p301 = scmp.lt.s32.totalorder %s26, 9
      %p302 = pnand %p300, %p301
      %p303 = pneg %p302
      // Predicated region
      $region9: #{tpu_custom_call.1} parent=5 // pred_check
        _
      $region10: #{tpu_custom_call.1} parent=5 // pred_check_branch
        %305 = sbr.rel (%p302) target = $region12
      $region11: #{tpu_custom_call.1} parent=5 // pred_region
        %s306 = ssub.s32 %s26, 1
        // Predicated region
        $region13: #{tpu_custom_call.1} parent=11 // pred_check
          %p307 = pneg %p159
        $region14: #{tpu_custom_call.1} parent=11 // pred_check_branch
          %309 = sbr.rel (%p307) target = $region16
        $region15: #{tpu_custom_call.1} parent=11 // pred_region
          %s311 = ssub.s32 1024, 1024
          %312 = vsyncadd [#allocation10], %s311
          %s313 = sshll.u32 [#allocation9], 4
          %s314 = int_to_ptr.vmem [resolvable:$true] %s313
          %319 = dma.hbm_to_vmem [thread:$0]  %s3, 1024, %s314, [#allocation10], 64, 64, 4
        $region16: #{tpu_custom_call.1} parent=11 // pred_fallthru
          _
        // Predicated region
        $region17: #{tpu_custom_call.1} parent=11 // pred_check
          %p320 = pneg %p180
        $region18: #{tpu_custom_call.1} parent=11 // pred_check_branch
          %322 = sbr.rel (%p320) target = $region20
        $region19: #{tpu_custom_call.1} parent=11 // pred_region
          _
        $region20: #{tpu_custom_call.1} parent=11 // pred_fallthru
          _
        // Predicated region
        $region21: #{tpu_custom_call.1} parent=11 // pred_check
          %p323 = pneg %p201
        $region22: #{tpu_custom_call.1} parent=11 // pred_check_branch
          %325 = sbr.rel (%p323) target = $region24
        $region23: #{tpu_custom_call.1} parent=11 // pred_region
          %s327 = ssub.s32 9216, 9216
          %328 = vsyncadd [#allocation10], %s327
          %s329 = sshll.u32 [#allocation11], 4
          %s330 = int_to_ptr.vmem [resolvable:$true] %s329
          %335 = dma.hbm_to_vmem [thread:$0]  %s5, 9216, %s330, [#allocation10], 64, 64, 4
        $region24: #{tpu_custom_call.1} parent=11 // pred_fallthru
          _
        // Predicated region
        $region25: #{tpu_custom_call.1} parent=11 // pred_check
          %p336 = pneg %p222
        $region26: #{tpu_custom_call.1} parent=11 // pred_check_branch
          %338 = sbr.rel (%p336) target = $region28
        $region27: #{tpu_custom_call.1} parent=11 // pred_region
          _
        $region28: #{tpu_custom_call.1} parent=11 // pred_fallthru
          _
        // Predicated region
        $region29: #{tpu_custom_call.1} parent=11 // pred_check
          %p339 = pneg %p243
        $region30: #{tpu_custom_call.1} parent=11 // pred_check_branch
          %341 = sbr.rel (%p339) target = $region32
        $region31: #{tpu_custom_call.1} parent=11 // pred_region
          %s343 = ssub.s32 1024, 1024
          %344 = vsyncadd [#allocation13], %s343
          %s345 = sshll.u32 [#allocation12], 4
          %s346 = int_to_ptr.vmem [resolvable:$true] %s345
          %351 = dma.hbm_to_vmem [thread:$0]  %s7, 1024, %s346, [#allocation13], 64, 64, 4
        $region32: #{tpu_custom_call.1} parent=11 // pred_fallthru
          _
        // Predicated region
        $region33: #{tpu_custom_call.1} parent=11 // pred_check
          %p352 = pneg %p264
        $region34: #{tpu_custom_call.1} parent=11 // pred_check_branch
          %354 = sbr.rel (%p352) target = $region36
        $region35: #{tpu_custom_call.1} parent=11 // pred_region
          _
        $region36: #{tpu_custom_call.1} parent=11 // pred_fallthru
          _
      $region12: #{tpu_custom_call.1} parent=5 // pred_fallthru
        _
      %p355 = scmp.lt.s32.totalorder %s26, 8
      // Predicated region
      $region37: #{tpu_custom_call.1} parent=5 // pred_check
        %p356 = pneg %p355
      $region38: #{tpu_custom_call.1} parent=5 // pred_check_branch
        %358 = sbr.rel (%p356) target = $region40
      $region39: #{tpu_custom_call.1} parent=5 // pred_region
        // Predicated region
        $region41: #{tpu_custom_call.1} parent=39 // pred_check
          %p359 = pneg %p60
        $region42: #{tpu_custom_call.1} parent=39 // pred_check_branch
          %361 = sbr.rel (%p359) target = $region44
        $region43: #{tpu_custom_call.1} parent=39 // pred_region
          %s362 = sand.u32 %s50, 1
          %s363 = scalar_lea.sflag [#allocation4], %s362
          %s364 = sand.u32 %s50, 1
          %s365 = smul.addr %s364, 64
          %s366 = scalar_lea.vmem [#allocation3], %s365
          %s367 = smul.u32 4, %s34
          %s369 = ssub.s32 1024, 1024
          %370 = vsyncadd %s363, %s369
          %s371 = smul.addr %s367, 2
          %s372 = smul.addr %s33, 32
          %s373 = sadd.s32 %s371, %s372
          %s374 = smul.addr %s373, 128
          %s375 = scalar_lea.hbm %s0, %s374
          %s376 = sshll.u32 %s366, 4
          %s377 = int_to_ptr.vmem [resolvable:$true] %s376
          %382 = dma.hbm_to_vmem [thread:$0]  %s375, 1024, %s377, %s363, 128, 128, 8
        $region44: #{tpu_custom_call.1} parent=39 // pred_fallthru
          _
        // Predicated region
        $region45: #{tpu_custom_call.1} parent=39 // pred_check
          %p383 = pneg %p96
        $region46: #{tpu_custom_call.1} parent=39 // pred_check_branch
          %385 = sbr.rel (%p383) target = $region48
        $region47: #{tpu_custom_call.1} parent=39 // pred_region
          %s386 = sand.u32 %s26, 1
          %s387 = scalar_lea.sflag [#allocation7], %s386
          %s388 = sand.u32 %s86, 1
          %s389 = smul.addr %s388, 16
          %s390 = scalar_lea.vmem [#allocation6], %s389
          %s391 = smul.u32 %s34, 4
          %s392 = ssub.s32 %s391, 1
          %p393 = scmp.gt.s32.totalorder %s392, 0
          %s394 = scalar_select %p393, %s392, 0
          %s396 = ssub.s32 256, 256
          %397 = vsyncadd %s387, %s396
          %s398 = smul.addr %s394, 2
          %s399 = smul.addr %s33, 32
          %s400 = sadd.s32 %s398, %s399
          %s401 = smul.addr %s400, 128
          %s402 = scalar_lea.hbm %s1, %s401
          %s403 = sshll.u32 %s390, 4
          %s404 = int_to_ptr.vmem [resolvable:$true] %s403
          %409 = dma.hbm_to_vmem [thread:$0]  %s402, 256, %s404, %s387, 128, 128, 8
        $region48: #{tpu_custom_call.1} parent=39 // pred_fallthru
          _
        // Predicated region
        $region49: #{tpu_custom_call.1} parent=39 // pred_check
          %p410 = pneg %p132
        $region50: #{tpu_custom_call.1} parent=39 // pred_check_branch
          %412 = sbr.rel (%p410) target = $region52
        $region51: #{tpu_custom_call.1} parent=39 // pred_region
          %s413 = sand.u32 %s26, 1
          %s414 = scalar_lea.sflag [#allocation7], %s413
          %s415 = sand.u32 %s122, 1
          %s416 = smul.addr %s415, 16
          %s417 = scalar_lea.vmem [#allocation8], %s416
          %s418 = smul.u32 %s34, 4
          %s419 = sadd.s32 %s418, 4
          %p420 = scmp.lt.s32.totalorder %s419, 15
          %s421 = scalar_select %p420, %s419, 15
          %s423 = ssub.s32 256, 256
          %424 = vsyncadd %s414, %s423
          %s425 = smul.addr %s421, 2
          %s426 = smul.addr %s33, 32
          %s427 = sadd.s32 %s425, %s426
          %s428 = smul.addr %s427, 128
          %s429 = scalar_lea.hbm %s2, %s428
          %s430 = sshll.u32 %s417, 4
          %s431 = int_to_ptr.vmem [resolvable:$true] %s430
          %436 = dma.hbm_to_vmem [thread:$0]  %s429, 256, %s431, %s414, 128, 128, 8
        $region52: #{tpu_custom_call.1} parent=39 // pred_fallthru
          _
      $region40: #{tpu_custom_call.1} parent=5 // pred_fallthru
        _
      %p437 = scmp.le.s32.totalorder 1, %s26
      %p438 = scmp.lt.s32.totalorder %s26, 9
      %p439 = pnand %p437, %p438
      %p440 = pneg %p439
      // Predicated region
      $region53: #{tpu_custom_call.1} parent=5 // pred_check
        _
      $region54: #{tpu_custom_call.1} parent=5 // pred_check_branch
        %442 = sbr.rel (%p439) target = $region56
      $region55: #{tpu_custom_call.1} parent=5 // pred_region
        %s443 = ssub.s32 %s26, 1
        %s444 = sand.u32 %s53, 1
        %s445 = scalar_lea.sflag [#allocation4], %s444
        %s446 = sand.u32 %s53, 1
        %s447 = smul.addr %s446, 64
        %s448 = scalar_lea.vmem [#allocation3], %s447
        // Predicated region
        $region57: #{tpu_custom_call.1} parent=55 // pred_check
          %p449 = pneg %p66
        $region58: #{tpu_custom_call.1} parent=55 // pred_check_branch
          %451 = sbr.rel (%p449) target = $region60
        $region59: #{tpu_custom_call.1} parent=55 // pred_region
          %452 = dma.done %s445, 1024
        $region60: #{tpu_custom_call.1} parent=55 // pred_fallthru
          _
        %s453 = sand.u32 %s31, 1
        %s454 = scalar_lea.sflag [#allocation7], %s453
        %s455 = sand.u32 %s89, 1
        %s456 = smul.addr %s455, 16
        %s457 = scalar_lea.vmem [#allocation6], %s456
        // Predicated region
        $region61: #{tpu_custom_call.1} parent=55 // pred_check
          %p458 = pneg %p102
        $region62: #{tpu_custom_call.1} parent=55 // pred_check_branch
          %460 = sbr.rel (%p458) target = $region64
        $region63: #{tpu_custom_call.1} parent=55 // pred_region
          %461 = dma.done %s454, 256
        $region64: #{tpu_custom_call.1} parent=55 // pred_fallthru
          _
        %s462 = sand.u32 %s31, 1
        %s463 = scalar_lea.sflag [#allocation7], %s462
        %s464 = sand.u32 %s125, 1
        %s465 = smul.addr %s464, 16
        %s466 = scalar_lea.vmem [#allocation8], %s465
        // Predicated region
        $region65: #{tpu_custom_call.1} parent=55 // pred_check
          %p467 = pneg %p138
        $region66: #{tpu_custom_call.1} parent=55 // pred_check_branch
          %469 = sbr.rel (%p467) target = $region68
        $region67: #{tpu_custom_call.1} parent=55 // pred_region
          %470 = dma.done %s463, 256
        $region68: #{tpu_custom_call.1} parent=55 // pred_fallthru
          _
        // Predicated region
        $region69: #{tpu_custom_call.1} parent=55 // pred_check
          %p471 = pneg %p159
        $region70: #{tpu_custom_call.1} parent=55 // pred_check_branch
          %473 = sbr.rel (%p471) target = $region72
        $region71: #{tpu_custom_call.1} parent=55 // pred_region
          %474 = dma.done [#allocation10], 1024
        $region72: #{tpu_custom_call.1} parent=55 // pred_fallthru
          _
        // Predicated region
        $region73: #{tpu_custom_call.1} parent=55 // pred_check
          %p475 = pneg %p201
        $region74: #{tpu_custom_call.1} parent=55 // pred_check_branch
          %477 = sbr.rel (%p475) target = $region76
        $region75: #{tpu_custom_call.1} parent=55 // pred_region
          %478 = dma.done [#allocation10], 9216
        $region76: #{tpu_custom_call.1} parent=55 // pred_fallthru
          _
        // Predicated region
        $region77: #{tpu_custom_call.1} parent=55 // pred_check
          %p479 = pneg %p243
        $region78: #{tpu_custom_call.1} parent=55 // pred_check_branch
          %481 = sbr.rel (%p479) target = $region80
        $region79: #{tpu_custom_call.1} parent=55 // pred_region
          %482 = dma.done [#allocation13], 1024
        $region80: #{tpu_custom_call.1} parent=55 // pred_fallthru
          _
        %s483 = sand.u32 %s53, 1
        %s484 = scalar_lea.sflag [#allocation4], %s483
        %s485 = sand.u32 %s53, 1
        %s486 = smul.addr %s485, 64
        %s487 = scalar_lea.vmem [#allocation3], %s486
        %p488 = pneg %p66
        %p489 = pneg %p63
        %s490 = sand.u32 %s31, 1
        %s491 = scalar_lea.sflag [#allocation7], %s490
        %s492 = sand.u32 %s89, 1
        %s493 = smul.addr %s492, 16
        %s494 = scalar_lea.vmem [#allocation6], %s493
        %p495 = pneg %p102
        %p496 = pneg %p99
        %s497 = sand.u32 %s31, 1
        %s498 = scalar_lea.sflag [#allocation7], %s497
        %s499 = sand.u32 %s125, 1
        %s500 = smul.addr %s499, 16
        %s501 = scalar_lea.vmem [#allocation8], %s500
        %p502 = pneg %p138
        %p503 = pneg %p135
        %p504 = pneg %p159
        %p505 = pneg %p156
        %p506 = pneg %p180
        %p507 = pneg %p177
        %p508 = pneg %p201
        %p509 = pneg %p198
        %p510 = pneg %p222
        %p511 = pneg %p219
        %p512 = pneg %p243
        %p513 = pneg %p240
        %p514 = pneg %p264
        %p515 = pneg %p261
        %p516 = pneg %p292
        %p517 = pneg %p289
        %s518 = sand.u32 %s279, 1
        %s519 = scalar_lea.sflag [#allocation5], %s518
        %s520 = sand.u32 %s279, 1
        %s521 = smul.addr %s520, 64
        %s522 = scalar_lea.vmem [#allocation14], %s521
        %s523 = smul.u32 4, %s36
        %s524 = smul.u32 %s36, 4
        %s525 = ssub.s32 %s524, 1
        %p526 = scmp.gt.s32.totalorder %s525, 0
        %s527 = scalar_select %p526, %s525, 0
        %s528 = smul.u32 %s36, 4
        %s529 = sadd.s32 %s528, 4
        %p530 = scmp.lt.s32.totalorder %s529, 15
        %s531 = scalar_select %p530, %s529, 15
        %s532 = smul.u32 4, %s36
        %v534 = vld [vmem:[%s448] sm:$0xff]
        %v535 = vld [vmem:[%s448 + $0x8] sm:$0xff]
        %v536 = vld [vmem:[%s448 + $0x10] sm:$0xff]
        %v537 = vld [vmem:[%s448 + $0x18] sm:$0xff]
        %v538 = vld [vmem:[%s448 + $0x20] sm:$0xff]
        %v539 = vld [vmem:[%s448 + $0x28] sm:$0xff]
        %v540 = vld [vmem:[%s448 + $0x30] sm:$0xff]
        %v541 = vld [vmem:[%s448 + $0x38] sm:$0xff]
        %v542 = vld [vmem:[%s457] sm:$0xff]
        %v543 = vld [vmem:[%s457 + $0x8] sm:$0xff]
        %v544 = vld [vmem:[%s466] sm:$0xff]
        %v545 = vld [vmem:[%s466 + $0x8] sm:$0xff]
        %v546 = vpack.c.bf16 %v535, %v534
        %v547 = vpack.c.bf16 %v537, %v536
        %v548 = vpack.c.bf16 %v539, %v538
        %v549 = vpack.c.bf16 %v541, %v540
        %v550 = vpack.c.bf16 %v543, %v542
        %v551 = vpack.c.bf16 %v545, %v544
        %v552 = vld [vmem:[#allocation9] sm:$0xf]
        %v553 = vld [vmem:[#allocation9 + $0x4] sm:$0xf]
        %v554 = vld [vmem:[#allocation9 + $0x8] sm:$0xf]
        %v555 = vld [vmem:[#allocation9 + $0xc] sm:$0xf]
        %v556 = vld [vmem:[#allocation9 + $0x10] sm:$0xf]
        %v557 = vld [vmem:[#allocation9 + $0x14] sm:$0xf]
        %v558 = vld [vmem:[#allocation9 + $0x18] sm:$0xf]
        %v559 = vld [vmem:[#allocation9 + $0x1c] sm:$0xf]
        %v560 = vld [vmem:[#allocation9 + $0x20] sm:$0xf]
        %v561 = vld [vmem:[#allocation9 + $0x24] sm:$0xf]
        %v562 = vld [vmem:[#allocation9 + $0x28] sm:$0xf]
        %v563 = vld [vmem:[#allocation9 + $0x2c] sm:$0xf]
        %v564 = vld [vmem:[#allocation9 + $0x30] sm:$0xf]
        %v565 = vld [vmem:[#allocation9 + $0x34] sm:$0xf]
        %v566 = vld [vmem:[#allocation9 + $0x38] sm:$0xf]
        %v567 = vld [vmem:[#allocation9 + $0x3c] sm:$0xf]
        %v568 = vld [vmem:[%s4] sm:$0x1]
        %v570 = vlaneseq
        %v571 = vshrl.u32 %v570, 7
        %v572 = vsub.s32 0, %v571
        %v573 = vrot.slane %v568, %v572
        %v591 = vunpack.c.l.b16 %v552
        %v592 = vunpack.c.l.b16 %v553
        %v593 = vunpack.c.l.b16 %v554
        %v594 = vunpack.c.l.b16 %v555
        %v595 = vunpack.c.l.b16 %v556
        %v596 = vunpack.c.l.b16 %v557
        %v597 = vunpack.c.l.b16 %v558
        %v598 = vunpack.c.l.b16 %v559
        %v599 = vunpack.c.l.b16 %v560
        %v600 = vunpack.c.l.b16 %v561
        %v601 = vunpack.c.l.b16 %v562
        %v602 = vunpack.c.l.b16 %v563
        %v603 = vunpack.c.l.b16 %v564
        %v604 = vunpack.c.l.b16 %v565
        %v605 = vunpack.c.l.b16 %v566
        %v606 = vunpack.c.l.b16 %v567
        %v607 = vpack.c.b16 %v592, %v591
        %v608 = vpack.c.b16 %v594, %v593
        %v609 = vpack.c.b16 %v596, %v595
        %v610 = vpack.c.b16 %v598, %v597
        %v611 = vpack.c.b16 %v600, %v599
        %v612 = vpack.c.b16 %v602, %v601
        %v613 = vpack.c.b16 %v604, %v603
        %v614 = vpack.c.b16 %v606, %v605
        %623 = vmatprep.subr.bf16.mxu0 0
        %624 = vmatpush1.bf16.msra.mxu0 %v607
        %625 = vmatprep.subr.bf16.mxu0 0
        %626 = vmatpush1.bf16.msra.mxu0 %v608
        %627 = vmatprep.subr.bf16.mxu0 0
        %628 = vmatpush1.bf16.msra.mxu0 %v609
        %629 = vmatprep.subr.bf16.mxu0 0
        %630 = vmatpush1.bf16.msra.mxu0 %v610
        %631 = vmatprep.subr.bf16.mxu0 0
        %632 = vmatpush1.bf16.msra.mxu0 %v611
        %633 = vmatprep.subr.bf16.mxu0 0
        %634 = vmatpush1.bf16.msra.mxu0 %v612
        %635 = vmatprep.subr.bf16.mxu0 0
        %636 = vmatpush1.bf16.msra.mxu0 %v613
        %637 = vmatprep.subr.bf16.mxu0 0
        %638 = vmatpush1.bf16.msra.mxu0 %v614
        %639 = vmatprep.subr.bf16.mxu0 0
        %640 = vmatpush1.bf16.msra.mxu0 0
        %641 = vmatprep.subr.bf16.mxu0 0
        %642 = vmatpush1.bf16.msra.mxu0 0
        %643 = vmatprep.subr.bf16.mxu0 0
        %644 = vmatpush1.bf16.msra.mxu0 0
        %645 = vmatprep.subr.bf16.mxu0 0
        %646 = vmatpush1.bf16.msra.mxu0 0
        %647 = vmatprep.subr.bf16.mxu0 0
        %648 = vmatpush1.bf16.msra.mxu0 0
        %649 = vmatprep.subr.bf16.mxu0 0
        %650 = vmatpush1.bf16.msra.mxu0 0
        %651 = vmatprep.subr.bf16.mxu0 0
        %652 = vmatpush1.bf16.msra.mxu0 0
        %653 = vmatprep.subr.bf16.mxu0 0
        %654 = vmatpush1.bf16.msra.mxu0 0
        %655 = vmatprep.mubr.bf16.mxu0 0
        %656 = vmatmul.mubr.bf16.gmra.mrb[0].mxu0 %v546
        %v657 = vpop.f32.mrb[0].mxu0
        %v658 = vadd.f32 %v573, %v657
        %v659 = vpop.f32.mrb[0].mxu0
        %v660 = vpop.f32.mrb[0].mxu0
        %v661 = vadd.f32 %v573, %v660
        %v662 = vpop.f32.mrb[0].mxu0
        %663 = vmatprep.mubr.bf16.mxu0 0
        %664 = vmatmul.mubr.bf16.gmra.mrb[0].mxu0 %v547
        %v665 = vpop.f32.mrb[0].mxu0
        %v666 = vadd.f32 %v573, %v665
        %v667 = vpop.f32.mrb[0].mxu0
        %v668 = vpop.f32.mrb[0].mxu0
        %v669 = vadd.f32 %v573, %v668
        %v670 = vpop.f32.mrb[0].mxu0
        %671 = vmatprep.mubr.bf16.mxu0 0
        %672 = vmatmul.mubr.bf16.gmra.mrb[0].mxu0 %v548
        %v673 = vpop.f32.mrb[0].mxu0
        %v674 = vadd.f32 %v573, %v673
        %v675 = vpop.f32.mrb[0].mxu0
        %v676 = vpop.f32.mrb[0].mxu0
        %v677 = vadd.f32 %v573, %v676
        %v678 = vpop.f32.mrb[0].mxu0
        %679 = vmatprep.mubr.bf16.mxu0 0
        %680 = vmatmul.mubr.bf16.gmra.mrb[0].mxu0 %v549
        %v681 = vpop.f32.mrb[0].mxu0
        %v682 = vadd.f32 %v573, %v681
        %v683 = vpop.f32.mrb[0].mxu0
        %v684 = vpop.f32.mrb[0].mxu0
        %v685 = vadd.f32 %v573, %v684
        %v686 = vpop.f32.mrb[0].mxu0
        %687 = vmatprep.mubr.bf16.mxu0 0
        %688 = vmatmul.mubr.bf16.gmra.mrb[0].mxu0 %v550
        %v689 = vpop.f32.mrb[0].mxu0
        %v690 = vadd.f32 %v573, %v689
        %v691 = vpop.f32.mrb[0].mxu0
        %v692 = vpop.f32.mrb[0].mxu0
        %v693 = vadd.f32 %v573, %v692
        %v694 = vpop.f32.mrb[0].mxu0
        %695 = vmatprep.mubr.bf16.mxu0 0
        %696 = vmatmul.mubr.bf16.gmra.mrb[0].mxu0 %v551
        %v697 = vpop.f32.mrb[0].mxu0
        %v698 = vadd.f32 %v573, %v697
        %v699 = vpop.f32.mrb[0].mxu0
        %v700 = vpop.f32.mrb[0].mxu0
        %v701 = vadd.f32 %v573, %v700
        %v702 = vpop.f32.mrb[0].mxu0
        %703 = vdwg.mxu0
        %v704 = vmax.f32 %v658, 0.0
        %v705 = vmax.f32 %v661, 0.0
        %v706 = vmax.f32 %v666, 0.0
        %v707 = vmax.f32 %v669, 0.0
        %v708 = vmax.f32 %v674, 0.0
        %v709 = vmax.f32 %v677, 0.0
        %v710 = vmax.f32 %v682, 0.0
        %v711 = vmax.f32 %v685, 0.0
        %v712 = vmax.f32 %v690, 0.0
        %v713 = vmax.f32 %v693, 0.0
        %v714 = vmax.f32 %v698, 0.0
        %v715 = vmax.f32 %v701, 0.0
        %v716 = vpack.c.bf16 %v705, %v704
        %v717 = vpack.c.bf16 %v707, %v706
        %v718 = vpack.c.bf16 %v709, %v708
        %v719 = vpack.c.bf16 %v711, %v710
        %v720 = vpack.c.bf16 %v713, %v712
        %v721 = vpack.c.bf16 %v715, %v714
        %p722 = scmp.gt.s32.totalorder %s36, 0
        %s723 = scalar_select %p722, 1, 0
        %v724 = vstv %s723
        %vm725 = vcmp.eq.s32.totalorder %v724, 1
        %v726 = vsel %vm725, %v720, 0
        %p727 = scmp.lt.s32.totalorder %s36, 3
        %s728 = scalar_select %p727, 1, 0
        %v729 = vstv %s728
        %vm730 = vcmp.eq.s32.totalorder %v729, 1
        %v731 = vsel %vm730, %v721, 0
        %v733 = vshrl.u32 %v726, 16
        %v735 = vrot.slane %v733, 7
        %v736 = vshll.u32 %v726, 16
        %v738 = vor.u32 %v735, %v736
        %v740 = vshrl.u32 %v716, 16
        %v742 = vrot.slane %v740, 7
        %v743 = vshll.u32 %v716, 16
        %v745 = vor.u32 %v742, %v743
        %v747 = vshrl.u32 %v717, 16
        %v749 = vrot.slane %v747, 7
        %v750 = vshll.u32 %v717, 16
        %v752 = vor.u32 %v749, %v750
        %v754 = vshrl.u32 %v718, 16
        %v756 = vrot.slane %v754, 7
        %v757 = vshll.u32 %v718, 16
        %v759 = vor.u32 %v756, %v757
        %v761 = vshrl.u32 %v719, 16
        %v763 = vrot.slane %v761, 7
        %v764 = vshll.u32 %v719, 16
        %v766 = vor.u32 %v763, %v764
        %v768 = vshrl.u32 %v731, 16
        %v770 = vrot.slane %v768, 7
        %v771 = vshll.u32 %v731, 16
        %v773 = vor.u32 %v770, %v771
        %vm786 = vcmask 1040384
        %vm787 = vsmask.f32 256
        %vm788 = vmand %vm786, %vm787
        %v789 = vsel %vm788, 0, %v738
        %v790 = vsel %vm788, 0, %v745
        %v791 = vsel %vm788, 0, %v752
        %v792 = vsel %vm788, 0, %v759
        %v793 = vsel %vm788, 0, %v766
        %v794 = vsel %vm788, 0, %v773
        %v795 = vsel %vm788, %v735, 0
        %v796 = vsel %vm788, %v742, 0
        %v797 = vsel %vm788, %v749, 0
        %v798 = vsel %vm788, %v756, 0
        %v799 = vsel %vm788, %v763, 0
        %v800 = vsel %vm788, %v770, 0
        %v813 = vunpack.c.l.b16 %v789
        %v814 = vunpack.c.h.b16 %v789
        %v815 = vunpack.c.l.b16 %v795
        %v816 = vunpack.c.l.b16 %v790
        %v817 = vunpack.c.h.b16 %v790
        %v818 = vunpack.c.l.b16 %v796
        %v819 = vunpack.c.l.b16 %v791
        %v820 = vunpack.c.h.b16 %v791
        %v821 = vunpack.c.l.b16 %v797
        %v822 = vunpack.c.l.b16 %v792
        %v823 = vunpack.c.h.b16 %v792
        %v824 = vunpack.c.l.b16 %v798
        %v825 = vunpack.c.l.b16 %v793
        %v826 = vunpack.c.h.b16 %v793
        %v827 = vunpack.c.l.b16 %v799
        %v828 = vunpack.c.l.b16 %v794
        %v829 = vunpack.c.h.b16 %v794
        %v830 = vunpack.c.l.b16 %v800
        %v831 = vpack.c.b16 %v813, %v813
        %v832 = vpack.c.b16 %v814, %v814
        %v833 = vpack.c.b16 %v815, %v815
        %v834 = vpack.c.b16 %v816, %v816
        %v835 = vpack.c.b16 %v817, %v817
        %v836 = vpack.c.b16 %v818, %v818
        %v837 = vpack.c.b16 %v819, %v819
        %v838 = vpack.c.b16 %v820, %v820
        %v839 = vpack.c.b16 %v821, %v821
        %v840 = vpack.c.b16 %v822, %v822
        %v841 = vpack.c.b16 %v823, %v823
        %v842 = vpack.c.b16 %v824, %v824
        %v843 = vpack.c.b16 %v825, %v825
        %v844 = vpack.c.b16 %v826, %v826
        %v845 = vpack.c.b16 %v827, %v827
        %v846 = vpack.c.b16 %v828, %v828
        %v847 = vpack.c.b16 %v829, %v829
        %v848 = vpack.c.b16 %v830, %v830
        %867 = vst [vmem:[#allocation2] sm:$0xf] %v831
        %868 = vst [vmem:[#allocation2 + $0x4] sm:$0xf] %v832
        %869 = vst [vmem:[#allocation2 + $0x8] sm:$0x1] %v833
        %870 = vst [vmem:[#allocation2 + $0xc] sm:$0xf] %v834
        %871 = vst [vmem:[#allocation2 + $0x10] sm:$0xf] %v835
        %872 = vst [vmem:[#allocation2 + $0x14] sm:$0x1] %v836
        %873 = vst [vmem:[#allocation2 + $0x18] sm:$0xf] %v837
        %874 = vst [vmem:[#allocation2 + $0x1c] sm:$0xf] %v838
        %875 = vst [vmem:[#allocation2 + $0x20] sm:$0x1] %v839
        %876 = vst [vmem:[#allocation2 + $0x24] sm:$0xf] %v840
        %877 = vst [vmem:[#allocation2 + $0x28] sm:$0xf] %v841
        %878 = vst [vmem:[#allocation2 + $0x2c] sm:$0x1] %v842
        %879 = vst [vmem:[#allocation2 + $0x30] sm:$0xf] %v843
        %880 = vst [vmem:[#allocation2 + $0x34] sm:$0xf] %v844
        %881 = vst [vmem:[#allocation2 + $0x38] sm:$0x1] %v845
        %882 = vst [vmem:[#allocation2 + $0x3c] sm:$0xf] %v846
        %883 = vst [vmem:[#allocation2 + $0x40] sm:$0xf] %v847
        %884 = vst [vmem:[#allocation2 + $0x44] sm:$0x1] %v848
        %v885 = vld [vmem:[#allocation2] sm:$0xf]
        %v886 = vld [vmem:[#allocation2 + $0x4] sm:$0xf]
        %v887 = vld [vmem:[#allocation2 + $0xc] sm:$0xf]
        %v888 = vld [vmem:[#allocation2 + $0x10] sm:$0xf]
        %v889 = vld [vmem:[#allocation2 + $0x18] sm:$0xf]
        %v890 = vld [vmem:[#allocation2 + $0x1c] sm:$0xf]
        %v891 = vld [vmem:[#allocation2 + $0x24] sm:$0xf]
        %v892 = vld [vmem:[#allocation2 + $0x28] sm:$0xf]
        %v893 = vld [vmem:[#allocation11] sm:$0xf]
        %v894 = vld [vmem:[#allocation11 + $0x4] sm:$0xf]
        %v895 = vld [vmem:[#allocation11 + $0x8] sm:$0xf]
        %v896 = vld [vmem:[#allocation11 + $0xc] sm:$0xf]
        %v897 = vld [vmem:[#allocation11 + $0x10] sm:$0xf]
        %v898 = vld [vmem:[#allocation11 + $0x14] sm:$0xf]
        %v899 = vld [vmem:[#allocation11 + $0x18] sm:$0xf]
        %v900 = vld [vmem:[#allocation11 + $0x1c] sm:$0xf]
        %v901 = vld [vmem:[#allocation11 + $0x20] sm:$0xf]
        %v902 = vld [vmem:[#allocation11 + $0x24] sm:$0xf]
        %v903 = vld [vmem:[#allocation11 + $0x28] sm:$0xf]
        %v904 = vld [vmem:[#allocation11 + $0x2c] sm:$0xf]
        %v905 = vld [vmem:[#allocation11 + $0x30] sm:$0xf]
        %v906 = vld [vmem:[#allocation11 + $0x34] sm:$0xf]
        %v907 = vld [vmem:[#allocation11 + $0x38] sm:$0xf]
        %v908 = vld [vmem:[#allocation11 + $0x3c] sm:$0xf]
        %v909 = vld [vmem:[#allocation2 + $0x8] sm:$0x1]
        %v910 = vld [vmem:[#allocation2 + $0x14] sm:$0x1]
        %v911 = vld [vmem:[#allocation2 + $0x20] sm:$0x1]
        %v912 = vld [vmem:[#allocation2 + $0x2c] sm:$0x1]
        %vm913 = vsmask.f32 3328
        %vm914 = vsmask.f32 7440
        %vm915 = vmor %vm913, %vm914
        %v917 = vshrl.u32 %v885, 16
        %v919 = vrot.slane %v917, 4
        %v920 = vshll.u32 %v885, 16
        %v922 = vrot.slane %v920, 5
        %v923 = vor.u32 %v919, %v922
        %v924 = vrot.slane %v923, 4
        %v926 = vshll.u32 %v886, 16
        %v928 = vrot.slane %v926, 5
        %v929 = vsel %vm915, %v924, %v928
        %v930 = vshrl.u32 %v886, 16
        %v932 = vrot.slane %v930, 4
        %v933 = vor.u32 %v932, %v928
        %v934 = vrot.slane %v933, 4
        %v936 = vshll.u32 %v909, 16
        %v938 = vrot.slane %v936, 5
        %v939 = vsel %vm915, %v934, %v938
        %v941 = vshrl.u32 %v887, 16
        %v943 = vrot.slane %v941, 4
        %v944 = vshll.u32 %v887, 16
        %v946 = vrot.slane %v944, 5
        %v947 = vor.u32 %v943, %v946
        %v948 = vrot.slane %v947, 4
        %v950 = vshll.u32 %v888, 16
        %v952 = vrot.slane %v950, 5
        %v953 = vsel %vm915, %v948, %v952
        %v954 = vshrl.u32 %v888, 16
        %v956 = vrot.slane %v954, 4
        %v957 = vor.u32 %v956, %v952
        %v958 = vrot.slane %v957, 4
        %v960 = vshll.u32 %v910, 16
        %v962 = vrot.slane %v960, 5
        %v963 = vsel %vm915, %v958, %v962
        %v965 = vshrl.u32 %v889, 16
        %v967 = vrot.slane %v965, 4
        %v968 = vshll.u32 %v889, 16
        %v970 = vrot.slane %v968, 5
        %v971 = vor.u32 %v967, %v970
        %v972 = vrot.slane %v971, 4
        %v974 = vshll.u32 %v890, 16
        %v976 = vrot.slane %v974, 5
        %v977 = vsel %vm915, %v972, %v976
        %v978 = vshrl.u32 %v890, 16
        %v980 = vrot.slane %v978, 4
        %v981 = vor.u32 %v980, %v976
        %v982 = vrot.slane %v981, 4
        %v984 = vshll.u32 %v911, 16
        %v986 = vrot.slane %v984, 5
        %v987 = vsel %vm915, %v982, %v986
        %v989 = vshrl.u32 %v891, 16
        %v991 = vrot.slane %v989, 4
        %v992 = vshll.u32 %v891, 16
        %v994 = vrot.slane %v992, 5
        %v995 = vor.u32 %v991, %v994
        %v996 = vrot.slane %v995, 4
        %v998 = vshll.u32 %v892, 16
        %v1000 = vrot.slane %v998, 5
        %v1001 = vsel %vm915, %v996, %v1000
        %v1002 = vshrl.u32 %v892, 16
        %v1004 = vrot.slane %v1002, 4
        %v1005 = vor.u32 %v1004, %v1000
        %v1006 = vrot.slane %v1005, 4
        %v1008 = vshll.u32 %v912, 16
        %v1010 = vrot.slane %v1008, 5
        %v1011 = vsel %vm915, %v1006, %v1010
        %s1012 = scalar_lea.vmem [#allocation11], 64
        %v1013 = vld [vmem:[%s1012] sm:$0xf]
        %v1014 = vld [vmem:[%s1012 + $0x4] sm:$0xf]
        %v1015 = vld [vmem:[%s1012 + $0x8] sm:$0xf]
        %v1016 = vld [vmem:[%s1012 + $0xc] sm:$0xf]
        %v1017 = vld [vmem:[%s1012 + $0x10] sm:$0xf]
        %v1018 = vld [vmem:[%s1012 + $0x14] sm:$0xf]
        %v1019 = vld [vmem:[%s1012 + $0x18] sm:$0xf]
        %v1020 = vld [vmem:[%s1012 + $0x1c] sm:$0xf]
        %v1021 = vld [vmem:[%s1012 + $0x20] sm:$0xf]
        %v1022 = vld [vmem:[%s1012 + $0x24] sm:$0xf]
        %v1023 = vld [vmem:[%s1012 + $0x28] sm:$0xf]
        %v1024 = vld [vmem:[%s1012 + $0x2c] sm:$0xf]
        %v1025 = vld [vmem:[%s1012 + $0x30] sm:$0xf]
        %v1026 = vld [vmem:[%s1012 + $0x34] sm:$0xf]
        %v1027 = vld [vmem:[%s1012 + $0x38] sm:$0xf]
        %v1028 = vld [vmem:[%s1012 + $0x3c] sm:$0xf]
        %v1029 = vunpack.c.l.b16 %v929
        %v1030 = vunpack.c.l.b16 %v939
        %v1031 = vunpack.c.l.b16 %v953
        %v1032 = vunpack.c.l.b16 %v963
        %v1033 = vunpack.c.l.b16 %v977
        %v1034 = vunpack.c.l.b16 %v987
        %v1035 = vunpack.c.l.b16 %v1001
        %v1036 = vunpack.c.l.b16 %v1011
        %v1037 = vpack.c.b16 %v1030, %v1029
        %v1038 = vpack.c.b16 %v1032, %v1031
        %v1039 = vpack.c.b16 %v1034, %v1033
        %v1040 = vpack.c.b16 %v1036, %v1035
        %v1061 = vunpack.c.l.b16 %v1013
        %v1062 = vunpack.c.l.b16 %v1014
        %v1063 = vunpack.c.l.b16 %v1015
        %v1064 = vunpack.c.l.b16 %v1016
        %v1065 = vunpack.c.l.b16 %v1017
        %v1066 = vunpack.c.l.b16 %v1018
        %v1067 = vunpack.c.l.b16 %v1019
        %v1068 = vunpack.c.l.b16 %v1020
        %v1069 = vunpack.c.l.b16 %v1021
        %v1070 = vunpack.c.l.b16 %v1022
        %v1071 = vunpack.c.l.b16 %v1023
        %v1072 = vunpack.c.l.b16 %v1024
        %v1073 = vunpack.c.l.b16 %v1025
        %v1074 = vunpack.c.l.b16 %v1026
        %v1075 = vunpack.c.l.b16 %v1027
        %v1076 = vunpack.c.l.b16 %v1028
        %v1077 = vpack.c.b16 %v1062, %v1061
        %v1078 = vpack.c.b16 %v1064, %v1063
        %v1079 = vpack.c.b16 %v1066, %v1065
        %v1080 = vpack.c.b16 %v1068, %v1067
        %v1081 = vpack.c.b16 %v1070, %v1069
        %v1082 = vpack.c.b16 %v1072, %v1071
        %v1083 = vpack.c.b16 %v1074, %v1073
        %v1084 = vpack.c.b16 %v1076, %v1075
        %1093 = vmatprep.subr.bf16.mxu0 0
        %1094 = vmatpush1.bf16.msra.mxu0 %v1077
        %1095 = vmatprep.subr.bf16.mxu0 0
        %1096 = vmatpush1.bf16.msra.mxu0 %v1078
        %1097 = vmatprep.subr.bf16.mxu0 0
        %1098 = vmatpush1.bf16.msra.mxu0 %v1079
        %1099 = vmatprep.subr.bf16.mxu0 0
        %1100 = vmatpush1.bf16.msra.mxu0 %v1080
        %1101 = vmatprep.subr.bf16.mxu0 0
        %1102 = vmatpush1.bf16.msra.mxu0 %v1081
        %1103 = vmatprep.subr.bf16.mxu0 0
        %1104 = vmatpush1.bf16.msra.mxu0 %v1082
        %1105 = vmatprep.subr.bf16.mxu0 0
        %1106 = vmatpush1.bf16.msra.mxu0 %v1083
        %1107 = vmatprep.subr.bf16.mxu0 0
        %1108 = vmatpush1.bf16.msra.mxu0 %v1084
        %1109 = vmatprep.subr.bf16.mxu0 0
        %1110 = vmatpush1.bf16.msra.mxu0 0
        %1111 = vmatprep.subr.bf16.mxu0 0
        %1112 = vmatpush1.bf16.msra.mxu0 0
        %1113 = vmatprep.subr.bf16.mxu0 0
        %1114 = vmatpush1.bf16.msra.mxu0 0
        %1115 = vmatprep.subr.bf16.mxu0 0
        %1116 = vmatpush1.bf16.msra.mxu0 0
        %1117 = vmatprep.subr.bf16.mxu0 0
        %1118 = vmatpush1.bf16.msra.mxu0 0
        %1119 = vmatprep.subr.bf16.mxu0 0
        %1120 = vmatpush1.bf16.msra.mxu0 0
        %1121 = vmatprep.subr.bf16.mxu0 0
        %1122 = vmatpush1.bf16.msra.mxu0 0
        %1123 = vmatprep.subr.bf16.mxu0 0
        %1124 = vmatpush1.bf16.msra.mxu0 0
        %1125 = vmatprep.mubr.bf16.mxu0 0
        %1126 = vmatmul.mubr.bf16.gmra.mrb[0].mxu0 %v1037
        %v1127 = vpop.f32.mrb[0].mxu0
        %v1128 = vadd.f32 0.0, %v1127
        %v1129 = vpop.f32.mrb[0].mxu0
        %v1130 = vpop.f32.mrb[0].mxu0
        %v1131 = vadd.f32 0.0, %v1130
        %v1132 = vpop.f32.mrb[0].mxu0
        %1133 = vmatprep.mubr.bf16.mxu0 0
        %1134 = vmatmul.mubr.bf16.gmra.mrb[0].mxu0 %v1038
        %v1135 = vpop.f32.mrb[0].mxu0
        %v1136 = vadd.f32 0.0, %v1135
        %v1137 = vpop.f32.mrb[0].mxu0
        %v1138 = vpop.f32.mrb[0].mxu0
        %v1139 = vadd.f32 0.0, %v1138
        %v1140 = vpop.f32.mrb[0].mxu0
        %1141 = vmatprep.mubr.bf16.mxu0 0
        %1142 = vmatmul.mubr.bf16.gmra.mrb[0].mxu0 %v1039
        %v1143 = vpop.f32.mrb[0].mxu0
        %v1144 = vadd.f32 0.0, %v1143
        %v1145 = vpop.f32.mrb[0].mxu0
        %v1146 = vpop.f32.mrb[0].mxu0
        %v1147 = vadd.f32 0.0, %v1146
        %v1148 = vpop.f32.mrb[0].mxu0
        %1149 = vmatprep.mubr.bf16.mxu0 0
        %1150 = vmatmul.mubr.bf16.gmra.mrb[0].mxu0 %v1040
        %v1151 = vpop.f32.mrb[0].mxu0
        %v1152 = vadd.f32 0.0, %v1151
        %v1153 = vpop.f32.mrb[0].mxu0
        %v1154 = vpop.f32.mrb[0].mxu0
        %v1155 = vadd.f32 0.0, %v1154
        %v1156 = vpop.f32.mrb[0].mxu0
        %1157 = vdwg.mxu0
        %v1166 = vunpack.c.l.b16 %v885
        %v1167 = vunpack.c.l.b16 %v886
        %v1168 = vunpack.c.l.b16 %v887
        %v1169 = vunpack.c.l.b16 %v888
        %v1170 = vunpack.c.l.b16 %v889
        %v1171 = vunpack.c.l.b16 %v890
        %v1172 = vunpack.c.l.b16 %v891
        %v1173 = vunpack.c.l.b16 %v892
        %v1174 = vpack.c.b16 %v1167, %v1166
        %v1175 = vpack.c.b16 %v1169, %v1168
        %v1176 = vpack.c.b16 %v1171, %v1170
        %v1177 = vpack.c.b16 %v1173, %v1172
        %v1198 = vunpack.c.l.b16 %v893
        %v1199 = vunpack.c.l.b16 %v894
        %v1200 = vunpack.c.l.b16 %v895
        %v1201 = vunpack.c.l.b16 %v896
        %v1202 = vunpack.c.l.b16 %v897
        %v1203 = vunpack.c.l.b16 %v898
        %v1204 = vunpack.c.l.b16 %v899
        %v1205 = vunpack.c.l.b16 %v900
        %v1206 = vunpack.c.l.b16 %v901
        %v1207 = vunpack.c.l.b16 %v902
        %v1208 = vunpack.c.l.b16 %v903
        %v1209 = vunpack.c.l.b16 %v904
        %v1210 = vunpack.c.l.b16 %v905
        %v1211 = vunpack.c.l.b16 %v906
        %v1212 = vunpack.c.l.b16 %v907
        %v1213 = vunpack.c.l.b16 %v908
        %v1214 = vpack.c.b16 %v1199, %v1198
        %v1215 = vpack.c.b16 %v1201, %v1200
        %v1216 = vpack.c.b16 %v1203, %v1202
        %v1217 = vpack.c.b16 %v1205, %v1204
        %v1218 = vpack.c.b16 %v1207, %v1206
        %v1219 = vpack.c.b16 %v1209, %v1208
        %v1220 = vpack.c.b16 %v1211, %v1210
        %v1221 = vpack.c.b16 %v1213, %v1212
        %1230 = vmatprep.subr.bf16.mxu0 0
        %1231 = vmatpush1.bf16.msra.mxu0 %v1214
        %1232 = vmatprep.subr.bf16.mxu0 0
        %1233 = vmatpush1.bf16.msra.mxu0 %v1215
        %1234 = vmatprep.subr.bf16.mxu0 0
        %1235 = vmatpush1.bf16.msra.mxu0 %v1216
        %1236 = vmatprep.subr.bf16.mxu0 0
        %1237 = vmatpush1.bf16.msra.mxu0 %v1217
        %1238 = vmatprep.subr.bf16.mxu0 0
        %1239 = vmatpush1.bf16.msra.mxu0 %v1218
        %1240 = vmatprep.subr.bf16.mxu0 0
        %1241 = vmatpush1.bf16.msra.mxu0 %v1219
        %1242 = vmatprep.subr.bf16.mxu0 0
        %1243 = vmatpush1.bf16.msra.mxu0 %v1220
        %1244 = vmatprep.subr.bf16.mxu0 0
        %1245 = vmatpush1.bf16.msra.mxu0 %v1221
        %1246 = vmatprep.subr.bf16.mxu0 0
        %1247 = vmatpush1.bf16.msra.mxu0 0
        %1248 = vmatprep.subr.bf16.mxu0 0
        %1249 = vmatpush1.bf16.msra.mxu0 0
        %1250 = vmatprep.subr.bf16.mxu0 0
        %1251 = vmatpush1.bf16.msra.mxu0 0
        %1252 = vmatprep.subr.bf16.mxu0 0
        %1253 = vmatpush1.bf16.msra.mxu0 0
        %1254 = vmatprep.subr.bf16.mxu0 0
        %1255 = vmatpush1.bf16.msra.mxu0 0
        %1256 = vmatprep.subr.bf16.mxu0 0
        %1257 = vmatpush1.bf16.msra.mxu0 0
        %1258 = vmatprep.subr.bf16.mxu0 0
        %1259 = vmatpush1.bf16.msra.mxu0 0
        %1260 = vmatprep.subr.bf16.mxu0 0
        %1261 = vmatpush1.bf16.msra.mxu0 0
        %1262 = vmatprep.mubr.bf16.mxu0 0
        %1263 = vmatmul.mubr.bf16.gmra.mrb[0].mxu0 %v1174
        %v1264 = vpop.f32.mrb[0].mxu0
        %v1265 = vadd.f32 %v1128, %v1264
        %v1266 = vpop.f32.mrb[0].mxu0
        %v1267 = vpop.f32.mrb[0].mxu0
        %v1268 = vadd.f32 %v1131, %v1267
        %v1269 = vpop.f32.mrb[0].mxu0
        %1270 = vmatprep.mubr.bf16.mxu0 0
        %1271 = vmatmul.mubr.bf16.gmra.mrb[0].mxu0 %v1175
        %v1272 = vpop.f32.mrb[0].mxu0
        %v1273 = vadd.f32 %v1136, %v1272
        %v1274 = vpop.f32.mrb[0].mxu0
        %v1275 = vpop.f32.mrb[0].mxu0
        %v1276 = vadd.f32 %v1139, %v1275
        %v1277 = vpop.f32.mrb[0].mxu0
        %1278 = vmatprep.mubr.bf16.mxu0 0
        %1279 = vmatmul.mubr.bf16.gmra.mrb[0].mxu0 %v1176
        %v1280 = vpop.f32.mrb[0].mxu0
        %v1281 = vadd.f32 %v1144, %v1280
        %v1282 = vpop.f32.mrb[0].mxu0
        %v1283 = vpop.f32.mrb[0].mxu0
        %v1284 = vadd.f32 %v1147, %v1283
        %v1285 = vpop.f32.mrb[0].mxu0
        %1286 = vmatprep.mubr.bf16.mxu0 0
        %1287 = vmatmul.mubr.bf16.gmra.mrb[0].mxu0 %v1177
        %v1288 = vpop.f32.mrb[0].mxu0
        %v1289 = vadd.f32 %v1152, %v1288
        %v1290 = vpop.f32.mrb[0].mxu0
        %v1291 = vpop.f32.mrb[0].mxu0
        %v1292 = vadd.f32 %v1155, %v1291
        %v1293 = vpop.f32.mrb[0].mxu0
        %1294 = vdwg.mxu0
        %v1295 = vld [vmem:[#allocation2] sm:$0xe]
        %v1296 = vld [vmem:[#allocation2 + $0xc] sm:$0xe]
        %v1297 = vld [vmem:[#allocation2 + $0x18] sm:$0xe]
        %v1298 = vld [vmem:[#allocation2 + $0x24] sm:$0xe]
        %vm1307 = vcmask 1042432
        %vm1308 = vcmask 1046532
        %vm1309 = vmor %vm1307, %vm1308
        %v1310 = vrot.slane %v1295, 5
        %v1311 = vrot.slane %v1310, 4
        %v1312 = vrot.slane %v886, 5
        %v1313 = vsel %vm1309, %v1311, %v1312
        %v1314 = vrot.slane %v1312, 4
        %v1315 = vrot.slane %v909, 5
        %v1316 = vsel %vm1309, %v1314, %v1315
        %v1317 = vrot.slane %v1296, 5
        %v1318 = vrot.slane %v1317, 4
        %v1319 = vrot.slane %v888, 5
        %v1320 = vsel %vm1309, %v1318, %v1319
        %v1321 = vrot.slane %v1319, 4
        %v1322 = vrot.slane %v910, 5
        %v1323 = vsel %vm1309, %v1321, %v1322
        %v1324 = vrot.slane %v1297, 5
        %v1325 = vrot.slane %v1324, 4
        %v1326 = vrot.slane %v890, 5
        %v1327 = vsel %vm1309, %v1325, %v1326
        %v1328 = vrot.slane %v1326, 4
        %v1329 = vrot.slane %v911, 5
        %v1330 = vsel %vm1309, %v1328, %v1329
        %v1331 = vrot.slane %v1298, 5
        %v1332 = vrot.slane %v1331, 4
        %v1333 = vrot.slane %v892, 5
        %v1334 = vsel %vm1309, %v1332, %v1333
        %v1335 = vrot.slane %v1333, 4
        %v1336 = vrot.slane %v912, 5
        %v1337 = vsel %vm1309, %v1335, %v1336
        %s1338 = scalar_lea.vmem [#allocation11], 128
        %v1339 = vld [vmem:[%s1338] sm:$0xf]
        %v1340 = vld [vmem:[%s1338 + $0x4] sm:$0xf]
        %v1341 = vld [vmem:[%s1338 + $0x8] sm:$0xf]
        %v1342 = vld [vmem:[%s1338 + $0xc] sm:$0xf]
        %v1343 = vld [vmem:[%s1338 + $0x10] sm:$0xf]
        %v1344 = vld [vmem:[%s1338 + $0x14] sm:$0xf]
        %v1345 = vld [vmem:[%s1338 + $0x18] sm:$0xf]
        %v1346 = vld [vmem:[%s1338 + $0x1c] sm:$0xf]
        %v1347 = vld [vmem:[%s1338 + $0x20] sm:$0xf]
        %v1348 = vld [vmem:[%s1338 + $0x24] sm:$0xf]
        %v1349 = vld [vmem:[%s1338 + $0x28] sm:$0xf]
        %v1350 = vld [vmem:[%s1338 + $0x2c] sm:$0xf]
        %v1351 = vld [vmem:[%s1338 + $0x30] sm:$0xf]
        %v1352 = vld [vmem:[%s1338 + $0x34] sm:$0xf]
        %v1353 = vld [vmem:[%s1338 + $0x38] sm:$0xf]
        %v1354 = vld [vmem:[%s1338 + $0x3c] sm:$0xf]
        %v1355 = vunpack.c.l.b16 %v1313
        %v1356 = vunpack.c.l.b16 %v1316
        %v1357 = vunpack.c.l.b16 %v1320
        %v1358 = vunpack.c.l.b16 %v1323
        %v1359 = vunpack.c.l.b16 %v1327
        %v1360 = vunpack.c.l.b16 %v1330
        %v1361 = vunpack.c.l.b16 %v1334
        %v1362 = vunpack.c.l.b16 %v1337
        %v1363 = vpack.c.b16 %v1356, %v1355
        %v1364 = vpack.c.b16 %v1358, %v1357
        %v1365 = vpack.c.b16 %v1360, %v1359
        %v1366 = vpack.c.b16 %v1362, %v1361
        %v1387 = vunpack.c.l.b16 %v1339
        %v1388 = vunpack.c.l.b16 %v1340
        %v1389 = vunpack.c.l.b16 %v1341
        %v1390 = vunpack.c.l.b16 %v1342
        %v1391 = vunpack.c.l.b16 %v1343
        %v1392 = vunpack.c.l.b16 %v1344
        %v1393 = vunpack.c.l.b16 %v1345
        %v1394 = vunpack.c.l.b16 %v1346
        %v1395 = vunpack.c.l.b16 %v1347
        %v1396 = vunpack.c.l.b16 %v1348
        %v1397 = vunpack.c.l.b16 %v1349
        %v1398 = vunpack.c.l.b16 %v1350
        %v1399 = vunpack.c.l.b16 %v1351
        %v1400 = vunpack.c.l.b16 %v1352
        %v1401 = vunpack.c.l.b16 %v1353
        %v1402 = vunpack.c.l.b16 %v1354
        %v1403 = vpack.c.b16 %v1388, %v1387
        %v1404 = vpack.c.b16 %v1390, %v1389
        %v1405 = vpack.c.b16 %v1392, %v1391
        %v1406 = vpack.c.b16 %v1394, %v1393
        %v1407 = vpack.c.b16 %v1396, %v1395
        %v1408 = vpack.c.b16 %v1398, %v1397
        %v1409 = vpack.c.b16 %v1400, %v1399
        %v1410 = vpack.c.b16 %v1402, %v1401
        %1419 = vmatprep.subr.bf16.mxu0 0
        %1420 = vmatpush1.bf16.msra.mxu0 %v1403
        %1421 = vmatprep.subr.bf16.mxu0 0
        %1422 = vmatpush1.bf16.msra.mxu0 %v1404
        %1423 = vmatprep.subr.bf16.mxu0 0
        %1424 = vmatpush1.bf16.msra.mxu0 %v1405
        %1425 = vmatprep.subr.bf16.mxu0 0
        %1426 = vmatpush1.bf16.msra.mxu0 %v1406
        %1427 = vmatprep.subr.bf16.mxu0 0
        %1428 = vmatpush1.bf16.msra.mxu0 %v1407
        %1429 = vmatprep.subr.bf16.mxu0 0
        %1430 = vmatpush1.bf16.msra.mxu0 %v1408
        %1431 = vmatprep.subr.bf16.mxu0 0
        %1432 = vmatpush1.bf16.msra.mxu0 %v1409
        %1433 = vmatprep.subr.bf16.mxu0 0
        %1434 = vmatpush1.bf16.msra.mxu0 %v1410
        %1435 = vmatprep.subr.bf16.mxu0 0
        %1436 = vmatpush1.bf16.msra.mxu0 0
        %1437 = vmatprep.subr.bf16.mxu0 0
        %1438 = vmatpush1.bf16.msra.mxu0 0
        %1439 = vmatprep.subr.bf16.mxu0 0
        %1440 = vmatpush1.bf16.msra.mxu0 0
        %1441 = vmatprep.subr.bf16.mxu0 0
        %1442 = vmatpush1.bf16.msra.mxu0 0
        %1443 = vmatprep.subr.bf16.mxu0 0
        %1444 = vmatpush1.bf16.msra.mxu0 0
        %1445 = vmatprep.subr.bf16.mxu0 0
        %1446 = vmatpush1.bf16.msra.mxu0 0
        %1447 = vmatprep.subr.bf16.mxu0 0
        %1448 = vmatpush1.bf16.msra.mxu0 0
        %1449 = vmatprep.subr.bf16.mxu0 0
        %1450 = vmatpush1.bf16.msra.mxu0 0
        %1451 = vmatprep.mubr.bf16.mxu0 0
        %1452 = vmatmul.mubr.bf16.gmra.mrb[0].mxu0 %v1363
        %v1453 = vpop.f32.mrb[0].mxu0
        %v1454 = vadd.f32 0.0, %v1453
        %v1455 = vpop.f32.mrb[0].mxu0
        %v1456 = vpop.f32.mrb[0].mxu0
        %v1457 = vadd.f32 0.0, %v1456
        %v1458 = vpop.f32.mrb[0].mxu0
        %1459 = vmatprep.mubr.bf16.mxu0 0
        %1460 = vmatmul.mubr.bf16.gmra.mrb[0].mxu0 %v1364
        %v1461 = vpop.f32.mrb[0].mxu0
        %v1462 = vadd.f32 0.0, %v1461
        %v1463 = vpop.f32.mrb[0].mxu0
        %v1464 = vpop.f32.mrb[0].mxu0
        %v1465 = vadd.f32 0.0, %v1464
        %v1466 = vpop.f32.mrb[0].mxu0
        %1467 = vmatprep.mubr.bf16.mxu0 0
        %1468 = vmatmul.mubr.bf16.gmra.mrb[0].mxu0 %v1365
        %v1469 = vpop.f32.mrb[0].mxu0
        %v1470 = vadd.f32 0.0, %v1469
        %v1471 = vpop.f32.mrb[0].mxu0
        %v1472 = vpop.f32.mrb[0].mxu0
        %v1473 = vadd.f32 0.0, %v1472
        %v1474 = vpop.f32.mrb[0].mxu0
        %1475 = vmatprep.mubr.bf16.mxu0 0
        %1476 = vmatmul.mubr.bf16.gmra.mrb[0].mxu0 %v1366
        %v1477 = vpop.f32.mrb[0].mxu0
        %v1478 = vadd.f32 0.0, %v1477
        %v1479 = vpop.f32.mrb[0].mxu0
        %v1480 = vpop.f32.mrb[0].mxu0
        %v1481 = vadd.f32 0.0, %v1480
        %v1482 = vpop.f32.mrb[0].mxu0
        %1483 = vdwg.mxu0
        %v1484 = vadd.f32 %v1265, %v1454
        %v1485 = vadd.f32 %v1268, %v1457
        %v1486 = vadd.f32 %v1273, %v1462
        %v1487 = vadd.f32 %v1276, %v1465
        %v1488 = vadd.f32 %v1281, %v1470
        %v1489 = vadd.f32 %v1284, %v1473
        %v1490 = vadd.f32 %v1289, %v1478
        %v1491 = vadd.f32 %v1292, %v1481
        %s1492 = scalar_lea.vmem [#allocation2], 12
        %v1493 = vld [vmem:[%s1492] sm:$0xf]
        %v1494 = vld [vmem:[%s1492 + $0x4] sm:$0xf]
        %v1495 = vld [vmem:[%s1492 + $0xc] sm:$0xf]
        %v1496 = vld [vmem:[%s1492 + $0x10] sm:$0xf]
        %v1497 = vld [vmem:[%s1492 + $0x18] sm:$0xf]
        %v1498 = vld [vmem:[%s1492 + $0x1c] sm:$0xf]
        %v1499 = vld [vmem:[%s1492 + $0x24] sm:$0xf]
        %v1500 = vld [vmem:[%s1492 + $0x28] sm:$0xf]
        %s1501 = scalar_lea.vmem [#allocation11], 192
        %v1502 = vld [vmem:[%s1501] sm:$0xf]
        %v1503 = vld [vmem:[%s1501 + $0x4] sm:$0xf]
        %v1504 = vld [vmem:[%s1501 + $0x8] sm:$0xf]
        %v1505 = vld [vmem:[%s1501 + $0xc] sm:$0xf]
        %v1506 = vld [vmem:[%s1501 + $0x10] sm:$0xf]
        %v1507 = vld [vmem:[%s1501 + $0x14] sm:$0xf]
        %v1508 = vld [vmem:[%s1501 + $0x18] sm:$0xf]
        %v1509 = vld [vmem:[%s1501 + $0x1c] sm:$0xf]
        %v1510 = vld [vmem:[%s1501 + $0x20] sm:$0xf]
        %v1511 = vld [vmem:[%s1501 + $0x24] sm:$0xf]
        %v1512 = vld [vmem:[%s1501 + $0x28] sm:$0xf]
        %v1513 = vld [vmem:[%s1501 + $0x2c] sm:$0xf]
        %v1514 = vld [vmem:[%s1501 + $0x30] sm:$0xf]
        %v1515 = vld [vmem:[%s1501 + $0x34] sm:$0xf]
        %v1516 = vld [vmem:[%s1501 + $0x38] sm:$0xf]
        %v1517 = vld [vmem:[%s1501 + $0x3c] sm:$0xf]
        %v1526 = vunpack.c.l.b16 %v1493
        %v1527 = vunpack.c.l.b16 %v1494
        %v1528 = vunpack.c.l.b16 %v1495
        %v1529 = vunpack.c.l.b16 %v1496
        %v1530 = vunpack.c.l.b16 %v1497
        %v1531 = vunpack.c.l.b16 %v1498
        %v1532 = vunpack.c.l.b16 %v1499
        %v1533 = vunpack.c.l.b16 %v1500
        %v1534 = vpack.c.b16 %v1527, %v1526
        %v1535 = vpack.c.b16 %v1529, %v1528
        %v1536 = vpack.c.b16 %v1531, %v1530
        %v1537 = vpack.c.b16 %v1533, %v1532
        %v1558 = vunpack.c.l.b16 %v1502
        %v1559 = vunpack.c.l.b16 %v1503
        %v1560 = vunpack.c.l.b16 %v1504
        %v1561 = vunpack.c.l.b16 %v1505
        %v1562 = vunpack.c.l.b16 %v1506
        %v1563 = vunpack.c.l.b16 %v1507
        %v1564 = vunpack.c.l.b16 %v1508
        %v1565 = vunpack.c.l.b16 %v1509
        %v1566 = vunpack.c.l.b16 %v1510
        %v1567 = vunpack.c.l.b16 %v1511
        %v1568 = vunpack.c.l.b16 %v1512
        %v1569 = vunpack.c.l.b16 %v1513
        %v1570 = vunpack.c.l.b16 %v1514
        %v1571 = vunpack.c.l.b16 %v1515
        %v1572 = vunpack.c.l.b16 %v1516
        %v1573 = vunpack.c.l.b16 %v1517
        %v1574 = vpack.c.b16 %v1559, %v1558
        %v1575 = vpack.c.b16 %v1561, %v1560
        %v1576 = vpack.c.b16 %v1563, %v1562
        %v1577 = vpack.c.b16 %v1565, %v1564
        %v1578 = vpack.c.b16 %v1567, %v1566
        %v1579 = vpack.c.b16 %v1569, %v1568
        %v1580 = vpack.c.b16 %v1571, %v1570
        %v1581 = vpack.c.b16 %v1573, %v1572
        %1590 = vmatprep.subr.bf16.mxu0 0
        %1591 = vmatpush1.bf16.msra.mxu0 %v1574
        %1592 = vmatprep.subr.bf16.mxu0 0
        %1593 = vmatpush1.bf16.msra.mxu0 %v1575
        %1594 = vmatprep.subr.bf16.mxu0 0
        %1595 = vmatpush1.bf16.msra.mxu0 %v1576
        %1596 = vmatprep.subr.bf16.mxu0 0
        %1597 = vmatpush1.bf16.msra.mxu0 %v1577
        %1598 = vmatprep.subr.bf16.mxu0 0
        %1599 = vmatpush1.bf16.msra.mxu0 %v1578
        %1600 = vmatprep.subr.bf16.mxu0 0
        %1601 = vmatpush1.bf16.msra.mxu0 %v1579
        %1602 = vmatprep.subr.bf16.mxu0 0
        %1603 = vmatpush1.bf16.msra.mxu0 %v1580
        %1604 = vmatprep.subr.bf16.mxu0 0
        %1605 = vmatpush1.bf16.msra.mxu0 %v1581
        %1606 = vmatprep.subr.bf16.mxu0 0
        %1607 = vmatpush1.bf16.msra.mxu0 0
        %1608 = vmatprep.subr.bf16.mxu0 0
        %1609 = vmatpush1.bf16.msra.mxu0 0
        %1610 = vmatprep.subr.bf16.mxu0 0
        %1611 = vmatpush1.bf16.msra.mxu0 0
        %1612 = vmatprep.subr.bf16.mxu0 0
        %1613 = vmatpush1.bf16.msra.mxu0 0
        %1614 = vmatprep.subr.bf16.mxu0 0
        %1615 = vmatpush1.bf16.msra.mxu0 0
        %1616 = vmatprep.subr.bf16.mxu0 0
        %1617 = vmatpush1.bf16.msra.mxu0 0
        %1618 = vmatprep.subr.bf16.mxu0 0
        %1619 = vmatpush1.bf16.msra.mxu0 0
        %1620 = vmatprep.subr.bf16.mxu0 0
        %1621 = vmatpush1.bf16.msra.mxu0 0
        %1622 = vmatprep.mubr.bf16.mxu0 0
        %1623 = vmatmul.mubr.bf16.gmra.mrb[0].mxu0 %v1534
        %v1624 = vpop.f32.mrb[0].mxu0
        %v1625 = vadd.f32 0.0, %v1624
        %v1626 = vpop.f32.mrb[0].mxu0
        %v1627 = vpop.f32.mrb[0].mxu0
        %v1628 = vadd.f32 0.0, %v1627
        %v1629 = vpop.f32.mrb[0].mxu0
        %1630 = vmatprep.mubr.bf16.mxu0 0
        %1631 = vmatmul.mubr.bf16.gmra.mrb[0].mxu0 %v1535
        %v1632 = vpop.f32.mrb[0].mxu0
        %v1633 = vadd.f32 0.0, %v1632
        %v1634 = vpop.f32.mrb[0].mxu0
        %v1635 = vpop.f32.mrb[0].mxu0
        %v1636 = vadd.f32 0.0, %v1635
        %v1637 = vpop.f32.mrb[0].mxu0
        %1638 = vmatprep.mubr.bf16.mxu0 0
        %1639 = vmatmul.mubr.bf16.gmra.mrb[0].mxu0 %v1536
        %v1640 = vpop.f32.mrb[0].mxu0
        %v1641 = vadd.f32 0.0, %v1640
        %v1642 = vpop.f32.mrb[0].mxu0
        %v1643 = vpop.f32.mrb[0].mxu0
        %v1644 = vadd.f32 0.0, %v1643
        %v1645 = vpop.f32.mrb[0].mxu0
        %1646 = vmatprep.mubr.bf16.mxu0 0
        %1647 = vmatmul.mubr.bf16.gmra.mrb[0].mxu0 %v1537
        %v1648 = vpop.f32.mrb[0].mxu0
        %v1649 = vadd.f32 0.0, %v1648
        %v1650 = vpop.f32.mrb[0].mxu0
        %v1651 = vpop.f32.mrb[0].mxu0
        %v1652 = vadd.f32 0.0, %v1651
        %v1653 = vpop.f32.mrb[0].mxu0
        %1654 = vdwg.mxu0
        %v1655 = vadd.f32 %v1484, %v1625
        %v1656 = vadd.f32 %v1485, %v1628
        %v1657 = vadd.f32 %v1486, %v1633
        %v1658 = vadd.f32 %v1487, %v1636
        %v1659 = vadd.f32 %v1488, %v1641
        %v1660 = vadd.f32 %v1489, %v1644
        %v1661 = vadd.f32 %v1490, %v1649
        %v1662 = vadd.f32 %v1491, %v1652
        %v1663 = vld [vmem:[%s1492] sm:$0xf]
        %v1664 = vld [vmem:[%s1492 + $0x4] sm:$0xf]
        %v1665 = vld [vmem:[%s1492 + $0x8] sm:$0x1]
        %v1666 = vld [vmem:[%s1492 + $0xc] sm:$0xf]
        %v1667 = vld [vmem:[%s1492 + $0x10] sm:$0xf]
        %v1668 = vld [vmem:[%s1492 + $0x14] sm:$0x1]
        %v1669 = vld [vmem:[%s1492 + $0x18] sm:$0xf]
        %v1670 = vld [vmem:[%s1492 + $0x1c] sm:$0xf]
        %v1671 = vld [vmem:[%s1492 + $0x20] sm:$0x1]
        %v1672 = vld [vmem:[%s1492 + $0x24] sm:$0xf]
        %v1673 = vld [vmem:[%s1492 + $0x28] sm:$0xf]
        %v1674 = vld [vmem:[%s1492 + $0x2c] sm:$0x1]
        %v1676 = vshrl.u32 %v1663, 16
        %v1678 = vrot.slane %v1676, 4
        %v1679 = vshll.u32 %v1663, 16
        %v1681 = vrot.slane %v1679, 5
        %v1682 = vor.u32 %v1678, %v1681
        %v1683 = vrot.slane %v1682, 4
        %v1685 = vshll.u32 %v1664, 16
        %v1687 = vrot.slane %v1685, 5
        %v1688 = vsel %vm915, %v1683, %v1687
        %v1689 = vshrl.u32 %v1664, 16
        %v1691 = vrot.slane %v1689, 4
        %v1692 = vor.u32 %v1691, %v1687
        %v1693 = vrot.slane %v1692, 4
        %v1695 = vshll.u32 %v1665, 16
        %v1697 = vrot.slane %v1695, 5
        %v1698 = vsel %vm915, %v1693, %v1697
        %v1700 = vshrl.u32 %v1666, 16
        %v1702 = vrot.slane %v1700, 4
        %v1703 = vshll.u32 %v1666, 16
        %v1705 = vrot.slane %v1703, 5
        %v1706 = vor.u32 %v1702, %v1705
        %v1707 = vrot.slane %v1706, 4
        %v1709 = vshll.u32 %v1667, 16
        %v1711 = vrot.slane %v1709, 5
        %v1712 = vsel %vm915, %v1707, %v1711
        %v1713 = vshrl.u32 %v1667, 16
        %v1715 = vrot.slane %v1713, 4
        %v1716 = vor.u32 %v1715, %v1711
        %v1717 = vrot.slane %v1716, 4
        %v1719 = vshll.u32 %v1668, 16
        %v1721 = vrot.slane %v1719, 5
        %v1722 = vsel %vm915, %v1717, %v1721
        %v1724 = vshrl.u32 %v1669, 16
        %v1726 = vrot.slane %v1724, 4
        %v1727 = vshll.u32 %v1669, 16
        %v1729 = vrot.slane %v1727, 5
        %v1730 = vor.u32 %v1726, %v1729
        %v1731 = vrot.slane %v1730, 4
        %v1733 = vshll.u32 %v1670, 16
        %v1735 = vrot.slane %v1733, 5
        %v1736 = vsel %vm915, %v1731, %v1735
        %v1737 = vshrl.u32 %v1670, 16
        %v1739 = vrot.slane %v1737, 4
        %v1740 = vor.u32 %v1739, %v1735
        %v1741 = vrot.slane %v1740, 4
        %v1743 = vshll.u32 %v1671, 16
        %v1745 = vrot.slane %v1743, 5
        %v1746 = vsel %vm915, %v1741, %v1745
        %v1748 = vshrl.u32 %v1672, 16
        %v1750 = vrot.slane %v1748, 4
        %v1751 = vshll.u32 %v1672, 16
        %v1753 = vrot.slane %v1751, 5
        %v1754 = vor.u32 %v1750, %v1753
        %v1755 = vrot.slane %v1754, 4
        %v1757 = vshll.u32 %v1673, 16
        %v1759 = vrot.slane %v1757, 5
        %v1760 = vsel %vm915, %v1755, %v1759
        %v1761 = vshrl.u32 %v1673, 16
        %v1763 = vrot.slane %v1761, 4
        %v1764 = vor.u32 %v1763, %v1759
        %v1765 = vrot.slane %v1764, 4
        %v1767 = vshll.u32 %v1674, 16
        %v1769 = vrot.slane %v1767, 5
        %v1770 = vsel %vm915, %v1765, %v1769
        %s1771 = scalar_lea.vmem [#allocation11], 256
        %v1772 = vld [vmem:[%s1771] sm:$0xf]
        %v1773 = vld [vmem:[%s1771 + $0x4] sm:$0xf]
        %v1774 = vld [vmem:[%s1771 + $0x8] sm:$0xf]
        %v1775 = vld [vmem:[%s1771 + $0xc] sm:$0xf]
        %v1776 = vld [vmem:[%s1771 + $0x10] sm:$0xf]
        %v1777 = vld [vmem:[%s1771 + $0x14] sm:$0xf]
        %v1778 = vld [vmem:[%s1771 + $0x18] sm:$0xf]
        %v1779 = vld [vmem:[%s1771 + $0x1c] sm:$0xf]
        %v1780 = vld [vmem:[%s1771 + $0x20] sm:$0xf]
        %v1781 = vld [vmem:[%s1771 + $0x24] sm:$0xf]
        %v1782 = vld [vmem:[%s1771 + $0x28] sm:$0xf]
        %v1783 = vld [vmem:[%s1771 + $0x2c] sm:$0xf]
        %v1784 = vld [vmem:[%s1771 + $0x30] sm:$0xf]
        %v1785 = vld [vmem:[%s1771 + $0x34] sm:$0xf]
        %v1786 = vld [vmem:[%s1771 + $0x38] sm:$0xf]
        %v1787 = vld [vmem:[%s1771 + $0x3c] sm:$0xf]
        %v1788 = vunpack.c.l.b16 %v1688
        %v1789 = vunpack.c.l.b16 %v1698
        %v1790 = vunpack.c.l.b16 %v1712
        %v1791 = vunpack.c.l.b16 %v1722
        %v1792 = vunpack.c.l.b16 %v1736
        %v1793 = vunpack.c.l.b16 %v1746
        %v1794 = vunpack.c.l.b16 %v1760
        %v1795 = vunpack.c.l.b16 %v1770
        %v1796 = vpack.c.b16 %v1789, %v1788
        %v1797 = vpack.c.b16 %v1791, %v1790
        %v1798 = vpack.c.b16 %v1793, %v1792
        %v1799 = vpack.c.b16 %v1795, %v1794
        %v1820 = vunpack.c.l.b16 %v1772
        %v1821 = vunpack.c.l.b16 %v1773
        %v1822 = vunpack.c.l.b16 %v1774
        %v1823 = vunpack.c.l.b16 %v1775
        %v1824 = vunpack.c.l.b16 %v1776
        %v1825 = vunpack.c.l.b16 %v1777
        %v1826 = vunpack.c.l.b16 %v1778
        %v1827 = vunpack.c.l.b16 %v1779
        %v1828 = vunpack.c.l.b16 %v1780
        %v1829 = vunpack.c.l.b16 %v1781
        %v1830 = vunpack.c.l.b16 %v1782
        %v1831 = vunpack.c.l.b16 %v1783
        %v1832 = vunpack.c.l.b16 %v1784
        %v1833 = vunpack.c.l.b16 %v1785
        %v1834 = vunpack.c.l.b16 %v1786
        %v1835 = vunpack.c.l.b16 %v1787
        %v1836 = vpack.c.b16 %v1821, %v1820
        %v1837 = vpack.c.b16 %v1823, %v1822
        %v1838 = vpack.c.b16 %v1825, %v1824
        %v1839 = vpack.c.b16 %v1827, %v1826
        %v1840 = vpack.c.b16 %v1829, %v1828
        %v1841 = vpack.c.b16 %v1831, %v1830
        %v1842 = vpack.c.b16 %v1833, %v1832
        %v1843 = vpack.c.b16 %v1835, %v1834
        %1852 = vmatprep.subr.bf16.mxu0 0
        %1853 = vmatpush1.bf16.msra.mxu0 %v1836
        %1854 = vmatprep.subr.bf16.mxu0 0
        %1855 = vmatpush1.bf16.msra.mxu0 %v1837
        %1856 = vmatprep.subr.bf16.mxu0 0
        %1857 = vmatpush1.bf16.msra.mxu0 %v1838
        %1858 = vmatprep.subr.bf16.mxu0 0
        %1859 = vmatpush1.bf16.msra.mxu0 %v1839
        %1860 = vmatprep.subr.bf16.mxu0 0
        %1861 = vmatpush1.bf16.msra.mxu0 %v1840
        %1862 = vmatprep.subr.bf16.mxu0 0
        %1863 = vmatpush1.bf16.msra.mxu0 %v1841
        %1864 = vmatprep.subr.bf16.mxu0 0
        %1865 = vmatpush1.bf16.msra.mxu0 %v1842
        %1866 = vmatprep.subr.bf16.mxu0 0
        %1867 = vmatpush1.bf16.msra.mxu0 %v1843
        %1868 = vmatprep.subr.bf16.mxu0 0
        %1869 = vmatpush1.bf16.msra.mxu0 0
        %1870 = vmatprep.subr.bf16.mxu0 0
        %1871 = vmatpush1.bf16.msra.mxu0 0
        %1872 = vmatprep.subr.bf16.mxu0 0
        %1873 = vmatpush1.bf16.msra.mxu0 0
        %1874 = vmatprep.subr.bf16.mxu0 0
        %1875 = vmatpush1.bf16.msra.mxu0 0
        %1876 = vmatprep.subr.bf16.mxu0 0
        %1877 = vmatpush1.bf16.msra.mxu0 0
        %1878 = vmatprep.subr.bf16.mxu0 0
        %1879 = vmatpush1.bf16.msra.mxu0 0
        %1880 = vmatprep.subr.bf16.mxu0 0
        %1881 = vmatpush1.bf16.msra.mxu0 0
        %1882 = vmatprep.subr.bf16.mxu0 0
        %1883 = vmatpush1.bf16.msra.mxu0 0
        %1884 = vmatprep.mubr.bf16.mxu0 0
        %1885 = vmatmul.mubr.bf16.gmra.mrb[0].mxu0 %v1796
        %v1886 = vpop.f32.mrb[0].mxu0
        %v1887 = vadd.f32 0.0, %v1886
        %v1888 = vpop.f32.mrb[0].mxu0
        %v1889 = vpop.f32.mrb[0].mxu0
        %v1890 = vadd.f32 0.0, %v1889
        %v1891 = vpop.f32.mrb[0].mxu0
        %1892 = vmatprep.mubr.bf16.mxu0 0
        %1893 = vmatmul.mubr.bf16.gmra.mrb[0].mxu0 %v1797
        %v1894 = vpop.f32.mrb[0].mxu0
        %v1895 = vadd.f32 0.0, %v1894
        %v1896 = vpop.f32.mrb[0].mxu0
        %v1897 = vpop.f32.mrb[0].mxu0
        %v1898 = vadd.f32 0.0, %v1897
        %v1899 = vpop.f32.mrb[0].mxu0
        %1900 = vmatprep.mubr.bf16.mxu0 0
        %1901 = vmatmul.mubr.bf16.gmra.mrb[0].mxu0 %v1798
        %v1902 = vpop.f32.mrb[0].mxu0
        %v1903 = vadd.f32 0.0, %v1902
        %v1904 = vpop.f32.mrb[0].mxu0
        %v1905 = vpop.f32.mrb[0].mxu0
        %v1906 = vadd.f32 0.0, %v1905
        %v1907 = vpop.f32.mrb[0].mxu0
        %1908 = vmatprep.mubr.bf16.mxu0 0
        %1909 = vmatmul.mubr.bf16.gmra.mrb[0].mxu0 %v1799
        %v1910 = vpop.f32.mrb[0].mxu0
        %v1911 = vadd.f32 0.0, %v1910
        %v1912 = vpop.f32.mrb[0].mxu0
        %v1913 = vpop.f32.mrb[0].mxu0
        %v1914 = vadd.f32 0.0, %v1913
        %v1915 = vpop.f32.mrb[0].mxu0
        %1916 = vdwg.mxu0
        %v1917 = vadd.f32 %v1655, %v1887
        %v1918 = vadd.f32 %v1656, %v1890
        %v1919 = vadd.f32 %v1657, %v1895
        %v1920 = vadd.f32 %v1658, %v1898
        %v1921 = vadd.f32 %v1659, %v1903
        %v1922 = vadd.f32 %v1660, %v1906
        %v1923 = vadd.f32 %v1661, %v1911
        %v1924 = vadd.f32 %v1662, %v1914
        %v1925 = vld [vmem:[%s1492] sm:$0xe]
        %v1926 = vld [vmem:[%s1492 + $0xc] sm:$0xe]
        %v1927 = vld [vmem:[%s1492 + $0x18] sm:$0xe]
        %v1928 = vld [vmem:[%s1492 + $0x24] sm:$0xe]
        %v1941 = vrot.slane %v1925, 5
        %v1942 = vrot.slane %v1941, 4
        %v1943 = vrot.slane %v1664, 5
        %v1944 = vsel %vm1309, %v1942, %v1943
        %v1945 = vrot.slane %v1943, 4
        %v1946 = vrot.slane %v1665, 5
        %v1947 = vsel %vm1309, %v1945, %v1946
        %v1948 = vrot.slane %v1926, 5
        %v1949 = vrot.slane %v1948, 4
        %v1950 = vrot.slane %v1667, 5
        %v1951 = vsel %vm1309, %v1949, %v1950
        %v1952 = vrot.slane %v1950, 4
        %v1953 = vrot.slane %v1668, 5
        %v1954 = vsel %vm1309, %v1952, %v1953
        %v1955 = vrot.slane %v1927, 5
        %v1956 = vrot.slane %v1955, 4
        %v1957 = vrot.slane %v1670, 5
        %v1958 = vsel %vm1309, %v1956, %v1957
        %v1959 = vrot.slane %v1957, 4
        %v1960 = vrot.slane %v1671, 5
        %v1961 = vsel %vm1309, %v1959, %v1960
        %v1962 = vrot.slane %v1928, 5
        %v1963 = vrot.slane %v1962, 4
        %v1964 = vrot.slane %v1673, 5
        %v1965 = vsel %vm1309, %v1963, %v1964
        %v1966 = vrot.slane %v1964, 4
        %v1967 = vrot.slane %v1674, 5
        %v1968 = vsel %vm1309, %v1966, %v1967
        %s1969 = scalar_lea.vmem [#allocation11], 320
        %v1970 = vld [vmem:[%s1969] sm:$0xf]
        %v1971 = vld [vmem:[%s1969 + $0x4] sm:$0xf]
        %v1972 = vld [vmem:[%s1969 + $0x8] sm:$0xf]
        %v1973 = vld [vmem:[%s1969 + $0xc] sm:$0xf]
        %v1974 = vld [vmem:[%s1969 + $0x10] sm:$0xf]
        %v1975 = vld [vmem:[%s1969 + $0x14] sm:$0xf]
        %v1976 = vld [vmem:[%s1969 + $0x18] sm:$0xf]
        %v1977 = vld [vmem:[%s1969 + $0x1c] sm:$0xf]
        %v1978 = vld [vmem:[%s1969 + $0x20] sm:$0xf]
        %v1979 = vld [vmem:[%s1969 + $0x24] sm:$0xf]
        %v1980 = vld [vmem:[%s1969 + $0x28] sm:$0xf]
        %v1981 = vld [vmem:[%s1969 + $0x2c] sm:$0xf]
        %v1982 = vld [vmem:[%s1969 + $0x30] sm:$0xf]
        %v1983 = vld [vmem:[%s1969 + $0x34] sm:$0xf]
        %v1984 = vld [vmem:[%s1969 + $0x38] sm:$0xf]
        %v1985 = vld [vmem:[%s1969 + $0x3c] sm:$0xf]
        %v1986 = vunpack.c.l.b16 %v1944
        %v1987 = vunpack.c.l.b16 %v1947
        %v1988 = vunpack.c.l.b16 %v1951
        %v1989 = vunpack.c.l.b16 %v1954
        %v1990 = vunpack.c.l.b16 %v1958
        %v1991 = vunpack.c.l.b16 %v1961
        %v1992 = vunpack.c.l.b16 %v1965
        %v1993 = vunpack.c.l.b16 %v1968
        %v1994 = vpack.c.b16 %v1987, %v1986
        %v1995 = vpack.c.b16 %v1989, %v1988
        %v1996 = vpack.c.b16 %v1991, %v1990
        %v1997 = vpack.c.b16 %v1993, %v1992
        %v2018 = vunpack.c.l.b16 %v1970
        %v2019 = vunpack.c.l.b16 %v1971
        %v2020 = vunpack.c.l.b16 %v1972
        %v2021 = vunpack.c.l.b16 %v1973
        %v2022 = vunpack.c.l.b16 %v1974
        %v2023 = vunpack.c.l.b16 %v1975
        %v2024 = vunpack.c.l.b16 %v1976
        %v2025 = vunpack.c.l.b16 %v1977
        %v2026 = vunpack.c.l.b16 %v1978
        %v2027 = vunpack.c.l.b16 %v1979
        %v2028 = vunpack.c.l.b16 %v1980
        %v2029 = vunpack.c.l.b16 %v1981
        %v2030 = vunpack.c.l.b16 %v1982
        %v2031 = vunpack.c.l.b16 %v1983
        %v2032 = vunpack.c.l.b16 %v1984
        %v2033 = vunpack.c.l.b16 %v1985
        %v2034 = vpack.c.b16 %v2019, %v2018
        %v2035 = vpack.c.b16 %v2021, %v2020
        %v2036 = vpack.c.b16 %v2023, %v2022
        %v2037 = vpack.c.b16 %v2025, %v2024
        %v2038 = vpack.c.b16 %v2027, %v2026
        %v2039 = vpack.c.b16 %v2029, %v2028
        %v2040 = vpack.c.b16 %v2031, %v2030
        %v2041 = vpack.c.b16 %v2033, %v2032
        %2050 = vmatprep.subr.bf16.mxu0 0
        %2051 = vmatpush1.bf16.msra.mxu0 %v2034
        %2052 = vmatprep.subr.bf16.mxu0 0
        %2053 = vmatpush1.bf16.msra.mxu0 %v2035
        %2054 = vmatprep.subr.bf16.mxu0 0
        %2055 = vmatpush1.bf16.msra.mxu0 %v2036
        %2056 = vmatprep.subr.bf16.mxu0 0
        %2057 = vmatpush1.bf16.msra.mxu0 %v2037
        %2058 = vmatprep.subr.bf16.mxu0 0
        %2059 = vmatpush1.bf16.msra.mxu0 %v2038
        %2060 = vmatprep.subr.bf16.mxu0 0
        %2061 = vmatpush1.bf16.msra.mxu0 %v2039
        %2062 = vmatprep.subr.bf16.mxu0 0
        %2063 = vmatpush1.bf16.msra.mxu0 %v2040
        %2064 = vmatprep.subr.bf16.mxu0 0
        %2065 = vmatpush1.bf16.msra.mxu0 %v2041
        %2066 = vmatprep.subr.bf16.mxu0 0
        %2067 = vmatpush1.bf16.msra.mxu0 0
        %2068 = vmatprep.subr.bf16.mxu0 0
        %2069 = vmatpush1.bf16.msra.mxu0 0
        %2070 = vmatprep.subr.bf16.mxu0 0
        %2071 = vmatpush1.bf16.msra.mxu0 0
        %2072 = vmatprep.subr.bf16.mxu0 0
        %2073 = vmatpush1.bf16.msra.mxu0 0
        %2074 = vmatprep.subr.bf16.mxu0 0
        %2075 = vmatpush1.bf16.msra.mxu0 0
        %2076 = vmatprep.subr.bf16.mxu0 0
        %2077 = vmatpush1.bf16.msra.mxu0 0
        %2078 = vmatprep.subr.bf16.mxu0 0
        %2079 = vmatpush1.bf16.msra.mxu0 0
        %2080 = vmatprep.subr.bf16.mxu0 0
        %2081 = vmatpush1.bf16.msra.mxu0 0
        %2082 = vmatprep.mubr.bf16.mxu0 0
        %2083 = vmatmul.mubr.bf16.gmra.mrb[0].mxu0 %v1994
        %v2084 = vpop.f32.mrb[0].mxu0
        %v2085 = vadd.f32 0.0, %v2084
        %v2086 = vpop.f32.mrb[0].mxu0
        %v2087 = vpop.f32.mrb[0].mxu0
        %v2088 = vadd.f32 0.0, %v2087
        %v2089 = vpop.f32.mrb[0].mxu0
        %2090 = vmatprep.mubr.bf16.mxu0 0
        %2091 = vmatmul.mubr.bf16.gmra.mrb[0].mxu0 %v1995
        %v2092 = vpop.f32.mrb[0].mxu0
        %v2093 = vadd.f32 0.0, %v2092
        %v2094 = vpop.f32.mrb[0].mxu0
        %v2095 = vpop.f32.mrb[0].mxu0
        %v2096 = vadd.f32 0.0, %v2095
        %v2097 = vpop.f32.mrb[0].mxu0
        %2098 = vmatprep.mubr.bf16.mxu0 0
        %2099 = vmatmul.mubr.bf16.gmra.mrb[0].mxu0 %v1996
        %v2100 = vpop.f32.mrb[0].mxu0
        %v2101 = vadd.f32 0.0, %v2100
        %v2102 = vpop.f32.mrb[0].mxu0
        %v2103 = vpop.f32.mrb[0].mxu0
        %v2104 = vadd.f32 0.0, %v2103
        %v2105 = vpop.f32.mrb[0].mxu0
        %2106 = vmatprep.mubr.bf16.mxu0 0
        %2107 = vmatmul.mubr.bf16.gmra.mrb[0].mxu0 %v1997
        %v2108 = vpop.f32.mrb[0].mxu0
        %v2109 = vadd.f32 0.0, %v2108
        %v2110 = vpop.f32.mrb[0].mxu0
        %v2111 = vpop.f32.mrb[0].mxu0
        %v2112 = vadd.f32 0.0, %v2111
        %v2113 = vpop.f32.mrb[0].mxu0
        %2114 = vdwg.mxu0
        %v2115 = vadd.f32 %v1917, %v2085
        %v2116 = vadd.f32 %v1918, %v2088
        %v2117 = vadd.f32 %v1919, %v2093
        %v2118 = vadd.f32 %v1920, %v2096
        %v2119 = vadd.f32 %v1921, %v2101
        %v2120 = vadd.f32 %v1922, %v2104
        %v2121 = vadd.f32 %v1923, %v2109
        %v2122 = vadd.f32 %v1924, %v2112
        %s2123 = scalar_lea.vmem [#allocation2], 24
        %v2124 = vld [vmem:[%s2123] sm:$0xf]
        %v2125 = vld [vmem:[%s2123 + $0x4] sm:$0xf]
        %v2126 = vld [vmem:[%s2123 + $0xc] sm:$0xf]
        %v2127 = vld [vmem:[%s2123 + $0x10] sm:$0xf]
        %v2128 = vld [vmem:[%s2123 + $0x18] sm:$0xf]
        %v2129 = vld [vmem:[%s2123 + $0x1c] sm:$0xf]
        %v2130 = vld [vmem:[%s2123 + $0x24] sm:$0xf]
        %v2131 = vld [vmem:[%s2123 + $0x28] sm:$0xf]
        %s2132 = scalar_lea.vmem [#allocation11], 384
        %v2133 = vld [vmem:[%s2132] sm:$0xf]
        %v2134 = vld [vmem:[%s2132 + $0x4] sm:$0xf]
        %v2135 = vld [vmem:[%s2132 + $0x8] sm:$0xf]
        %v2136 = vld [vmem:[%s2132 + $0xc] sm:$0xf]
        %v2137 = vld [vmem:[%s2132 + $0x10] sm:$0xf]
        %v2138 = vld [vmem:[%s2132 + $0x14] sm:$0xf]
        %v2139 = vld [vmem:[%s2132 + $0x18] sm:$0xf]
        %v2140 = vld [vmem:[%s2132 + $0x1c] sm:$0xf]
        %v2141 = vld [vmem:[%s2132 + $0x20] sm:$0xf]
        %v2142 = vld [vmem:[%s2132 + $0x24] sm:$0xf]
        %v2143 = vld [vmem:[%s2132 + $0x28] sm:$0xf]
        %v2144 = vld [vmem:[%s2132 + $0x2c] sm:$0xf]
        %v2145 = vld [vmem:[%s2132 + $0x30] sm:$0xf]
        %v2146 = vld [vmem:[%s2132 + $0x34] sm:$0xf]
        %v2147 = vld [vmem:[%s2132 + $0x38] sm:$0xf]
        %v2148 = vld [vmem:[%s2132 + $0x3c] sm:$0xf]
        %v2157 = vunpack.c.l.b16 %v2124
        %v2158 = vunpack.c.l.b16 %v2125
        %v2159 = vunpack.c.l.b16 %v2126
        %v2160 = vunpack.c.l.b16 %v2127
        %v2161 = vunpack.c.l.b16 %v2128
        %v2162 = vunpack.c.l.b16 %v2129
        %v2163 = vunpack.c.l.b16 %v2130
        %v2164 = vunpack.c.l.b16 %v2131
        %v2165 = vpack.c.b16 %v2158, %v2157
        %v2166 = vpack.c.b16 %v2160, %v2159
        %v2167 = vpack.c.b16 %v2162, %v2161
        %v2168 = vpack.c.b16 %v2164, %v2163
        %v2189 = vunpack.c.l.b16 %v2133
        %v2190 = vunpack.c.l.b16 %v2134
        %v2191 = vunpack.c.l.b16 %v2135
        %v2192 = vunpack.c.l.b16 %v2136
        %v2193 = vunpack.c.l.b16 %v2137
        %v2194 = vunpack.c.l.b16 %v2138
        %v2195 = vunpack.c.l.b16 %v2139
        %v2196 = vunpack.c.l.b16 %v2140
        %v2197 = vunpack.c.l.b16 %v2141
        %v2198 = vunpack.c.l.b16 %v2142
        %v2199 = vunpack.c.l.b16 %v2143
        %v2200 = vunpack.c.l.b16 %v2144
        %v2201 = vunpack.c.l.b16 %v2145
        %v2202 = vunpack.c.l.b16 %v2146
        %v2203 = vunpack.c.l.b16 %v2147
        %v2204 = vunpack.c.l.b16 %v2148
        %v2205 = vpack.c.b16 %v2190, %v2189
        %v2206 = vpack.c.b16 %v2192, %v2191
        %v2207 = vpack.c.b16 %v2194, %v2193
        %v2208 = vpack.c.b16 %v2196, %v2195
        %v2209 = vpack.c.b16 %v2198, %v2197
        %v2210 = vpack.c.b16 %v2200, %v2199
        %v2211 = vpack.c.b16 %v2202, %v2201
        %v2212 = vpack.c.b16 %v2204, %v2203
        %2221 = vmatprep.subr.bf16.mxu0 0
        %2222 = vmatpush1.bf16.msra.mxu0 %v2205
        %2223 = vmatprep.subr.bf16.mxu0 0
        %2224 = vmatpush1.bf16.msra.mxu0 %v2206
        %2225 = vmatprep.subr.bf16.mxu0 0
        %2226 = vmatpush1.bf16.msra.mxu0 %v2207
        %2227 = vmatprep.subr.bf16.mxu0 0
        %2228 = vmatpush1.bf16.msra.mxu0 %v2208
        %2229 = vmatprep.subr.bf16.mxu0 0
        %2230 = vmatpush1.bf16.msra.mxu0 %v2209
        %2231 = vmatprep.subr.bf16.mxu0 0
        %2232 = vmatpush1.bf16.msra.mxu0 %v2210
        %2233 = vmatprep.subr.bf16.mxu0 0
        %2234 = vmatpush1.bf16.msra.mxu0 %v2211
        %2235 = vmatprep.subr.bf16.mxu0 0
        %2236 = vmatpush1.bf16.msra.mxu0 %v2212
        %2237 = vmatprep.subr.bf16.mxu0 0
        %2238 = vmatpush1.bf16.msra.mxu0 0
        %2239 = vmatprep.subr.bf16.mxu0 0
        %2240 = vmatpush1.bf16.msra.mxu0 0
        %2241 = vmatprep.subr.bf16.mxu0 0
        %2242 = vmatpush1.bf16.msra.mxu0 0
        %2243 = vmatprep.subr.bf16.mxu0 0
        %2244 = vmatpush1.bf16.msra.mxu0 0
        %2245 = vmatprep.subr.bf16.mxu0 0
        %2246 = vmatpush1.bf16.msra.mxu0 0
        %2247 = vmatprep.subr.bf16.mxu0 0
        %2248 = vmatpush1.bf16.msra.mxu0 0
        %2249 = vmatprep.subr.bf16.mxu0 0
        %2250 = vmatpush1.bf16.msra.mxu0 0
        %2251 = vmatprep.subr.bf16.mxu0 0
        %2252 = vmatpush1.bf16.msra.mxu0 0
        %2253 = vmatprep.mubr.bf16.mxu0 0
        %2254 = vmatmul.mubr.bf16.gmra.mrb[0].mxu0 %v2165
        %v2255 = vpop.f32.mrb[0].mxu0
        %v2256 = vadd.f32 0.0, %v2255
        %v2257 = vpop.f32.mrb[0].mxu0
        %v2258 = vpop.f32.mrb[0].mxu0
        %v2259 = vadd.f32 0.0, %v2258
        %v2260 = vpop.f32.mrb[0].mxu0
        %2261 = vmatprep.mubr.bf16.mxu0 0
        %2262 = vmatmul.mubr.bf16.gmra.mrb[0].mxu0 %v2166
        %v2263 = vpop.f32.mrb[0].mxu0
        %v2264 = vadd.f32 0.0, %v2263
        %v2265 = vpop.f32.mrb[0].mxu0
        %v2266 = vpop.f32.mrb[0].mxu0
        %v2267 = vadd.f32 0.0, %v2266
        %v2268 = vpop.f32.mrb[0].mxu0
        %2269 = vmatprep.mubr.bf16.mxu0 0
        %2270 = vmatmul.mubr.bf16.gmra.mrb[0].mxu0 %v2167
        %v2271 = vpop.f32.mrb[0].mxu0
        %v2272 = vadd.f32 0.0, %v2271
        %v2273 = vpop.f32.mrb[0].mxu0
        %v2274 = vpop.f32.mrb[0].mxu0
        %v2275 = vadd.f32 0.0, %v2274
        %v2276 = vpop.f32.mrb[0].mxu0
        %2277 = vmatprep.mubr.bf16.mxu0 0
        %2278 = vmatmul.mubr.bf16.gmra.mrb[0].mxu0 %v2168
        %v2279 = vpop.f32.mrb[0].mxu0
        %v2280 = vadd.f32 0.0, %v2279
        %v2281 = vpop.f32.mrb[0].mxu0
        %v2282 = vpop.f32.mrb[0].mxu0
        %v2283 = vadd.f32 0.0, %v2282
        %v2284 = vpop.f32.mrb[0].mxu0
        %2285 = vdwg.mxu0
        %v2286 = vadd.f32 %v2115, %v2256
        %v2287 = vadd.f32 %v2116, %v2259
        %v2288 = vadd.f32 %v2117, %v2264
        %v2289 = vadd.f32 %v2118, %v2267
        %v2290 = vadd.f32 %v2119, %v2272
        %v2291 = vadd.f32 %v2120, %v2275
        %v2292 = vadd.f32 %v2121, %v2280
        %v2293 = vadd.f32 %v2122, %v2283
        %v2294 = vld [vmem:[%s2123] sm:$0xf]
        %v2295 = vld [vmem:[%s2123 + $0x4] sm:$0xf]
        %v2296 = vld [vmem:[%s2123 + $0x8] sm:$0x1]
        %v2297 = vld [vmem:[%s2123 + $0xc] sm:$0xf]
        %v2298 = vld [vmem:[%s2123 + $0x10] sm:$0xf]
        %v2299 = vld [vmem:[%s2123 + $0x14] sm:$0x1]
        %v2300 = vld [vmem:[%s2123 + $0x18] sm:$0xf]
        %v2301 = vld [vmem:[%s2123 + $0x1c] sm:$0xf]
        %v2302 = vld [vmem:[%s2123 + $0x20] sm:$0x1]
        %v2303 = vld [vmem:[%s2123 + $0x24] sm:$0xf]
        %v2304 = vld [vmem:[%s2123 + $0x28] sm:$0xf]
        %v2305 = vld [vmem:[%s2123 + $0x2c] sm:$0x1]
        %v2307 = vshrl.u32 %v2294, 16
        %v2309 = vrot.slane %v2307, 4
        %v2310 = vshll.u32 %v2294, 16
        %v2312 = vrot.slane %v2310, 5
        %v2313 = vor.u32 %v2309, %v2312
        %v2314 = vrot.slane %v2313, 4
        %v2316 = vshll.u32 %v2295, 16
        %v2318 = vrot.slane %v2316, 5
        %v2319 = vsel %vm915, %v2314, %v2318
        %v2320 = vshrl.u32 %v2295, 16
        %v2322 = vrot.slane %v2320, 4
        %v2323 = vor.u32 %v2322, %v2318
        %v2324 = vrot.slane %v2323, 4
        %v2326 = vshll.u32 %v2296, 16
        %v2328 = vrot.slane %v2326, 5
        %v2329 = vsel %vm915, %v2324, %v2328
        %v2331 = vshrl.u32 %v2297, 16
        %v2333 = vrot.slane %v2331, 4
        %v2334 = vshll.u32 %v2297, 16
        %v2336 = vrot.slane %v2334, 5
        %v2337 = vor.u32 %v2333, %v2336
        %v2338 = vrot.slane %v2337, 4
        %v2340 = vshll.u32 %v2298, 16
        %v2342 = vrot.slane %v2340, 5
        %v2343 = vsel %vm915, %v2338, %v2342
        %v2344 = vshrl.u32 %v2298, 16
        %v2346 = vrot.slane %v2344, 4
        %v2347 = vor.u32 %v2346, %v2342
        %v2348 = vrot.slane %v2347, 4
        %v2350 = vshll.u32 %v2299, 16
        %v2352 = vrot.slane %v2350, 5
        %v2353 = vsel %vm915, %v2348, %v2352
        %v2355 = vshrl.u32 %v2300, 16
        %v2357 = vrot.slane %v2355, 4
        %v2358 = vshll.u32 %v2300, 16
        %v2360 = vrot.slane %v2358, 5
        %v2361 = vor.u32 %v2357, %v2360
        %v2362 = vrot.slane %v2361, 4
        %v2364 = vshll.u32 %v2301, 16
        %v2366 = vrot.slane %v2364, 5
        %v2367 = vsel %vm915, %v2362, %v2366
        %v2368 = vshrl.u32 %v2301, 16
        %v2370 = vrot.slane %v2368, 4
        %v2371 = vor.u32 %v2370, %v2366
        %v2372 = vrot.slane %v2371, 4
        %v2374 = vshll.u32 %v2302, 16
        %v2376 = vrot.slane %v2374, 5
        %v2377 = vsel %vm915, %v2372, %v2376
        %v2379 = vshrl.u32 %v2303, 16
        %v2381 = vrot.slane %v2379, 4
        %v2382 = vshll.u32 %v2303, 16
        %v2384 = vrot.slane %v2382, 5
        %v2385 = vor.u32 %v2381, %v2384
        %v2386 = vrot.slane %v2385, 4
        %v2388 = vshll.u32 %v2304, 16
        %v2390 = vrot.slane %v2388, 5
        %v2391 = vsel %vm915, %v2386, %v2390
        %v2392 = vshrl.u32 %v2304, 16
        %v2394 = vrot.slane %v2392, 4
        %v2395 = vor.u32 %v2394, %v2390
        %v2396 = vrot.slane %v2395, 4
        %v2398 = vshll.u32 %v2305, 16
        %v2400 = vrot.slane %v2398, 5
        %v2401 = vsel %vm915, %v2396, %v2400
        %s2402 = scalar_lea.vmem [#allocation11], 448
        %v2403 = vld [vmem:[%s2402] sm:$0xf]
        %v2404 = vld [vmem:[%s2402 + $0x4] sm:$0xf]
        %v2405 = vld [vmem:[%s2402 + $0x8] sm:$0xf]
        %v2406 = vld [vmem:[%s2402 + $0xc] sm:$0xf]
        %v2407 = vld [vmem:[%s2402 + $0x10] sm:$0xf]
        %v2408 = vld [vmem:[%s2402 + $0x14] sm:$0xf]
        %v2409 = vld [vmem:[%s2402 + $0x18] sm:$0xf]
        %v2410 = vld [vmem:[%s2402 + $0x1c] sm:$0xf]
        %v2411 = vld [vmem:[%s2402 + $0x20] sm:$0xf]
        %v2412 = vld [vmem:[%s2402 + $0x24] sm:$0xf]
        %v2413 = vld [vmem:[%s2402 + $0x28] sm:$0xf]
        %v2414 = vld [vmem:[%s2402 + $0x2c] sm:$0xf]
        %v2415 = vld [vmem:[%s2402 + $0x30] sm:$0xf]
        %v2416 = vld [vmem:[%s2402 + $0x34] sm:$0xf]
        %v2417 = vld [vmem:[%s2402 + $0x38] sm:$0xf]
        %v2418 = vld [vmem:[%s2402 + $0x3c] sm:$0xf]
        %v2419 = vunpack.c.l.b16 %v2319
        %v2420 = vunpack.c.l.b16 %v2329
        %v2421 = vunpack.c.l.b16 %v2343
        %v2422 = vunpack.c.l.b16 %v2353
        %v2423 = vunpack.c.l.b16 %v2367
        %v2424 = vunpack.c.l.b16 %v2377
        %v2425 = vunpack.c.l.b16 %v2391
        %v2426 = vunpack.c.l.b16 %v2401
        %v2427 = vpack.c.b16 %v2420, %v2419
        %v2428 = vpack.c.b16 %v2422, %v2421
        %v2429 = vpack.c.b16 %v2424, %v2423
        %v2430 = vpack.c.b16 %v2426, %v2425
        %v2451 = vunpack.c.l.b16 %v2403
        %v2452 = vunpack.c.l.b16 %v2404
        %v2453 = vunpack.c.l.b16 %v2405
        %v2454 = vunpack.c.l.b16 %v2406
        %v2455 = vunpack.c.l.b16 %v2407
        %v2456 = vunpack.c.l.b16 %v2408
        %v2457 = vunpack.c.l.b16 %v2409
        %v2458 = vunpack.c.l.b16 %v2410
        %v2459 = vunpack.c.l.b16 %v2411
        %v2460 = vunpack.c.l.b16 %v2412
        %v2461 = vunpack.c.l.b16 %v2413
        %v2462 = vunpack.c.l.b16 %v2414
        %v2463 = vunpack.c.l.b16 %v2415
        %v2464 = vunpack.c.l.b16 %v2416
        %v2465 = vunpack.c.l.b16 %v2417
        %v2466 = vunpack.c.l.b16 %v2418
        %v2467 = vpack.c.b16 %v2452, %v2451
        %v2468 = vpack.c.b16 %v2454, %v2453
        %v2469 = vpack.c.b16 %v2456, %v2455
        %v2470 = vpack.c.b16 %v2458, %v2457
        %v2471 = vpack.c.b16 %v2460, %v2459
        %v2472 = vpack.c.b16 %v2462, %v2461
        %v2473 = vpack.c.b16 %v2464, %v2463
        %v2474 = vpack.c.b16 %v2466, %v2465
        %2483 = vmatprep.subr.bf16.mxu0 0
        %2484 = vmatpush1.bf16.msra.mxu0 %v2467
        %2485 = vmatprep.subr.bf16.mxu0 0
        %2486 = vmatpush1.bf16.msra.mxu0 %v2468
        %2487 = vmatprep.subr.bf16.mxu0 0
        %2488 = vmatpush1.bf16.msra.mxu0 %v2469
        %2489 = vmatprep.subr.bf16.mxu0 0
        %2490 = vmatpush1.bf16.msra.mxu0 %v2470
        %2491 = vmatprep.subr.bf16.mxu0 0
        %2492 = vmatpush1.bf16.msra.mxu0 %v2471
        %2493 = vmatprep.subr.bf16.mxu0 0
        %2494 = vmatpush1.bf16.msra.mxu0 %v2472
        %2495 = vmatprep.subr.bf16.mxu0 0
        %2496 = vmatpush1.bf16.msra.mxu0 %v2473
        %2497 = vmatprep.subr.bf16.mxu0 0
        %2498 = vmatpush1.bf16.msra.mxu0 %v2474
        %2499 = vmatprep.subr.bf16.mxu0 0
        %2500 = vmatpush1.bf16.msra.mxu0 0
        %2501 = vmatprep.subr.bf16.mxu0 0
        %2502 = vmatpush1.bf16.msra.mxu0 0
        %2503 = vmatprep.subr.bf16.mxu0 0
        %2504 = vmatpush1.bf16.msra.mxu0 0
        %2505 = vmatprep.subr.bf16.mxu0 0
        %2506 = vmatpush1.bf16.msra.mxu0 0
        %2507 = vmatprep.subr.bf16.mxu0 0
        %2508 = vmatpush1.bf16.msra.mxu0 0
        %2509 = vmatprep.subr.bf16.mxu0 0
        %2510 = vmatpush1.bf16.msra.mxu0 0
        %2511 = vmatprep.subr.bf16.mxu0 0
        %2512 = vmatpush1.bf16.msra.mxu0 0
        %2513 = vmatprep.subr.bf16.mxu0 0
        %2514 = vmatpush1.bf16.msra.mxu0 0
        %2515 = vmatprep.mubr.bf16.mxu0 0
        %2516 = vmatmul.mubr.bf16.gmra.mrb[0].mxu0 %v2427
        %v2517 = vpop.f32.mrb[0].mxu0
        %v2518 = vadd.f32 0.0, %v2517
        %v2519 = vpop.f32.mrb[0].mxu0
        %v2520 = vpop.f32.mrb[0].mxu0
        %v2521 = vadd.f32 0.0, %v2520
        %v2522 = vpop.f32.mrb[0].mxu0
        %2523 = vmatprep.mubr.bf16.mxu0 0
        %2524 = vmatmul.mubr.bf16.gmra.mrb[0].mxu0 %v2428
        %v2525 = vpop.f32.mrb[0].mxu0
        %v2526 = vadd.f32 0.0, %v2525
        %v2527 = vpop.f32.mrb[0].mxu0
        %v2528 = vpop.f32.mrb[0].mxu0
        %v2529 = vadd.f32 0.0, %v2528
        %v2530 = vpop.f32.mrb[0].mxu0
        %2531 = vmatprep.mubr.bf16.mxu0 0
        %2532 = vmatmul.mubr.bf16.gmra.mrb[0].mxu0 %v2429
        %v2533 = vpop.f32.mrb[0].mxu0
        %v2534 = vadd.f32 0.0, %v2533
        %v2535 = vpop.f32.mrb[0].mxu0
        %v2536 = vpop.f32.mrb[0].mxu0
        %v2537 = vadd.f32 0.0, %v2536
        %v2538 = vpop.f32.mrb[0].mxu0
        %2539 = vmatprep.mubr.bf16.mxu0 0
        %2540 = vmatmul.mubr.bf16.gmra.mrb[0].mxu0 %v2430
        %v2541 = vpop.f32.mrb[0].mxu0
        %v2542 = vadd.f32 0.0, %v2541
        %v2543 = vpop.f32.mrb[0].mxu0
        %v2544 = vpop.f32.mrb[0].mxu0
        %v2545 = vadd.f32 0.0, %v2544
        %v2546 = vpop.f32.mrb[0].mxu0
        %2547 = vdwg.mxu0
        %v2548 = vadd.f32 %v2286, %v2518
        %v2549 = vadd.f32 %v2287, %v2521
        %v2550 = vadd.f32 %v2288, %v2526
        %v2551 = vadd.f32 %v2289, %v2529
        %v2552 = vadd.f32 %v2290, %v2534
        %v2553 = vadd.f32 %v2291, %v2537
        %v2554 = vadd.f32 %v2292, %v2542
        %v2555 = vadd.f32 %v2293, %v2545
        %v2556 = vld [vmem:[%s2123] sm:$0xe]
        %v2557 = vld [vmem:[%s2123 + $0xc] sm:$0xe]
        %v2558 = vld [vmem:[%s2123 + $0x18] sm:$0xe]
        %v2559 = vld [vmem:[%s2123 + $0x24] sm:$0xe]
        %v2572 = vrot.slane %v2556, 5
        %v2573 = vrot.slane %v2572, 4
        %v2574 = vrot.slane %v2295, 5
        %v2575 = vsel %vm1309, %v2573, %v2574
        %v2576 = vrot.slane %v2574, 4
        %v2577 = vrot.slane %v2296, 5
        %v2578 = vsel %vm1309, %v2576, %v2577
        %v2579 = vrot.slane %v2557, 5
        %v2580 = vrot.slane %v2579, 4
        %v2581 = vrot.slane %v2298, 5
        %v2582 = vsel %vm1309, %v2580, %v2581
        %v2583 = vrot.slane %v2581, 4
        %v2584 = vrot.slane %v2299, 5
        %v2585 = vsel %vm1309, %v2583, %v2584
        %v2586 = vrot.slane %v2558, 5
        %v2587 = vrot.slane %v2586, 4
        %v2588 = vrot.slane %v2301, 5
        %v2589 = vsel %vm1309, %v2587, %v2588
        %v2590 = vrot.slane %v2588, 4
        %v2591 = vrot.slane %v2302, 5
        %v2592 = vsel %vm1309, %v2590, %v2591
        %v2593 = vrot.slane %v2559, 5
        %v2594 = vrot.slane %v2593, 4
        %v2595 = vrot.slane %v2304, 5
        %v2596 = vsel %vm1309, %v2594, %v2595
        %v2597 = vrot.slane %v2595, 4
        %v2598 = vrot.slane %v2305, 5
        %v2599 = vsel %vm1309, %v2597, %v2598
        %s2600 = scalar_lea.vmem [#allocation11], 512
        %v2601 = vld [vmem:[%s2600] sm:$0xf]
        %v2602 = vld [vmem:[%s2600 + $0x4] sm:$0xf]
        %v2603 = vld [vmem:[%s2600 + $0x8] sm:$0xf]
        %v2604 = vld [vmem:[%s2600 + $0xc] sm:$0xf]
        %v2605 = vld [vmem:[%s2600 + $0x10] sm:$0xf]
        %v2606 = vld [vmem:[%s2600 + $0x14] sm:$0xf]
        %v2607 = vld [vmem:[%s2600 + $0x18] sm:$0xf]
        %v2608 = vld [vmem:[%s2600 + $0x1c] sm:$0xf]
        %v2609 = vld [vmem:[%s2600 + $0x20] sm:$0xf]
        %v2610 = vld [vmem:[%s2600 + $0x24] sm:$0xf]
        %v2611 = vld [vmem:[%s2600 + $0x28] sm:$0xf]
        %v2612 = vld [vmem:[%s2600 + $0x2c] sm:$0xf]
        %v2613 = vld [vmem:[%s2600 + $0x30] sm:$0xf]
        %v2614 = vld [vmem:[%s2600 + $0x34] sm:$0xf]
        %v2615 = vld [vmem:[%s2600 + $0x38] sm:$0xf]
        %v2616 = vld [vmem:[%s2600 + $0x3c] sm:$0xf]
        %v2617 = vunpack.c.l.b16 %v2575
        %v2618 = vunpack.c.l.b16 %v2578
        %v2619 = vunpack.c.l.b16 %v2582
        %v2620 = vunpack.c.l.b16 %v2585
        %v2621 = vunpack.c.l.b16 %v2589
        %v2622 = vunpack.c.l.b16 %v2592
        %v2623 = vunpack.c.l.b16 %v2596
        %v2624 = vunpack.c.l.b16 %v2599
        %v2625 = vpack.c.b16 %v2618, %v2617
        %v2626 = vpack.c.b16 %v2620, %v2619
        %v2627 = vpack.c.b16 %v2622, %v2621
        %v2628 = vpack.c.b16 %v2624, %v2623
        %v2649 = vunpack.c.l.b16 %v2601
        %v2650 = vunpack.c.l.b16 %v2602
        %v2651 = vunpack.c.l.b16 %v2603
        %v2652 = vunpack.c.l.b16 %v2604
        %v2653 = vunpack.c.l.b16 %v2605
        %v2654 = vunpack.c.l.b16 %v2606
        %v2655 = vunpack.c.l.b16 %v2607
        %v2656 = vunpack.c.l.b16 %v2608
        %v2657 = vunpack.c.l.b16 %v2609
        %v2658 = vunpack.c.l.b16 %v2610
        %v2659 = vunpack.c.l.b16 %v2611
        %v2660 = vunpack.c.l.b16 %v2612
        %v2661 = vunpack.c.l.b16 %v2613
        %v2662 = vunpack.c.l.b16 %v2614
        %v2663 = vunpack.c.l.b16 %v2615
        %v2664 = vunpack.c.l.b16 %v2616
        %v2665 = vpack.c.b16 %v2650, %v2649
        %v2666 = vpack.c.b16 %v2652, %v2651
        %v2667 = vpack.c.b16 %v2654, %v2653
        %v2668 = vpack.c.b16 %v2656, %v2655
        %v2669 = vpack.c.b16 %v2658, %v2657
        %v2670 = vpack.c.b16 %v2660, %v2659
        %v2671 = vpack.c.b16 %v2662, %v2661
        %v2672 = vpack.c.b16 %v2664, %v2663
        %2681 = vmatprep.subr.bf16.mxu0 0
        %2682 = vmatpush1.bf16.msra.mxu0 %v2665
        %2683 = vmatprep.subr.bf16.mxu0 0
        %2684 = vmatpush1.bf16.msra.mxu0 %v2666
        %2685 = vmatprep.subr.bf16.mxu0 0
        %2686 = vmatpush1.bf16.msra.mxu0 %v2667
        %2687 = vmatprep.subr.bf16.mxu0 0
        %2688 = vmatpush1.bf16.msra.mxu0 %v2668
        %2689 = vmatprep.subr.bf16.mxu0 0
        %2690 = vmatpush1.bf16.msra.mxu0 %v2669
        %2691 = vmatprep.subr.bf16.mxu0 0
        %2692 = vmatpush1.bf16.msra.mxu0 %v2670
        %2693 = vmatprep.subr.bf16.mxu0 0
        %2694 = vmatpush1.bf16.msra.mxu0 %v2671
        %2695 = vmatprep.subr.bf16.mxu0 0
        %2696 = vmatpush1.bf16.msra.mxu0 %v2672
        %2697 = vmatprep.subr.bf16.mxu0 0
        %2698 = vmatpush1.bf16.msra.mxu0 0
        %2699 = vmatprep.subr.bf16.mxu0 0
        %2700 = vmatpush1.bf16.msra.mxu0 0
        %2701 = vmatprep.subr.bf16.mxu0 0
        %2702 = vmatpush1.bf16.msra.mxu0 0
        %2703 = vmatprep.subr.bf16.mxu0 0
        %2704 = vmatpush1.bf16.msra.mxu0 0
        %2705 = vmatprep.subr.bf16.mxu0 0
        %2706 = vmatpush1.bf16.msra.mxu0 0
        %2707 = vmatprep.subr.bf16.mxu0 0
        %2708 = vmatpush1.bf16.msra.mxu0 0
        %2709 = vmatprep.subr.bf16.mxu0 0
        %2710 = vmatpush1.bf16.msra.mxu0 0
        %2711 = vmatprep.subr.bf16.mxu0 0
        %2712 = vmatpush1.bf16.msra.mxu0 0
        %2713 = vmatprep.mubr.bf16.mxu0 0
        %2714 = vmatmul.mubr.bf16.gmra.mrb[0].mxu0 %v2625
        %v2715 = vpop.f32.mrb[0].mxu0
        %v2716 = vadd.f32 0.0, %v2715
        %v2717 = vpop.f32.mrb[0].mxu0
        %v2718 = vpop.f32.mrb[0].mxu0
        %v2719 = vadd.f32 0.0, %v2718
        %v2720 = vpop.f32.mrb[0].mxu0
        %2721 = vmatprep.mubr.bf16.mxu0 0
        %2722 = vmatmul.mubr.bf16.gmra.mrb[0].mxu0 %v2626
        %v2723 = vpop.f32.mrb[0].mxu0
        %v2724 = vadd.f32 0.0, %v2723
        %v2725 = vpop.f32.mrb[0].mxu0
        %v2726 = vpop.f32.mrb[0].mxu0
        %v2727 = vadd.f32 0.0, %v2726
        %v2728 = vpop.f32.mrb[0].mxu0
        %2729 = vmatprep.mubr.bf16.mxu0 0
        %2730 = vmatmul.mubr.bf16.gmra.mrb[0].mxu0 %v2627
        %v2731 = vpop.f32.mrb[0].mxu0
        %v2732 = vadd.f32 0.0, %v2731
        %v2733 = vpop.f32.mrb[0].mxu0
        %v2734 = vpop.f32.mrb[0].mxu0
        %v2735 = vadd.f32 0.0, %v2734
        %v2736 = vpop.f32.mrb[0].mxu0
        %2737 = vmatprep.mubr.bf16.mxu0 0
        %2738 = vmatmul.mubr.bf16.gmra.mrb[0].mxu0 %v2628
        %v2739 = vpop.f32.mrb[0].mxu0
        %v2740 = vadd.f32 0.0, %v2739
        %v2741 = vpop.f32.mrb[0].mxu0
        %v2742 = vpop.f32.mrb[0].mxu0
        %v2743 = vadd.f32 0.0, %v2742
        %v2744 = vpop.f32.mrb[0].mxu0
        %2745 = vdwg.mxu0
        %v2746 = vadd.f32 %v2548, %v2716
        %v2747 = vadd.f32 %v2549, %v2719
        %v2748 = vadd.f32 %v2550, %v2724
        %v2749 = vadd.f32 %v2551, %v2727
        %v2750 = vadd.f32 %v2552, %v2732
        %v2751 = vadd.f32 %v2553, %v2735
        %v2752 = vadd.f32 %v2554, %v2740
        %v2753 = vadd.f32 %v2555, %v2743
        %v2754 = vld [vmem:[%s6] sm:$0x1]
        %v2756 = vlaneseq
        %v2757 = vshrl.u32 %v2756, 7
        %v2758 = vsub.s32 0, %v2757
        %v2759 = vrot.slane %v2754, %v2758
        %v2761 = vadd.f32 %v2746, %v2759
        %v2762 = vadd.f32 %v2747, %v2759
        %v2763 = vadd.f32 %v2748, %v2759
        %v2764 = vadd.f32 %v2749, %v2759
        %v2765 = vadd.f32 %v2750, %v2759
        %v2766 = vadd.f32 %v2751, %v2759
        %v2767 = vadd.f32 %v2752, %v2759
        %v2768 = vadd.f32 %v2753, %v2759
        %v2769 = vmax.f32 %v2761, 0.0
        %v2770 = vmax.f32 %v2762, 0.0
        %v2771 = vmax.f32 %v2763, 0.0
        %v2772 = vmax.f32 %v2764, 0.0
        %v2773 = vmax.f32 %v2765, 0.0
        %v2774 = vmax.f32 %v2766, 0.0
        %v2775 = vmax.f32 %v2767, 0.0
        %v2776 = vmax.f32 %v2768, 0.0
        %v2777 = vpack.c.bf16 %v2770, %v2769
        %v2778 = vpack.c.bf16 %v2772, %v2771
        %v2779 = vpack.c.bf16 %v2774, %v2773
        %v2780 = vpack.c.bf16 %v2776, %v2775
        %v2781 = vld [vmem:[#allocation12] sm:$0xf]
        %v2782 = vld [vmem:[#allocation12 + $0x4] sm:$0xf]
        %v2783 = vld [vmem:[#allocation12 + $0x8] sm:$0xf]
        %v2784 = vld [vmem:[#allocation12 + $0xc] sm:$0xf]
        %v2785 = vld [vmem:[#allocation12 + $0x10] sm:$0xf]
        %v2786 = vld [vmem:[#allocation12 + $0x14] sm:$0xf]
        %v2787 = vld [vmem:[#allocation12 + $0x18] sm:$0xf]
        %v2788 = vld [vmem:[#allocation12 + $0x1c] sm:$0xf]
        %v2789 = vld [vmem:[#allocation12 + $0x20] sm:$0xf]
        %v2790 = vld [vmem:[#allocation12 + $0x24] sm:$0xf]
        %v2791 = vld [vmem:[#allocation12 + $0x28] sm:$0xf]
        %v2792 = vld [vmem:[#allocation12 + $0x2c] sm:$0xf]
        %v2793 = vld [vmem:[#allocation12 + $0x30] sm:$0xf]
        %v2794 = vld [vmem:[#allocation12 + $0x34] sm:$0xf]
        %v2795 = vld [vmem:[#allocation12 + $0x38] sm:$0xf]
        %v2796 = vld [vmem:[#allocation12 + $0x3c] sm:$0xf]
        %v2797 = vld [vmem:[%s8] sm:$0x1]
        %v2799 = vlaneseq
        %v2800 = vshrl.u32 %v2799, 7
        %v2801 = vsub.s32 0, %v2800
        %v2802 = vrot.slane %v2797, %v2801
        %v2820 = vunpack.c.l.b16 %v2781
        %v2821 = vunpack.c.l.b16 %v2782
        %v2822 = vunpack.c.l.b16 %v2783
        %v2823 = vunpack.c.l.b16 %v2784
        %v2824 = vunpack.c.l.b16 %v2785
        %v2825 = vunpack.c.l.b16 %v2786
        %v2826 = vunpack.c.l.b16 %v2787
        %v2827 = vunpack.c.l.b16 %v2788
        %v2828 = vunpack.c.l.b16 %v2789
        %v2829 = vunpack.c.l.b16 %v2790
        %v2830 = vunpack.c.l.b16 %v2791
        %v2831 = vunpack.c.l.b16 %v2792
        %v2832 = vunpack.c.l.b16 %v2793
        %v2833 = vunpack.c.l.b16 %v2794
        %v2834 = vunpack.c.l.b16 %v2795
        %v2835 = vunpack.c.l.b16 %v2796
        %v2836 = vpack.c.b16 %v2821, %v2820
        %v2837 = vpack.c.b16 %v2823, %v2822
        %v2838 = vpack.c.b16 %v2825, %v2824
        %v2839 = vpack.c.b16 %v2827, %v2826
        %v2840 = vpack.c.b16 %v2829, %v2828
        %v2841 = vpack.c.b16 %v2831, %v2830
        %v2842 = vpack.c.b16 %v2833, %v2832
        %v2843 = vpack.c.b16 %v2835, %v2834
        %2852 = vmatprep.subr.bf16.mxu0 0
        %2853 = vmatpush1.bf16.msra.mxu0 %v2836
        %2854 = vmatprep.subr.bf16.mxu0 0
        %2855 = vmatpush1.bf16.msra.mxu0 %v2837
        %2856 = vmatprep.subr.bf16.mxu0 0
        %2857 = vmatpush1.bf16.msra.mxu0 %v2838
        %2858 = vmatprep.subr.bf16.mxu0 0
        %2859 = vmatpush1.bf16.msra.mxu0 %v2839
        %2860 = vmatprep.subr.bf16.mxu0 0
        %2861 = vmatpush1.bf16.msra.mxu0 %v2840
        %2862 = vmatprep.subr.bf16.mxu0 0
        %2863 = vmatpush1.bf16.msra.mxu0 %v2841
        %2864 = vmatprep.subr.bf16.mxu0 0
        %2865 = vmatpush1.bf16.msra.mxu0 %v2842
        %2866 = vmatprep.subr.bf16.mxu0 0
        %2867 = vmatpush1.bf16.msra.mxu0 %v2843
        %2868 = vmatprep.subr.bf16.mxu0 0
        %2869 = vmatpush1.bf16.msra.mxu0 0
        %2870 = vmatprep.subr.bf16.mxu0 0
        %2871 = vmatpush1.bf16.msra.mxu0 0
        %2872 = vmatprep.subr.bf16.mxu0 0
        %2873 = vmatpush1.bf16.msra.mxu0 0
        %2874 = vmatprep.subr.bf16.mxu0 0
        %2875 = vmatpush1.bf16.msra.mxu0 0
        %2876 = vmatprep.subr.bf16.mxu0 0
        %2877 = vmatpush1.bf16.msra.mxu0 0
        %2878 = vmatprep.subr.bf16.mxu0 0
        %2879 = vmatpush1.bf16.msra.mxu0 0
        %2880 = vmatprep.subr.bf16.mxu0 0
        %2881 = vmatpush1.bf16.msra.mxu0 0
        %2882 = vmatprep.subr.bf16.mxu0 0
        %2883 = vmatpush1.bf16.msra.mxu0 0
        %2884 = vmatprep.mubr.bf16.mxu0 0
        %2885 = vmatmul.mubr.bf16.gmra.mrb[0].mxu0 %v2777
        %v2886 = vpop.f32.mrb[0].mxu0
        %v2887 = vadd.f32 %v2802, %v2886
        %v2888 = vpop.f32.mrb[0].mxu0
        %v2889 = vpop.f32.mrb[0].mxu0
        %v2890 = vadd.f32 %v2802, %v2889
        %v2891 = vpop.f32.mrb[0].mxu0
        %2892 = vmatprep.mubr.bf16.mxu0 0
        %2893 = vmatmul.mubr.bf16.gmra.mrb[0].mxu0 %v2778
        %v2894 = vpop.f32.mrb[0].mxu0
        %v2895 = vadd.f32 %v2802, %v2894
        %v2896 = vpop.f32.mrb[0].mxu0
        %v2897 = vpop.f32.mrb[0].mxu0
        %v2898 = vadd.f32 %v2802, %v2897
        %v2899 = vpop.f32.mrb[0].mxu0
        %2900 = vmatprep.mubr.bf16.mxu0 0
        %2901 = vmatmul.mubr.bf16.gmra.mrb[0].mxu0 %v2779
        %v2902 = vpop.f32.mrb[0].mxu0
        %v2903 = vadd.f32 %v2802, %v2902
        %v2904 = vpop.f32.mrb[0].mxu0
        %v2905 = vpop.f32.mrb[0].mxu0
        %v2906 = vadd.f32 %v2802, %v2905
        %v2907 = vpop.f32.mrb[0].mxu0
        %2908 = vmatprep.mubr.bf16.mxu0 0
        %2909 = vmatmul.mubr.bf16.gmra.mrb[0].mxu0 %v2780
        %v2910 = vpop.f32.mrb[0].mxu0
        %v2911 = vadd.f32 %v2802, %v2910
        %v2912 = vpop.f32.mrb[0].mxu0
        %v2913 = vpop.f32.mrb[0].mxu0
        %v2914 = vadd.f32 %v2802, %v2913
        %v2915 = vpop.f32.mrb[0].mxu0
        %2916 = vdwg.mxu0
        %v2917 = vadd.f32 %v2887, %v534
        %v2918 = vadd.f32 %v2890, %v535
        %v2919 = vadd.f32 %v2895, %v536
        %v2920 = vadd.f32 %v2898, %v537
        %v2921 = vadd.f32 %v2903, %v538
        %v2922 = vadd.f32 %v2906, %v539
        %v2923 = vadd.f32 %v2911, %v540
        %v2924 = vadd.f32 %v2914, %v541
        %v2925 = vmax.f32 %v2917, 0.0
        %v2926 = vmax.f32 %v2918, 0.0
        %v2927 = vmax.f32 %v2919, 0.0
        %v2928 = vmax.f32 %v2920, 0.0
        %v2929 = vmax.f32 %v2921, 0.0
        %v2930 = vmax.f32 %v2922, 0.0
        %v2931 = vmax.f32 %v2923, 0.0
        %v2932 = vmax.f32 %v2924, 0.0
        %2933 = vst [vmem:[%s522] sm:$0xff] %v2925
        %2934 = vst [vmem:[%s522 + $0x8] sm:$0xff] %v2926
        %2935 = vst [vmem:[%s522 + $0x10] sm:$0xff] %v2927
        %2936 = vst [vmem:[%s522 + $0x18] sm:$0xff] %v2928
        %2937 = vst [vmem:[%s522 + $0x20] sm:$0xff] %v2929
        %2938 = vst [vmem:[%s522 + $0x28] sm:$0xff] %v2930
        %2939 = vst [vmem:[%s522 + $0x30] sm:$0xff] %v2931
        %2940 = vst [vmem:[%s522 + $0x38] sm:$0xff] %v2932
        %s2941 = sand.u32 %s279, 1
        %s2942 = scalar_lea.sflag [#allocation5], %s2941
        %s2943 = sand.u32 %s279, 1
        %s2944 = smul.addr %s2943, 64
        %s2945 = scalar_lea.vmem [#allocation14], %s2944
        // Predicated region
        $region81: #{tpu_custom_call.1} parent=55 // pred_check
          %p2946 = pneg %p289
        $region82: #{tpu_custom_call.1} parent=55 // pred_check_branch
          %2948 = sbr.rel (%p2946) target = $region84
        $region83: #{tpu_custom_call.1} parent=55 // pred_region
          %s2949 = smul.u32 4, %s36
          %s2951 = ssub.s32 1024, 1024
          %2952 = vsyncadd %s2942, %s2951
          %s2953 = smul.addr %s2949, 2
          %s2954 = smul.addr %s35, 32
          %s2955 = sadd.s32 %s2953, %s2954
          %s2956 = smul.addr %s2955, 128
          %s2957 = scalar_lea.hbm %s9, %s2956
          %s2958 = sshll.u32 %s2945, 4
          %s2959 = int_to_ptr.vmem [resolvable:$true] %s2958
          %2964 = dma.vmem_to_hbm [thread:$0]  %s2959, 1024, %s2957, %s2942, 128, 128, 8
        $region84: #{tpu_custom_call.1} parent=55 // pred_fallthru
          _
      $region56: #{tpu_custom_call.1} parent=5 // pred_fallthru
        _
      %p2965 = scmp.le.s32.totalorder 2, %s26
      // Predicated region
      $region85: #{tpu_custom_call.1} parent=5 // pred_check
        %p2966 = pneg %p2965
      $region86: #{tpu_custom_call.1} parent=5 // pred_check_branch
        %2968 = sbr.rel (%p2966) target = $region88
      $region87: #{tpu_custom_call.1} parent=5 // pred_region
        %s2969 = ssub.s32 %s26, 2
        // Predicated region
        $region89: #{tpu_custom_call.1} parent=87 // pred_check
          %p2970 = pneg %p295
        $region90: #{tpu_custom_call.1} parent=87 // pred_check_branch
          %2972 = sbr.rel (%p2970) target = $region92
        $region91: #{tpu_custom_call.1} parent=87 // pred_region
          %s2973 = sand.u32 %s280, 1
          %s2974 = scalar_lea.sflag [#allocation5], %s2973
          %s2975 = sand.u32 %s280, 1
          %s2976 = smul.addr %s2975, 64
          %s2977 = scalar_lea.vmem [#allocation14], %s2976
          %2978 = dma.done %s2974, 1024
        $region92: #{tpu_custom_call.1} parent=87 // pred_fallthru
          _
      $region88: #{tpu_custom_call.1} parent=5 // pred_fallthru
        _
    $region6: #{tpu_custom_call.1} parent=1 // loop_footer
      %s30 = sadd.s32 1, %s26
    $region7: #{tpu_custom_call.1} parent=1 // loop_footer_branch
      %25 = sbr.rel target = $region3
    $region8: #{tpu_custom_call.1} parent=1 // loop_exit
      _
    %2979 = vsyncpa [#allocation4], 1
    %s2980 = scalar_lea.sflag [#allocation4], 1
    %2981 = vsyncpa %s2980, 1
    %2982 = vsyncpa [#allocation7], 1
    %s2983 = scalar_lea.sflag [#allocation7], 1
    %2984 = vsyncpa %s2983, 1
    %2985 = vsyncpa [#allocation10], 1
    %2986 = vsyncpa [#allocation13], 1
    %2987 = vsyncpa [#allocation5], 1
    %s2988 = scalar_lea.sflag [#allocation5], 1
    %2989 = vsyncpa %s2988, 1

// kernel: tpu_custom_call.1
$region0: #{tpu_custom_call.1}
  #allocation0 [shape = 'u32[]', space=smem, size = 0x4, offset = 0x4, fixed_abs, tag = 'smem constant byte address 0x4 - core index']
  #allocation1 [shape = 'u32[144,128]{1,0:T(1,128)}', space=vmem, size = 0x12000, scoped, tag = 'internal scratch']
  #allocation2 [shape = 'bf16[6,18,128]{2,1,0:T(8,128)(2,1)}', space=vmem, size = 0x9000, scoped, tag = 'scratch operand']
  %s0 = inlined_call_operand.hbm [shape: f32[2,16,16,128], index: 0, kind: input, shape index: {}]
  %s1 = inlined_call_operand.hbm [shape: f32[2,16,16,128], index: 1, kind: input, shape index: {}]
  %s2 = inlined_call_operand.hbm [shape: f32[2,16,16,128], index: 2, kind: input, shape index: {}]
  %s3 = inlined_call_operand.hbm [shape: bf16[128,128], index: 3, kind: input, shape index: {}]
  %s4 = inlined_call_operand.vmem [shape: f32[1,128], index: 4, kind: input, shape index: {}]
  %s5 = inlined_call_operand.hbm [shape: bf16[9,128,128], index: 5, kind: input, shape index: {}]
  %s6 = inlined_call_operand.vmem [shape: f32[1,128], index: 6, kind: input, shape index: {}]
  %s7 = inlined_call_operand.hbm [shape: bf16[128,128], index: 7, kind: input, shape index: {}]
  %s8 = inlined_call_operand.vmem [shape: f32[1,128], index: 8, kind: input, shape index: {}]
  %s9 = inlined_call_operand.hbm [shape: f32[2,16,16,128], index: 9, kind: output, shape index: {}]
  %s10 = sld [smem:[#allocation0]]
  $region93: #{tpu_custom_call.1} parent=0
    _
  %s12 = ssub.s32 1, %s10
  %s13 = scalar_select 0, %s12, %s10
  $region1: #{tpu_custom_call.1} parent=0
    #allocation3 [shape = 'u8[65536]{0}', space=vmem, size = 0x10000, scoped, tag = 'input window, operand 0']
    #allocation4 [shape = 's32[2]{0}', space=sflag, size = 0x8, scoped, tag = 'scoped memory for tpu_custom_call.1']
    #allocation5 [shape = 's32[2]{0}', space=sflag, size = 0x8, scoped, tag = 'scoped memory for tpu_custom_call.1']
    #allocation6 [shape = 'u8[16384]{0}', space=vmem, size = 0x4000, scoped, tag = 'input window, operand 1']
    #allocation7 [shape = 's32[2]{0}', space=sflag, size = 0x8, scoped, tag = 'scoped memory for tpu_custom_call.1']
    #allocation8 [shape = 'u8[16384]{0}', space=vmem, size = 0x4000, scoped, tag = 'input window, operand 2']
    #allocation9 [shape = 'u8[32768]{0}', space=vmem, size = 0x8000, scoped, tag = 'input window, operand 3, single buffered']
    #allocation10 [shape = 's32[1]{0}', space=sflag, size = 0x4, scoped, tag = 'scoped memory for tpu_custom_call.1']
    #allocation11 [shape = 'u8[294912]{0}', space=vmem, size = 0x48000, scoped, tag = 'input window, operand 5, single buffered']
    #allocation12 [shape = 'u8[32768]{0}', space=vmem, size = 0x8000, scoped, tag = 'input window, operand 7, single buffered']
    #allocation13 [shape = 's32[1]{0}', space=sflag, size = 0x4, scoped, tag = 'scoped memory for tpu_custom_call.1']
    #allocation14 [shape = 'u8[65536]{0}', space=vmem, size = 0x10000, scoped, tag = 'output window, operand 0']
    %14 = vsyncpa [#allocation4], 0
    %s15 = scalar_lea.sflag [#allocation4], 1
    %16 = vsyncpa %s15, 0
    %17 = vsyncpa [#allocation7], 0
    %s18 = scalar_lea.sflag [#allocation7], 1
    %19 = vsyncpa %s18, 0
    %20 = vsyncpa [#allocation10], 0
    %21 = vsyncpa [#allocation13], 0
    %22 = vsyncpa [#allocation5], 0
    %s23 = scalar_lea.sflag [#allocation5], 1
    %24 = vsyncpa %s23, 0
    loop: start=0, step=1, limit=10
    $region2: #{tpu_custom_call.1} parent=1 // loop_pre_header
      _
    $region3: #{tpu_custom_call.1} parent=1 // loop_header
      %s26 = sphi 0, %s30
      %p27 = scmp.ge.s32.totalorder %s26, 10
      %s33 = sphi 0, %s45
      %s34 = sphi 0, %s41
      %s35 = sphi 0, %s33
      %s36 = sphi 0, %s34
      %s37 = sphi 0, %s35
      %s38 = sphi 0, %s36
      %s50 = sphi 0, %s52
      %s53 = sphi 0, %s50
      %s54 = sphi 0, %s53
      %s70 = sphi 0, %s54
      %s86 = sphi 0, %s88
      %s89 = sphi 0, %s86
      %s90 = sphi 0, %s89
      %s106 = sphi 0, %s90
      %s122 = sphi 0, %s124
      %s125 = sphi 0, %s122
      %s126 = sphi 0, %s125
      %s142 = sphi 0, %s126
      %s146 = sphi 0, %s146
      %s148 = sphi 0, %s146
      %s149 = sphi 0, %s148
      %s163 = sphi 0, %s149
      %s167 = sphi 0, %s167
      %s169 = sphi 0, %s167
      %s170 = sphi 0, %s169
      %s184 = sphi 0, %s170
      %s188 = sphi 0, %s188
      %s190 = sphi 0, %s188
      %s191 = sphi 0, %s190
      %s205 = sphi 0, %s191
      %s209 = sphi 0, %s209
      %s211 = sphi 0, %s209
      %s212 = sphi 0, %s211
      %s226 = sphi 0, %s212
      %s230 = sphi 0, %s230
      %s232 = sphi 0, %s230
      %s233 = sphi 0, %s232
      %s247 = sphi 0, %s233
      %s251 = sphi 0, %s251
      %s253 = sphi 0, %s251
      %s254 = sphi 0, %s253
      %s268 = sphi 0, %s254
      %s276 = sphi 0, %s278
      %s279 = sphi 0, %s276
      %s280 = sphi 0, %s279
      %s296 = sphi 0, %s280
    $region4: #{tpu_custom_call.1} parent=1 // loop_header_branch
      %29 = sbr.rel (%p27) target = $region8
    $region5: #{tpu_custom_call.1} parent=1 // loop_body
      %s31 = ssub.s32 %s26, 1
      %s32 = ssub.s32 %s26, 2
      %s39 = sadd.s32 1, %s34
      %p40 = scmp.ge.s32.totalorder %s39, 4
      %s41 = scalar_select %p40, 0, %s39
      %s42 = sadd.s32 1, %s33
      %s43 = scalar_select %p40, %s42, %s33
      %p44 = scmp.ge.s32.totalorder %s43, 2
      %s45 = scalar_select %p44, 0, %s43
      %s46 = ssub.s32 %s33, %s45
      %s47 = ssub.s32 %s34, %s41
      %s48 = sor.u32 %s46, %s47
      %p49 = scmp.eq.s32.totalorder %s48, 0
      %s51 = sadd.s32 %s50, 1
      %s52 = scalar_select %p49, %s50, %s51
      %p55 = pneg %p49
      %p56 = scmp.eq.s32.totalorder %s26, 7
      %p57 = por %p55, %p56
      %p58 = scmp.ne.s32.totalorder %s50, %s53
      %p59 = scmp.eq.s32.totalorder %s26, 0
      %p60 = por %p58, %p59
      %p61 = scmp.ne.s32.totalorder %s50, %s53
      %p62 = scmp.eq.s32.totalorder %s31, 7
      %p63 = por %p61, %p62
      %p64 = scmp.ne.s32.totalorder %s53, %s54
      %p65 = scmp.eq.s32.totalorder %s31, 0
      %p66 = por %p64, %p65
      %p67 = scmp.ne.s32.totalorder %s53, %s54
      %p68 = scmp.eq.s32.totalorder %s32, 7
      %p69 = por %p67, %p68
      %p71 = scmp.ne.s32.totalorder %s54, %s70
      %p72 = scmp.eq.s32.totalorder %s32, 0
      %p73 = por %p71, %p72
      %s74 = smul.u32 %s34, 4
      %s75 = ssub.s32 %s74, 1
      %p76 = scmp.gt.s32.totalorder %s75, 0
      %s77 = scalar_select %p76, %s75, 0
      %s78 = smul.u32 %s41, 4
      %s79 = ssub.s32 %s78, 1
      %p80 = scmp.gt.s32.totalorder %s79, 0
      %s81 = scalar_select %p80, %s79, 0
      %s82 = ssub.s32 %s33, %s45
      %s83 = ssub.s32 %s77, %s81
      %s84 = sor.u32 %s82, %s83
      %p85 = scmp.eq.s32.totalorder %s84, 0
      %s87 = sadd.s32 %s86, 1
      %s88 = scalar_select %p85, %s86, %s87
      %p91 = pneg %p85
      %p92 = scmp.eq.s32.totalorder %s26, 7
      %p93 = por %p91, %p92
      %p94 = scmp.ne.s32.totalorder %s86, %s89
      %p95 = scmp.eq.s32.totalorder %s26, 0
      %p96 = por %p94, %p95
      %p97 = scmp.ne.s32.totalorder %s86, %s89
      %p98 = scmp.eq.s32.totalorder %s31, 7
      %p99 = por %p97, %p98
      %p100 = scmp.ne.s32.totalorder %s89, %s90
      %p101 = scmp.eq.s32.totalorder %s31, 0
      %p102 = por %p100, %p101
      %p103 = scmp.ne.s32.totalorder %s89, %s90
      %p104 = scmp.eq.s32.totalorder %s32, 7
      %p105 = por %p103, %p104
      %p107 = scmp.ne.s32.totalorder %s90, %s106
      %p108 = scmp.eq.s32.totalorder %s32, 0
      %p109 = por %p107, %p108
      %s110 = smul.u32 %s34, 4
      %s111 = sadd.s32 %s110, 4
      %p112 = scmp.lt.s32.totalorder %s111, 15
      %s113 = scalar_select %p112, %s111, 15
      %s114 = smul.u32 %s41, 4
      %s115 = sadd.s32 %s114, 4
      %p116 = scmp.lt.s32.totalorder %s115, 15
      %s117 = scalar_select %p116, %s115, 15
      %s118 = ssub.s32 %s33, %s45
      %s119 = ssub.s32 %s113, %s117
      %s120 = sor.u32 %s118, %s119
      %p121 = scmp.eq.s32.totalorder %s120, 0
      %s123 = sadd.s32 %s122, 1
      %s124 = scalar_select %p121, %s122, %s123
      %p127 = pneg %p121
      %p128 = scmp.eq.s32.totalorder %s26, 7
      %p129 = por %p127, %p128
      %p130 = scmp.ne.s32.totalorder %s122, %s125
      %p131 = scmp.eq.s32.totalorder %s26, 0
      %p132 = por %p130, %p131
      %p133 = scmp.ne.s32.totalorder %s122, %s125
      %p134 = scmp.eq.s32.totalorder %s31, 7
      %p135 = por %p133, %p134
      %p136 = scmp.ne.s32.totalorder %s125, %s126
      %p137 = scmp.eq.s32.totalorder %s31, 0
      %p138 = por %p136, %p137
      %p139 = scmp.ne.s32.totalorder %s125, %s126
      %p140 = scmp.eq.s32.totalorder %s32, 7
      %p141 = por %p139, %p140
      %p143 = scmp.ne.s32.totalorder %s126, %s142
      %p144 = scmp.eq.s32.totalorder %s32, 0
      %p145 = por %p143, %p144
      %s147 = sadd.s32 %s146, 1
      %p150 = scmp.eq.s32.totalorder %s26, 7
      %p151 = scmp.ne.s32.totalorder %s146, %s148
      %p152 = scmp.eq.s32.totalorder %s26, 0
      %p153 = por %p151, %p152
      %p154 = scmp.ne.s32.totalorder %s146, %s148
      %p155 = scmp.eq.s32.totalorder %s31, 7
      %p156 = por %p154, %p155
      %p157 = scmp.ne.s32.totalorder %s148, %s149
      %p158 = scmp.eq.s32.totalorder %s31, 0
      %p159 = por %p157, %p158
      %p160 = scmp.ne.s32.totalorder %s148, %s149
      %p161 = scmp.eq.s32.totalorder %s32, 7
      %p162 = por %p160, %p161
      %p164 = scmp.ne.s32.totalorder %s149, %s163
      %p165 = scmp.eq.s32.totalorder %s32, 0
      %p166 = por %p164, %p165
      %s168 = sadd.s32 %s167, 1
      %p171 = scmp.eq.s32.totalorder %s26, 7
      %p172 = scmp.ne.s32.totalorder %s167, %s169
      %p173 = scmp.eq.s32.totalorder %s26, 0
      %p174 = por %p172, %p173
      %p175 = scmp.ne.s32.totalorder %s167, %s169
      %p176 = scmp.eq.s32.totalorder %s31, 7
      %p177 = por %p175, %p176
      %p178 = scmp.ne.s32.totalorder %s169, %s170
      %p179 = scmp.eq.s32.totalorder %s31, 0
      %p180 = por %p178, %p179
      %p181 = scmp.ne.s32.totalorder %s169, %s170
      %p182 = scmp.eq.s32.totalorder %s32, 7
      %p183 = por %p181, %p182
      %p185 = scmp.ne.s32.totalorder %s170, %s184
      %p186 = scmp.eq.s32.totalorder %s32, 0
      %p187 = por %p185, %p186
      %s189 = sadd.s32 %s188, 1
      %p192 = scmp.eq.s32.totalorder %s26, 7
      %p193 = scmp.ne.s32.totalorder %s188, %s190
      %p194 = scmp.eq.s32.totalorder %s26, 0
      %p195 = por %p193, %p194
      %p196 = scmp.ne.s32.totalorder %s188, %s190
      %p197 = scmp.eq.s32.totalorder %s31, 7
      %p198 = por %p196, %p197
      %p199 = scmp.ne.s32.totalorder %s190, %s191
      %p200 = scmp.eq.s32.totalorder %s31, 0
      %p201 = por %p199, %p200
      %p202 = scmp.ne.s32.totalorder %s190, %s191
      %p203 = scmp.eq.s32.totalorder %s32, 7
      %p204 = por %p202, %p203
      %p206 = scmp.ne.s32.totalorder %s191, %s205
      %p207 = scmp.eq.s32.totalorder %s32, 0
      %p208 = por %p206, %p207
      %s210 = sadd.s32 %s209, 1
      %p213 = scmp.eq.s32.totalorder %s26, 7
      %p214 = scmp.ne.s32.totalorder %s209, %s211
      %p215 = scmp.eq.s32.totalorder %s26, 0
      %p216 = por %p214, %p215
      %p217 = scmp.ne.s32.totalorder %s209, %s211
      %p218 = scmp.eq.s32.totalorder %s31, 7
      %p219 = por %p217, %p218
      %p220 = scmp.ne.s32.totalorder %s211, %s212
      %p221 = scmp.eq.s32.totalorder %s31, 0
      %p222 = por %p220, %p221
      %p223 = scmp.ne.s32.totalorder %s211, %s212
      %p224 = scmp.eq.s32.totalorder %s32, 7
      %p225 = por %p223, %p224
      %p227 = scmp.ne.s32.totalorder %s212, %s226
      %p228 = scmp.eq.s32.totalorder %s32, 0
      %p229 = por %p227, %p228
      %s231 = sadd.s32 %s230, 1
      %p234 = scmp.eq.s32.totalorder %s26, 7
      %p235 = scmp.ne.s32.totalorder %s230, %s232
      %p236 = scmp.eq.s32.totalorder %s26, 0
      %p237 = por %p235, %p236
      %p238 = scmp.ne.s32.totalorder %s230, %s232
      %p239 = scmp.eq.s32.totalorder %s31, 7
      %p240 = por %p238, %p239
      %p241 = scmp.ne.s32.totalorder %s232, %s233
      %p242 = scmp.eq.s32.totalorder %s31, 0
      %p243 = por %p241, %p242
      %p244 = scmp.ne.s32.totalorder %s232, %s233
      %p245 = scmp.eq.s32.totalorder %s32, 7
      %p246 = por %p244, %p245
      %p248 = scmp.ne.s32.totalorder %s233, %s247
      %p249 = scmp.eq.s32.totalorder %s32, 0
      %p250 = por %p248, %p249
      %s252 = sadd.s32 %s251, 1
      %p255 = scmp.eq.s32.totalorder %s26, 7
      %p256 = scmp.ne.s32.totalorder %s251, %s253
      %p257 = scmp.eq.s32.totalorder %s26, 0
      %p258 = por %p256, %p257
      %p259 = scmp.ne.s32.totalorder %s251, %s253
      %p260 = scmp.eq.s32.totalorder %s31, 7
      %p261 = por %p259, %p260
      %p262 = scmp.ne.s32.totalorder %s253, %s254
      %p263 = scmp.eq.s32.totalorder %s31, 0
      %p264 = por %p262, %p263
      %p265 = scmp.ne.s32.totalorder %s253, %s254
      %p266 = scmp.eq.s32.totalorder %s32, 7
      %p267 = por %p265, %p266
      %p269 = scmp.ne.s32.totalorder %s254, %s268
      %p270 = scmp.eq.s32.totalorder %s32, 0
      %p271 = por %p269, %p270
      %s272 = ssub.s32 %s33, %s45
      %s273 = ssub.s32 %s34, %s41
      %s274 = sor.u32 %s272, %s273
      %p275 = scmp.eq.s32.totalorder %s274, 0
      %s277 = sadd.s32 %s276, 1
      %s278 = scalar_select %p275, %s276, %s277
      %p281 = pneg %p275
      %p282 = scmp.eq.s32.totalorder %s26, 7
      %p283 = por %p281, %p282
      %p284 = scmp.ne.s32.totalorder %s276, %s279
      %p285 = scmp.eq.s32.totalorder %s26, 0
      %p286 = por %p284, %p285
      %p287 = scmp.ne.s32.totalorder %s276, %s279
      %p288 = scmp.eq.s32.totalorder %s31, 7
      %p289 = por %p287, %p288
      %p290 = scmp.ne.s32.totalorder %s279, %s280
      %p291 = scmp.eq.s32.totalorder %s31, 0
      %p292 = por %p290, %p291
      %p293 = scmp.ne.s32.totalorder %s279, %s280
      %p294 = scmp.eq.s32.totalorder %s32, 7
      %p295 = por %p293, %p294
      %p297 = scmp.ne.s32.totalorder %s280, %s296
      %p298 = scmp.eq.s32.totalorder %s32, 0
      %p299 = por %p297, %p298
      %p300 = scmp.le.s32.totalorder 1, %s26
      %p301 = scmp.lt.s32.totalorder %s26, 9
      %p302 = pnand %p300, %p301
      %p303 = pneg %p302
      // Predicated region
      $region9: #{tpu_custom_call.1} parent=5 // pred_check
        _
      $region10: #{tpu_custom_call.1} parent=5 // pred_check_branch
        %305 = sbr.rel (%p302) target = $region12
      $region11: #{tpu_custom_call.1} parent=5 // pred_region
        %s306 = ssub.s32 %s26, 1
        // Predicated region
        $region13: #{tpu_custom_call.1} parent=11 // pred_check
          %p307 = pneg %p159
        $region14: #{tpu_custom_call.1} parent=11 // pred_check_branch
          %309 = sbr.rel (%p307) target = $region16
        $region15: #{tpu_custom_call.1} parent=11 // pred_region
          %s311 = ssub.s32 1024, 1024
          %312 = vsyncadd [#allocation10], %s311
          %s313 = sshll.u32 [#allocation9], 4
          %s314 = int_to_ptr.vmem [resolvable:$true] %s313
          %319 = dma.hbm_to_vmem [thread:$0]  %s3, 1024, %s314, [#allocation10], 64, 64, 4
        $region16: #{tpu_custom_call.1} parent=11 // pred_fallthru
          _
        // Predicated region
        $region17: #{tpu_custom_call.1} parent=11 // pred_check
          %p320 = pneg %p180
        $region18: #{tpu_custom_call.1} parent=11 // pred_check_branch
          %322 = sbr.rel (%p320) target = $region20
        $region19: #{tpu_custom_call.1} parent=11 // pred_region
          _
        $region20: #{tpu_custom_call.1} parent=11 // pred_fallthru
          _
        // Predicated region
        $region21: #{tpu_custom_call.1} parent=11 // pred_check
          %p323 = pneg %p201
        $region22: #{tpu_custom_call.1} parent=11 // pred_check_branch
          %325 = sbr.rel (%p323) target = $region24
        $region23: #{tpu_custom_call.1} parent=11 // pred_region
          %s327 = ssub.s32 9216, 9216
          %328 = vsyncadd [#allocation10], %s327
          %s329 = sshll.u32 [#allocation11], 4
          %s330 = int_to_ptr.vmem [resolvable:$true] %s329
          %335 = dma.hbm_to_vmem [thread:$0]  %s5, 9216, %s330, [#allocation10], 64, 64, 4
        $region24: #{tpu_custom_call.1} parent=11 // pred_fallthru
          _
        // Predicated region
        $region25: #{tpu_custom_call.1} parent=11 // pred_check
          %p336 = pneg %p222
        $region26: #{tpu_custom_call.1} parent=11 // pred_check_branch
          %338 = sbr.rel (%p336) target = $region28
        $region27: #{tpu_custom_call.1} parent=11 // pred_region
          _
        $region28: #{tpu_custom_call.1} parent=11 // pred_fallthru
          _
        // Predicated region
        $region29: #{tpu_custom_call.1} parent=11 // pred_check
          %p339 = pneg %p243
        $region30: #{tpu_custom_call.1} parent=11 // pred_check_branch
          %341 = sbr.rel (%p339) target = $region32
        $region31: #{tpu_custom_call.1} parent=11 // pred_region
          %s343 = ssub.s32 1024, 1024
          %344 = vsyncadd [#allocation13], %s343
          %s345 = sshll.u32 [#allocation12], 4
          %s346 = int_to_ptr.vmem [resolvable:$true] %s345
          %351 = dma.hbm_to_vmem [thread:$0]  %s7, 1024, %s346, [#allocation13], 64, 64, 4
        $region32: #{tpu_custom_call.1} parent=11 // pred_fallthru
          _
        // Predicated region
        $region33: #{tpu_custom_call.1} parent=11 // pred_check
          %p352 = pneg %p264
        $region34: #{tpu_custom_call.1} parent=11 // pred_check_branch
          %354 = sbr.rel (%p352) target = $region36
        $region35: #{tpu_custom_call.1} parent=11 // pred_region
          _
        $region36: #{tpu_custom_call.1} parent=11 // pred_fallthru
          _
      $region12: #{tpu_custom_call.1} parent=5 // pred_fallthru
        _
      %p355 = scmp.lt.s32.totalorder %s26, 8
      // Predicated region
      $region37: #{tpu_custom_call.1} parent=5 // pred_check
        %p356 = pneg %p355
      $region38: #{tpu_custom_call.1} parent=5 // pred_check_branch
        %358 = sbr.rel (%p356) target = $region40
      $region39: #{tpu_custom_call.1} parent=5 // pred_region
        // Predicated region
        $region41: #{tpu_custom_call.1} parent=39 // pred_check
          %p359 = pneg %p60
        $region42: #{tpu_custom_call.1} parent=39 // pred_check_branch
          %361 = sbr.rel (%p359) target = $region44
        $region43: #{tpu_custom_call.1} parent=39 // pred_region
          %s362 = sand.u32 %s50, 1
          %s363 = scalar_lea.sflag [#allocation4], %s362
          %s364 = sand.u32 %s50, 1
          %s365 = smul.addr %s364, 64
          %s366 = scalar_lea.vmem [#allocation3], %s365
          %s367 = smul.u32 4, %s34
          %s369 = ssub.s32 1024, 1024
          %370 = vsyncadd %s363, %s369
          %s371 = smul.addr %s367, 2
          %s372 = smul.addr %s33, 32
          %s373 = sadd.s32 %s371, %s372
          %s374 = smul.addr %s373, 128
          %s375 = scalar_lea.hbm %s0, %s374
          %s376 = sshll.u32 %s366, 4
          %s377 = int_to_ptr.vmem [resolvable:$true] %s376
          %382 = dma.hbm_to_vmem [thread:$0]  %s375, 1024, %s377, %s363, 128, 128, 8
        $region44: #{tpu_custom_call.1} parent=39 // pred_fallthru
          _
        // Predicated region
        $region45: #{tpu_custom_call.1} parent=39 // pred_check
          %p383 = pneg %p96
        $region46: #{tpu_custom_call.1} parent=39 // pred_check_branch
          %385 = sbr.rel (%p383) target = $region48
        $region47: #{tpu_custom_call.1} parent=39 // pred_region
          %s386 = sand.u32 %s26, 1
          %s387 = scalar_lea.sflag [#allocation7], %s386
          %s388 = sand.u32 %s86, 1
          %s389 = smul.addr %s388, 16
          %s390 = scalar_lea.vmem [#allocation6], %s389
          %s391 = smul.u32 %s34, 4
          %s392 = ssub.s32 %s391, 1
          %p393 = scmp.gt.s32.totalorder %s392, 0
          %s394 = scalar_select %p393, %s392, 0
          %s396 = ssub.s32 256, 256
          %397 = vsyncadd %s387, %s396
          %s398 = smul.addr %s394, 2
          %s399 = smul.addr %s33, 32
          %s400 = sadd.s32 %s398, %s399
          %s401 = smul.addr %s400, 128
          %s402 = scalar_lea.hbm %s1, %s401
          %s403 = sshll.u32 %s390, 4
          %s404 = int_to_ptr.vmem [resolvable:$true] %s403
          %409 = dma.hbm_to_vmem [thread:$0]  %s402, 256, %s404, %s387, 128, 128, 8
        $region48: #{tpu_custom_call.1} parent=39 // pred_fallthru
          _
        // Predicated region
        $region49: #{tpu_custom_call.1} parent=39 // pred_check
          %p410 = pneg %p132
        $region50: #{tpu_custom_call.1} parent=39 // pred_check_branch
          %412 = sbr.rel (%p410) target = $region52
        $region51: #{tpu_custom_call.1} parent=39 // pred_region
          %s413 = sand.u32 %s26, 1
          %s414 = scalar_lea.sflag [#allocation7], %s413
          %s415 = sand.u32 %s122, 1
          %s416 = smul.addr %s415, 16
          %s417 = scalar_lea.vmem [#allocation8], %s416
          %s418 = smul.u32 %s34, 4
          %s419 = sadd.s32 %s418, 4
          %p420 = scmp.lt.s32.totalorder %s419, 15
          %s421 = scalar_select %p420, %s419, 15
          %s423 = ssub.s32 256, 256
          %424 = vsyncadd %s414, %s423
          %s425 = smul.addr %s421, 2
          %s426 = smul.addr %s33, 32
          %s427 = sadd.s32 %s425, %s426
          %s428 = smul.addr %s427, 128
          %s429 = scalar_lea.hbm %s2, %s428
          %s430 = sshll.u32 %s417, 4
          %s431 = int_to_ptr.vmem [resolvable:$true] %s430
          %436 = dma.hbm_to_vmem [thread:$0]  %s429, 256, %s431, %s414, 128, 128, 8
        $region52: #{tpu_custom_call.1} parent=39 // pred_fallthru
          _
      $region40: #{tpu_custom_call.1} parent=5 // pred_fallthru
        _
      %p437 = scmp.le.s32.totalorder 1, %s26
      %p438 = scmp.lt.s32.totalorder %s26, 9
      %p439 = pnand %p437, %p438
      %p440 = pneg %p439
      // Predicated region
      $region53: #{tpu_custom_call.1} parent=5 // pred_check
        _
      $region54: #{tpu_custom_call.1} parent=5 // pred_check_branch
        %442 = sbr.rel (%p439) target = $region56
      $region55: #{tpu_custom_call.1} parent=5 // pred_region
        %s443 = ssub.s32 %s26, 1
        %s444 = sand.u32 %s53, 1
        %s445 = scalar_lea.sflag [#allocation4], %s444
        %s446 = sand.u32 %s53, 1
        %s447 = smul.addr %s446, 64
        %s448 = scalar_lea.vmem [#allocation3], %s447
        // Predicated region
        $region57: #{tpu_custom_call.1} parent=55 // pred_check
          %p449 = pneg %p66
        $region58: #{tpu_custom_call.1} parent=55 // pred_check_branch
          %451 = sbr.rel (%p449) target = $region60
        $region59: #{tpu_custom_call.1} parent=55 // pred_region
          %452 = dma.done %s445, 1024
        $region60: #{tpu_custom_call.1} parent=55 // pred_fallthru
          _
        %s453 = sand.u32 %s31, 1
        %s454 = scalar_lea.sflag [#allocation7], %s453
        %s455 = sand.u32 %s89, 1
        %s456 = smul.addr %s455, 16
        %s457 = scalar_lea.vmem [#allocation6], %s456
        // Predicated region
        $region61: #{tpu_custom_call.1} parent=55 // pred_check
          %p458 = pneg %p102
        $region62: #{tpu_custom_call.1} parent=55 // pred_check_branch
          %460 = sbr.rel (%p458) target = $region64
        $region63: #{tpu_custom_call.1} parent=55 // pred_region
          %461 = dma.done %s454, 256
        $region64: #{tpu_custom_call.1} parent=55 // pred_fallthru
          _
        %s462 = sand.u32 %s31, 1
        %s463 = scalar_lea.sflag [#allocation7], %s462
        %s464 = sand.u32 %s125, 1
        %s465 = smul.addr %s464, 16
        %s466 = scalar_lea.vmem [#allocation8], %s465
        // Predicated region
        $region65: #{tpu_custom_call.1} parent=55 // pred_check
          %p467 = pneg %p138
        $region66: #{tpu_custom_call.1} parent=55 // pred_check_branch
          %469 = sbr.rel (%p467) target = $region68
        $region67: #{tpu_custom_call.1} parent=55 // pred_region
          %470 = dma.done %s463, 256
        $region68: #{tpu_custom_call.1} parent=55 // pred_fallthru
          _
        // Predicated region
        $region69: #{tpu_custom_call.1} parent=55 // pred_check
          %p471 = pneg %p159
        $region70: #{tpu_custom_call.1} parent=55 // pred_check_branch
          %473 = sbr.rel (%p471) target = $region72
        $region71: #{tpu_custom_call.1} parent=55 // pred_region
          %474 = dma.done [#allocation10], 1024
        $region72: #{tpu_custom_call.1} parent=55 // pred_fallthru
          _
        // Predicated region
        $region73: #{tpu_custom_call.1} parent=55 // pred_check
          %p475 = pneg %p201
        $region74: #{tpu_custom_call.1} parent=55 // pred_check_branch
          %477 = sbr.rel (%p475) target = $region76
        $region75: #{tpu_custom_call.1} parent=55 // pred_region
          %478 = dma.done [#allocation10], 9216
        $region76: #{tpu_custom_call.1} parent=55 // pred_fallthru
          _
        // Predicated region
        $region77: #{tpu_custom_call.1} parent=55 // pred_check
          %p479 = pneg %p243
        $region78: #{tpu_custom_call.1} parent=55 // pred_check_branch
          %481 = sbr.rel (%p479) target = $region80
        $region79: #{tpu_custom_call.1} parent=55 // pred_region
          %482 = dma.done [#allocation13], 1024
        $region80: #{tpu_custom_call.1} parent=55 // pred_fallthru
          _
        %s483 = sand.u32 %s53, 1
        %s484 = scalar_lea.sflag [#allocation4], %s483
        %s485 = sand.u32 %s53, 1
        %s486 = smul.addr %s485, 64
        %s487 = scalar_lea.vmem [#allocation3], %s486
        %p488 = pneg %p66
        %p489 = pneg %p63
        %s490 = sand.u32 %s31, 1
        %s491 = scalar_lea.sflag [#allocation7], %s490
        %s492 = sand.u32 %s89, 1
        %s493 = smul.addr %s492, 16
        %s494 = scalar_lea.vmem [#allocation6], %s493
        %p495 = pneg %p102
        %p496 = pneg %p99
        %s497 = sand.u32 %s31, 1
        %s498 = scalar_lea.sflag [#allocation7], %s497
        %s499 = sand.u32 %s125, 1
        %s500 = smul.addr %s499, 16
        %s501 = scalar_lea.vmem [#allocation8], %s500
        %p502 = pneg %p138
        %p503 = pneg %p135
        %p504 = pneg %p159
        %p505 = pneg %p156
        %p506 = pneg %p180
        %p507 = pneg %p177
        %p508 = pneg %p201
        %p509 = pneg %p198
        %p510 = pneg %p222
        %p511 = pneg %p219
        %p512 = pneg %p243
        %p513 = pneg %p240
        %p514 = pneg %p264
        %p515 = pneg %p261
        %p516 = pneg %p292
        %p517 = pneg %p289
        %s518 = sand.u32 %s279, 1
        %s519 = scalar_lea.sflag [#allocation5], %s518
        %s520 = sand.u32 %s279, 1
        %s521 = smul.addr %s520, 64
        %s522 = scalar_lea.vmem [#allocation14], %s521
        %s523 = smul.u32 4, %s36
        %s524 = smul.u32 %s36, 4
        %s525 = ssub.s32 %s524, 1
        %p526 = scmp.gt.s32.totalorder %s525, 0
        %s527 = scalar_select %p526, %s525, 0
        %s528 = smul.u32 %s36, 4
        %s529 = sadd.s32 %s528, 4
        %p530 = scmp.lt.s32.totalorder %s529, 15
        %s531 = scalar_select %p530, %s529, 15
        %s532 = smul.u32 4, %s36
        %v534 = vld [vmem:[%s448] sm:$0xff]
        %v535 = vld [vmem:[%s448 + $0x8] sm:$0xff]
        %v536 = vld [vmem:[%s448 + $0x10] sm:$0xff]
        %v537 = vld [vmem:[%s448 + $0x18] sm:$0xff]
        %v538 = vld [vmem:[%s448 + $0x20] sm:$0xff]
        %v539 = vld [vmem:[%s448 + $0x28] sm:$0xff]
        %v540 = vld [vmem:[%s448 + $0x30] sm:$0xff]
        %v541 = vld [vmem:[%s448 + $0x38] sm:$0xff]
        %v542 = vld [vmem:[%s457] sm:$0xff]
        %v543 = vld [vmem:[%s457 + $0x8] sm:$0xff]
        %v544 = vld [vmem:[%s466] sm:$0xff]
        %v545 = vld [vmem:[%s466 + $0x8] sm:$0xff]
        %v546 = vpack.c.bf16 %v535, %v534
        %v547 = vpack.c.bf16 %v537, %v536
        %v548 = vpack.c.bf16 %v539, %v538
        %v549 = vpack.c.bf16 %v541, %v540
        %v550 = vpack.c.bf16 %v543, %v542
        %v551 = vpack.c.bf16 %v545, %v544
        %v552 = vld [vmem:[#allocation9] sm:$0xf]
        %v553 = vld [vmem:[#allocation9 + $0x4] sm:$0xf]
        %v554 = vld [vmem:[#allocation9 + $0x8] sm:$0xf]
        %v555 = vld [vmem:[#allocation9 + $0xc] sm:$0xf]
        %v556 = vld [vmem:[#allocation9 + $0x10] sm:$0xf]
        %v557 = vld [vmem:[#allocation9 + $0x14] sm:$0xf]
        %v558 = vld [vmem:[#allocation9 + $0x18] sm:$0xf]
        %v559 = vld [vmem:[#allocation9 + $0x1c] sm:$0xf]
        %v560 = vld [vmem:[#allocation9 + $0x20] sm:$0xf]
        %v561 = vld [vmem:[#allocation9 + $0x24] sm:$0xf]
        %v562 = vld [vmem:[#allocation9 + $0x28] sm:$0xf]
        %v563 = vld [vmem:[#allocation9 + $0x2c] sm:$0xf]
        %v564 = vld [vmem:[#allocation9 + $0x30] sm:$0xf]
        %v565 = vld [vmem:[#allocation9 + $0x34] sm:$0xf]
        %v566 = vld [vmem:[#allocation9 + $0x38] sm:$0xf]
        %v567 = vld [vmem:[#allocation9 + $0x3c] sm:$0xf]
        %v568 = vld [vmem:[%s4] sm:$0x1]
        %v570 = vlaneseq
        %v571 = vshrl.u32 %v570, 7
        %v572 = vsub.s32 0, %v571
        %v573 = vrot.slane %v568, %v572
        %v591 = vunpack.c.l.b16 %v552
        %v592 = vunpack.c.l.b16 %v553
        %v593 = vunpack.c.l.b16 %v554
        %v594 = vunpack.c.l.b16 %v555
        %v595 = vunpack.c.l.b16 %v556
        %v596 = vunpack.c.l.b16 %v557
        %v597 = vunpack.c.l.b16 %v558
        %v598 = vunpack.c.l.b16 %v559
        %v599 = vunpack.c.l.b16 %v560
        %v600 = vunpack.c.l.b16 %v561
        %v601 = vunpack.c.l.b16 %v562
        %v602 = vunpack.c.l.b16 %v563
        %v603 = vunpack.c.l.b16 %v564
        %v604 = vunpack.c.l.b16 %v565
        %v605 = vunpack.c.l.b16 %v566
        %v606 = vunpack.c.l.b16 %v567
        %v607 = vpack.c.b16 %v592, %v591
        %v608 = vpack.c.b16 %v594, %v593
        %v609 = vpack.c.b16 %v596, %v595
        %v610 = vpack.c.b16 %v598, %v597
        %v611 = vpack.c.b16 %v600, %v599
        %v612 = vpack.c.b16 %v602, %v601
        %v613 = vpack.c.b16 %v604, %v603
        %v614 = vpack.c.b16 %v606, %v605
        %623 = vmatprep.subr.bf16.mxu0 0
        %624 = vmatpush1.bf16.msra.mxu0 %v607
        %625 = vmatprep.subr.bf16.mxu0 0
        %626 = vmatpush1.bf16.msra.mxu0 %v608
        %627 = vmatprep.subr.bf16.mxu0 0
        %628 = vmatpush1.bf16.msra.mxu0 %v609
        %629 = vmatprep.subr.bf16.mxu0 0
        %630 = vmatpush1.bf16.msra.mxu0 %v610
        %631 = vmatprep.subr.bf16.mxu0 0
        %632 = vmatpush1.bf16.msra.mxu0 %v611
        %633 = vmatprep.subr.bf16.mxu0 0
        %634 = vmatpush1.bf16.msra.mxu0 %v612
        %635 = vmatprep.subr.bf16.mxu0 0
        %636 = vmatpush1.bf16.msra.mxu0 %v613
        %637 = vmatprep.subr.bf16.mxu0 0
        %638 = vmatpush1.bf16.msra.mxu0 %v614
        %639 = vmatprep.subr.bf16.mxu0 0
        %640 = vmatpush1.bf16.msra.mxu0 0
        %641 = vmatprep.subr.bf16.mxu0 0
        %642 = vmatpush1.bf16.msra.mxu0 0
        %643 = vmatprep.subr.bf16.mxu0 0
        %644 = vmatpush1.bf16.msra.mxu0 0
        %645 = vmatprep.subr.bf16.mxu0 0
        %646 = vmatpush1.bf16.msra.mxu0 0
        %647 = vmatprep.subr.bf16.mxu0 0
        %648 = vmatpush1.bf16.msra.mxu0 0
        %649 = vmatprep.subr.bf16.mxu0 0
        %650 = vmatpush1.bf16.msra.mxu0 0
        %651 = vmatprep.subr.bf16.mxu0 0
        %652 = vmatpush1.bf16.msra.mxu0 0
        %653 = vmatprep.subr.bf16.mxu0 0
        %654 = vmatpush1.bf16.msra.mxu0 0
        %655 = vmatprep.mubr.bf16.mxu0 0
        %656 = vmatmul.mubr.bf16.gmra.mrb[0].mxu0 %v546
        %v657 = vpop.f32.mrb[0].mxu0
        %v658 = vadd.f32 %v573, %v657
        %v659 = vpop.f32.mrb[0].mxu0
        %v660 = vpop.f32.mrb[0].mxu0
        %v661 = vadd.f32 %v573, %v660
        %v662 = vpop.f32.mrb[0].mxu0
        %663 = vmatprep.mubr.bf16.mxu0 0
        %664 = vmatmul.mubr.bf16.gmra.mrb[0].mxu0 %v547
        %v665 = vpop.f32.mrb[0].mxu0
        %v666 = vadd.f32 %v573, %v665
        %v667 = vpop.f32.mrb[0].mxu0
        %v668 = vpop.f32.mrb[0].mxu0
        %v669 = vadd.f32 %v573, %v668
        %v670 = vpop.f32.mrb[0].mxu0
        %671 = vmatprep.mubr.bf16.mxu0 0
        %672 = vmatmul.mubr.bf16.gmra.mrb[0].mxu0 %v548
        %v673 = vpop.f32.mrb[0].mxu0
        %v674 = vadd.f32 %v573, %v673
        %v675 = vpop.f32.mrb[0].mxu0
        %v676 = vpop.f32.mrb[0].mxu0
        %v677 = vadd.f32 %v573, %v676
        %v678 = vpop.f32.mrb[0].mxu0
        %679 = vmatprep.mubr.bf16.mxu0 0
        %680 = vmatmul.mubr.bf16.gmra.mrb[0].mxu0 %v549
        %v681 = vpop.f32.mrb[0].mxu0
        %v682 = vadd.f32 %v573, %v681
        %v683 = vpop.f32.mrb[0].mxu0
        %v684 = vpop.f32.mrb[0].mxu0
        %v685 = vadd.f32 %v573, %v684
        %v686 = vpop.f32.mrb[0].mxu0
        %687 = vmatprep.mubr.bf16.mxu0 0
        %688 = vmatmul.mubr.bf16.gmra.mrb[0].mxu0 %v550
        %v689 = vpop.f32.mrb[0].mxu0
        %v690 = vadd.f32 %v573, %v689
        %v691 = vpop.f32.mrb[0].mxu0
        %v692 = vpop.f32.mrb[0].mxu0
        %v693 = vadd.f32 %v573, %v692
        %v694 = vpop.f32.mrb[0].mxu0
        %695 = vmatprep.mubr.bf16.mxu0 0
        %696 = vmatmul.mubr.bf16.gmra.mrb[0].mxu0 %v551
        %v697 = vpop.f32.mrb[0].mxu0
        %v698 = vadd.f32 %v573, %v697
        %v699 = vpop.f32.mrb[0].mxu0
        %v700 = vpop.f32.mrb[0].mxu0
        %v701 = vadd.f32 %v573, %v700
        %v702 = vpop.f32.mrb[0].mxu0
        %703 = vdwg.mxu0
        %v704 = vmax.f32 %v658, 0.0
        %v705 = vmax.f32 %v661, 0.0
        %v706 = vmax.f32 %v666, 0.0
        %v707 = vmax.f32 %v669, 0.0
        %v708 = vmax.f32 %v674, 0.0
        %v709 = vmax.f32 %v677, 0.0
        %v710 = vmax.f32 %v682, 0.0
        %v711 = vmax.f32 %v685, 0.0
        %v712 = vmax.f32 %v690, 0.0
        %v713 = vmax.f32 %v693, 0.0
        %v714 = vmax.f32 %v698, 0.0
        %v715 = vmax.f32 %v701, 0.0
        %v716 = vpack.c.bf16 %v705, %v704
        %v717 = vpack.c.bf16 %v707, %v706
        %v718 = vpack.c.bf16 %v709, %v708
        %v719 = vpack.c.bf16 %v711, %v710
        %v720 = vpack.c.bf16 %v713, %v712
        %v721 = vpack.c.bf16 %v715, %v714
        %p722 = scmp.gt.s32.totalorder %s36, 0
        %s723 = scalar_select %p722, 1, 0
        %v724 = vstv %s723
        %vm725 = vcmp.eq.s32.totalorder %v724, 1
        %v726 = vsel %vm725, %v720, 0
        %p727 = scmp.lt.s32.totalorder %s36, 3
        %s728 = scalar_select %p727, 1, 0
        %v729 = vstv %s728
        %vm730 = vcmp.eq.s32.totalorder %v729, 1
        %v731 = vsel %vm730, %v721, 0
        %v733 = vshrl.u32 %v726, 16
        %v735 = vrot.slane %v733, 7
        %v736 = vshll.u32 %v726, 16
        %v738 = vor.u32 %v735, %v736
        %v740 = vshrl.u32 %v716, 16
        %v742 = vrot.slane %v740, 7
        %v743 = vshll.u32 %v716, 16
        %v745 = vor.u32 %v742, %v743
        %v747 = vshrl.u32 %v717, 16
        %v749 = vrot.slane %v747, 7
        %v750 = vshll.u32 %v717, 16
        %v752 = vor.u32 %v749, %v750
        %v754 = vshrl.u32 %v718, 16
        %v756 = vrot.slane %v754, 7
        %v757 = vshll.u32 %v718, 16
        %v759 = vor.u32 %v756, %v757
        %v761 = vshrl.u32 %v719, 16
        %v763 = vrot.slane %v761, 7
        %v764 = vshll.u32 %v719, 16
        %v766 = vor.u32 %v763, %v764
        %v768 = vshrl.u32 %v731, 16
        %v770 = vrot.slane %v768, 7
        %v771 = vshll.u32 %v731, 16
        %v773 = vor.u32 %v770, %v771
        %vm786 = vcmask 1040384
        %vm787 = vsmask.f32 256
        %vm788 = vmand %vm786, %vm787
        %v789 = vsel %vm788, 0, %v738
        %v790 = vsel %vm788, 0, %v745
        %v791 = vsel %vm788, 0, %v752
        %v792 = vsel %vm788, 0, %v759
        %v793 = vsel %vm788, 0, %v766
        %v794 = vsel %vm788, 0, %v773
        %v795 = vsel %vm788, %v735, 0
        %v796 = vsel %vm788, %v742, 0
        %v797 = vsel %vm788, %v749, 0
        %v798 = vsel %vm788, %v756, 0
        %v799 = vsel %vm788, %v763, 0
        %v800 = vsel %vm788, %v770, 0
        %v813 = vunpack.c.l.b16 %v789
        %v814 = vunpack.c.h.b16 %v789
        %v815 = vunpack.c.l.b16 %v795
        %v816 = vunpack.c.l.b16 %v790
        %v817 = vunpack.c.h.b16 %v790
        %v818 = vunpack.c.l.b16 %v796
        %v819 = vunpack.c.l.b16 %v791
        %v820 = vunpack.c.h.b16 %v791
        %v821 = vunpack.c.l.b16 %v797
        %v822 = vunpack.c.l.b16 %v792
        %v823 = vunpack.c.h.b16 %v792
        %v824 = vunpack.c.l.b16 %v798
        %v825 = vunpack.c.l.b16 %v793
        %v826 = vunpack.c.h.b16 %v793
        %v827 = vunpack.c.l.b16 %v799
        %v828 = vunpack.c.l.b16 %v794
        %v829 = vunpack.c.h.b16 %v794
        %v830 = vunpack.c.l.b16 %v800
        %v831 = vpack.c.b16 %v813, %v813
        %v832 = vpack.c.b16 %v814, %v814
        %v833 = vpack.c.b16 %v815, %v815
        %v834 = vpack.c.b16 %v816, %v816
        %v835 = vpack.c.b16 %v817, %v817
        %v836 = vpack.c.b16 %v818, %v818
        %v837 = vpack.c.b16 %v819, %v819
        %v838 = vpack.c.b16 %v820, %v820
        %v839 = vpack.c.b16 %v821, %v821
        %v840 = vpack.c.b16 %v822, %v822
        %v841 = vpack.c.b16 %v823, %v823
        %v842 = vpack.c.b16 %v824, %v824
        %v843 = vpack.c.b16 %v825, %v825
        %v844 = vpack.c.b16 %v826, %v826
        %v845 = vpack.c.b16 %v827, %v827
        %v846 = vpack.c.b16 %v828, %v828
        %v847 = vpack.c.b16 %v829, %v829
        %v848 = vpack.c.b16 %v830, %v830
        %867 = vst [vmem:[#allocation2] sm:$0xf] %v831
        %868 = vst [vmem:[#allocation2 + $0x4] sm:$0xf] %v832
        %869 = vst [vmem:[#allocation2 + $0x8] sm:$0x1] %v833
        %870 = vst [vmem:[#allocation2 + $0xc] sm:$0xf] %v834
        %871 = vst [vmem:[#allocation2 + $0x10] sm:$0xf] %v835
        %872 = vst [vmem:[#allocation2 + $0x14] sm:$0x1] %v836
        %873 = vst [vmem:[#allocation2 + $0x18] sm:$0xf] %v837
        %874 = vst [vmem:[#allocation2 + $0x1c] sm:$0xf] %v838
        %875 = vst [vmem:[#allocation2 + $0x20] sm:$0x1] %v839
        %876 = vst [vmem:[#allocation2 + $0x24] sm:$0xf] %v840
        %877 = vst [vmem:[#allocation2 + $0x28] sm:$0xf] %v841
        %878 = vst [vmem:[#allocation2 + $0x2c] sm:$0x1] %v842
        %879 = vst [vmem:[#allocation2 + $0x30] sm:$0xf] %v843
        %880 = vst [vmem:[#allocation2 + $0x34] sm:$0xf] %v844
        %881 = vst [vmem:[#allocation2 + $0x38] sm:$0x1] %v845
        %882 = vst [vmem:[#allocation2 + $0x3c] sm:$0xf] %v846
        %883 = vst [vmem:[#allocation2 + $0x40] sm:$0xf] %v847
        %884 = vst [vmem:[#allocation2 + $0x44] sm:$0x1] %v848
        %v885 = vld [vmem:[#allocation2] sm:$0xf]
        %v886 = vld [vmem:[#allocation2 + $0x4] sm:$0xf]
        %v887 = vld [vmem:[#allocation2 + $0xc] sm:$0xf]
        %v888 = vld [vmem:[#allocation2 + $0x10] sm:$0xf]
        %v889 = vld [vmem:[#allocation2 + $0x18] sm:$0xf]
        %v890 = vld [vmem:[#allocation2 + $0x1c] sm:$0xf]
        %v891 = vld [vmem:[#allocation2 + $0x24] sm:$0xf]
        %v892 = vld [vmem:[#allocation2 + $0x28] sm:$0xf]
        %v893 = vld [vmem:[#allocation11] sm:$0xf]
        %v894 = vld [vmem:[#allocation11 + $0x4] sm:$0xf]
        %v895 = vld [vmem:[#allocation11 + $0x8] sm:$0xf]
        %v896 = vld [vmem:[#allocation11 + $0xc] sm:$0xf]
        %v897 = vld [vmem:[#allocation11 + $0x10] sm:$0xf]
        %v898 = vld [vmem:[#allocation11 + $0x14] sm:$0xf]
        %v899 = vld [vmem:[#allocation11 + $0x18] sm:$0xf]
        %v900 = vld [vmem:[#allocation11 + $0x1c] sm:$0xf]
        %v901 = vld [vmem:[#allocation11 + $0x20] sm:$0xf]
        %v902 = vld [vmem:[#allocation11 + $0x24] sm:$0xf]
        %v903 = vld [vmem:[#allocation11 + $0x28] sm:$0xf]
        %v904 = vld [vmem:[#allocation11 + $0x2c] sm:$0xf]
        %v905 = vld [vmem:[#allocation11 + $0x30] sm:$0xf]
        %v906 = vld [vmem:[#allocation11 + $0x34] sm:$0xf]
        %v907 = vld [vmem:[#allocation11 + $0x38] sm:$0xf]
        %v908 = vld [vmem:[#allocation11 + $0x3c] sm:$0xf]
        %v909 = vld [vmem:[#allocation2 + $0x8] sm:$0x1]
        %v910 = vld [vmem:[#allocation2 + $0x14] sm:$0x1]
        %v911 = vld [vmem:[#allocation2 + $0x20] sm:$0x1]
        %v912 = vld [vmem:[#allocation2 + $0x2c] sm:$0x1]
        %vm913 = vsmask.f32 3328
        %vm914 = vsmask.f32 7440
        %vm915 = vmor %vm913, %vm914
        %v917 = vshrl.u32 %v885, 16
        %v919 = vrot.slane %v917, 4
        %v920 = vshll.u32 %v885, 16
        %v922 = vrot.slane %v920, 5
        %v923 = vor.u32 %v919, %v922
        %v924 = vrot.slane %v923, 4
        %v926 = vshll.u32 %v886, 16
        %v928 = vrot.slane %v926, 5
        %v929 = vsel %vm915, %v924, %v928
        %v930 = vshrl.u32 %v886, 16
        %v932 = vrot.slane %v930, 4
        %v933 = vor.u32 %v932, %v928
        %v934 = vrot.slane %v933, 4
        %v936 = vshll.u32 %v909, 16
        %v938 = vrot.slane %v936, 5
        %v939 = vsel %vm915, %v934, %v938
        %v941 = vshrl.u32 %v887, 16
        %v943 = vrot.slane %v941, 4
        %v944 = vshll.u32 %v887, 16
        %v946 = vrot.slane %v944, 5
        %v947 = vor.u32 %v943, %v946
        %v948 = vrot.slane %v947, 4
        %v950 = vshll.u32 %v888, 16
        %v952 = vrot.slane %v950, 5
        %v953 = vsel %vm915, %v948, %v952
        %v954 = vshrl.u32 %v888, 16
        %v956 = vrot.slane %v954, 4
        %v957 = vor.u32 %v956, %v952
        %v958 = vrot.slane %v957, 4
        %v960 = vshll.u32 %v910, 16
        %v962 = vrot.slane %v960, 5
        %v963 = vsel %vm915, %v958, %v962
        %v965 = vshrl.u32 %v889, 16
        %v967 = vrot.slane %v965, 4
        %v968 = vshll.u32 %v889, 16
        %v970 = vrot.slane %v968, 5
        %v971 = vor.u32 %v967, %v970
        %v972 = vrot.slane %v971, 4
        %v974 = vshll.u32 %v890, 16
        %v976 = vrot.slane %v974, 5
        %v977 = vsel %vm915, %v972, %v976
        %v978 = vshrl.u32 %v890, 16
        %v980 = vrot.slane %v978, 4
        %v981 = vor.u32 %v980, %v976
        %v982 = vrot.slane %v981, 4
        %v984 = vshll.u32 %v911, 16
        %v986 = vrot.slane %v984, 5
        %v987 = vsel %vm915, %v982, %v986
        %v989 = vshrl.u32 %v891, 16
        %v991 = vrot.slane %v989, 4
        %v992 = vshll.u32 %v891, 16
        %v994 = vrot.slane %v992, 5
        %v995 = vor.u32 %v991, %v994
        %v996 = vrot.slane %v995, 4
        %v998 = vshll.u32 %v892, 16
        %v1000 = vrot.slane %v998, 5
        %v1001 = vsel %vm915, %v996, %v1000
        %v1002 = vshrl.u32 %v892, 16
        %v1004 = vrot.slane %v1002, 4
        %v1005 = vor.u32 %v1004, %v1000
        %v1006 = vrot.slane %v1005, 4
        %v1008 = vshll.u32 %v912, 16
        %v1010 = vrot.slane %v1008, 5
        %v1011 = vsel %vm915, %v1006, %v1010
        %s1012 = scalar_lea.vmem [#allocation11], 64
        %v1013 = vld [vmem:[%s1012] sm:$0xf]
        %v1014 = vld [vmem:[%s1012 + $0x4] sm:$0xf]
        %v1015 = vld [vmem:[%s1012 + $0x8] sm:$0xf]
        %v1016 = vld [vmem:[%s1012 + $0xc] sm:$0xf]
        %v1017 = vld [vmem:[%s1012 + $0x10] sm:$0xf]
        %v1018 = vld [vmem:[%s1012 + $0x14] sm:$0xf]
        %v1019 = vld [vmem:[%s1012 + $0x18] sm:$0xf]
        %v1020 = vld [vmem:[%s1012 + $0x1c] sm:$0xf]
        %v1021 = vld [vmem:[%s1012 + $0x20] sm:$0xf]
        %v1022 = vld [vmem:[%s1012 + $0x24] sm:$0xf]
        %v1023 = vld [vmem:[%s1012 + $0x28] sm:$0xf]
        %v1024 = vld [vmem:[%s1012 + $0x2c] sm:$0xf]
        %v1025 = vld [vmem:[%s1012 + $0x30] sm:$0xf]
        %v1026 = vld [vmem:[%s1012 + $0x34] sm:$0xf]
        %v1027 = vld [vmem:[%s1012 + $0x38] sm:$0xf]
        %v1028 = vld [vmem:[%s1012 + $0x3c] sm:$0xf]
        %v1029 = vunpack.c.l.b16 %v929
        %v1030 = vunpack.c.l.b16 %v939
        %v1031 = vunpack.c.l.b16 %v953
        %v1032 = vunpack.c.l.b16 %v963
        %v1033 = vunpack.c.l.b16 %v977
        %v1034 = vunpack.c.l.b16 %v987
        %v1035 = vunpack.c.l.b16 %v1001
        %v1036 = vunpack.c.l.b16 %v1011
        %v1037 = vpack.c.b16 %v1030, %v1029
        %v1038 = vpack.c.b16 %v1032, %v1031
        %v1039 = vpack.c.b16 %v1034, %v1033
        %v1040 = vpack.c.b16 %v1036, %v1035
        %v1061 = vunpack.c.l.b16 %v1013
        %v1062 = vunpack.c.l.b16 %v1014
        %v1063 = vunpack.c.l.b16 %v1015
        %v1064 = vunpack.c.l.b16 %v1016
        %v1065 = vunpack.c.l.b16 %v1017
        %v1066 = vunpack.c.l.b16 %v1018
        %v1067 = vunpack.c.l.b16 %v1019
        %v1068 = vunpack.c.l.b16 %v1020
        %v1069 = vunpack.c.l.b16 %v1021
        %v1070 = vunpack.c.l.b16 %v1022
        %v1071 = vunpack.c.l.b16 %v1023
        %v1072 = vunpack.c.l.b16 %v1024
        %v1073 = vunpack.c.l.b16 %v1025
        %v1074 = vunpack.c.l.b16 %v1026
        %v1075 = vunpack.c.l.b16 %v1027
        %v1076 = vunpack.c.l.b16 %v1028
        %v1077 = vpack.c.b16 %v1062, %v1061
        %v1078 = vpack.c.b16 %v1064, %v1063
        %v1079 = vpack.c.b16 %v1066, %v1065
        %v1080 = vpack.c.b16 %v1068, %v1067
        %v1081 = vpack.c.b16 %v1070, %v1069
        %v1082 = vpack.c.b16 %v1072, %v1071
        %v1083 = vpack.c.b16 %v1074, %v1073
        %v1084 = vpack.c.b16 %v1076, %v1075
        %1093 = vmatprep.subr.bf16.mxu0 0
        %1094 = vmatpush1.bf16.msra.mxu0 %v1077
        %1095 = vmatprep.subr.bf16.mxu0 0
        %1096 = vmatpush1.bf16.msra.mxu0 %v1078
        %1097 = vmatprep.subr.bf16.mxu0 0
        %1098 = vmatpush1.bf16.msra.mxu0 %v1079
        %1099 = vmatprep.subr.bf16.mxu0 0
        %1100 = vmatpush1.bf16.msra.mxu0 %v1080
        %1101 = vmatprep.subr.bf16.mxu0 0
        %1102 = vmatpush1.bf16.msra.mxu0 %v1081
        %1103 = vmatprep.subr.bf16.mxu0 0
        %1104 = vmatpush1.bf16.msra.mxu0 %v1082
        %1105 = vmatprep.subr.bf16.mxu0 0
        %1106 = vmatpush1.bf16.msra.mxu0 %v1083
        %1107 = vmatprep.subr.bf16.mxu0 0
        %1108 = vmatpush1.bf16.msra.mxu0 %v1084
        %1109 = vmatprep.subr.bf16.mxu0 0
        %1110 = vmatpush1.bf16.msra.mxu0 0
        %1111 = vmatprep.subr.bf16.mxu0 0
        %1112 = vmatpush1.bf16.msra.mxu0 0
        %1113 = vmatprep.subr.bf16.mxu0 0
        %1114 = vmatpush1.bf16.msra.mxu0 0
        %1115 = vmatprep.subr.bf16.mxu0 0
        %1116 = vmatpush1.bf16.msra.mxu0 0
        %1117 = vmatprep.subr.bf16.mxu0 0
        %1118 = vmatpush1.bf16.msra.mxu0 0
        %1119 = vmatprep.subr.bf16.mxu0 0
        %1120 = vmatpush1.bf16.msra.mxu0 0
        %1121 = vmatprep.subr.bf16.mxu0 0
        %1122 = vmatpush1.bf16.msra.mxu0 0
        %1123 = vmatprep.subr.bf16.mxu0 0
        %1124 = vmatpush1.bf16.msra.mxu0 0
        %1125 = vmatprep.mubr.bf16.mxu0 0
        %1126 = vmatmul.mubr.bf16.gmra.mrb[0].mxu0 %v1037
        %v1127 = vpop.f32.mrb[0].mxu0
        %v1128 = vadd.f32 0.0, %v1127
        %v1129 = vpop.f32.mrb[0].mxu0
        %v1130 = vpop.f32.mrb[0].mxu0
        %v1131 = vadd.f32 0.0, %v1130
        %v1132 = vpop.f32.mrb[0].mxu0
        %1133 = vmatprep.mubr.bf16.mxu0 0
        %1134 = vmatmul.mubr.bf16.gmra.mrb[0].mxu0 %v1038
        %v1135 = vpop.f32.mrb[0].mxu0
        %v1136 = vadd.f32 0.0, %v1135
        %v1137 = vpop.f32.mrb[0].mxu0
        %v1138 = vpop.f32.mrb[0].mxu0
        %v1139 = vadd.f32 0.0, %v1138
        %v1140 = vpop.f32.mrb[0].mxu0
        %1141 = vmatprep.mubr.bf16.mxu0 0
        %1142 = vmatmul.mubr.bf16.gmra.mrb[0].mxu0 %v1039
        %v1143 = vpop.f32.mrb[0].mxu0
        %v1144 = vadd.f32 0.0, %v1143
        %v1145 = vpop.f32.mrb[0].mxu0
        %v1146 = vpop.f32.mrb[0].mxu0
        %v1147 = vadd.f32 0.0, %v1146
        %v1148 = vpop.f32.mrb[0].mxu0
        %1149 = vmatprep.mubr.bf16.mxu0 0
        %1150 = vmatmul.mubr.bf16.gmra.mrb[0].mxu0 %v1040
        %v1151 = vpop.f32.mrb[0].mxu0
        %v1152 = vadd.f32 0.0, %v1151
        %v1153 = vpop.f32.mrb[0].mxu0
        %v1154 = vpop.f32.mrb[0].mxu0
        %v1155 = vadd.f32 0.0, %v1154
        %v1156 = vpop.f32.mrb[0].mxu0
        %1157 = vdwg.mxu0
        %v1166 = vunpack.c.l.b16 %v885
        %v1167 = vunpack.c.l.b16 %v886
        %v1168 = vunpack.c.l.b16 %v887
        %v1169 = vunpack.c.l.b16 %v888
        %v1170 = vunpack.c.l.b16 %v889
        %v1171 = vunpack.c.l.b16 %v890
        %v1172 = vunpack.c.l.b16 %v891
        %v1173 = vunpack.c.l.b16 %v892
        %v1174 = vpack.c.b16 %v1167, %v1166
        %v1175 = vpack.c.b16 %v1169, %v1168
        %v1176 = vpack.c.b16 %v1171, %v1170
        %v1177 = vpack.c.b16 %v1173, %v1172
        %v1198 = vunpack.c.l.b16 %v893
        %v1199 = vunpack.c.l.b16 %v894
        %v1200 = vunpack.c.l.b16 %v895
        %v1201 = vunpack.c.l.b16 %v896
        %v1202 = vunpack.c.l.b16 %v897
        %v1203 = vunpack.c.l.b16 %v898
        %v1204 = vunpack.c.l.b16 %v899
        %v1205 = vunpack.c.l.b16 %v900
        %v1206 = vunpack.c.l.b16 %v901
        %v1207 = vunpack.c.l.b16 %v902
        %v1208 = vunpack.c.l.b16 %v903
        %v1209 = vunpack.c.l.b16 %v904
        %v1210 = vunpack.c.l.b16 %v905
        %v1211 = vunpack.c.l.b16 %v906
        %v1212 = vunpack.c.l.b16 %v907
        %v1213 = vunpack.c.l.b16 %v908
        %v1214 = vpack.c.b16 %v1199, %v1198
        %v1215 = vpack.c.b16 %v1201, %v1200
        %v1216 = vpack.c.b16 %v1203, %v1202
        %v1217 = vpack.c.b16 %v1205, %v1204
        %v1218 = vpack.c.b16 %v1207, %v1206
        %v1219 = vpack.c.b16 %v1209, %v1208
        %v1220 = vpack.c.b16 %v1211, %v1210
        %v1221 = vpack.c.b16 %v1213, %v1212
        %1230 = vmatprep.subr.bf16.mxu0 0
        %1231 = vmatpush1.bf16.msra.mxu0 %v1214
        %1232 = vmatprep.subr.bf16.mxu0 0
        %1233 = vmatpush1.bf16.msra.mxu0 %v1215
        %1234 = vmatprep.subr.bf16.mxu0 0
        %1235 = vmatpush1.bf16.msra.mxu0 %v1216
        %1236 = vmatprep.subr.bf16.mxu0 0
        %1237 = vmatpush1.bf16.msra.mxu0 %v1217
        %1238 = vmatprep.subr.bf16.mxu0 0
        %1239 = vmatpush1.bf16.msra.mxu0 %v1218
        %1240 = vmatprep.subr.bf16.mxu0 0
        %1241 = vmatpush1.bf16.msra.mxu0 %v1219
        %1242 = vmatprep.subr.bf16.mxu0 0
        %1243 = vmatpush1.bf16.msra.mxu0 %v1220
        %1244 = vmatprep.subr.bf16.mxu0 0
        %1245 = vmatpush1.bf16.msra.mxu0 %v1221
        %1246 = vmatprep.subr.bf16.mxu0 0
        %1247 = vmatpush1.bf16.msra.mxu0 0
        %1248 = vmatprep.subr.bf16.mxu0 0
        %1249 = vmatpush1.bf16.msra.mxu0 0
        %1250 = vmatprep.subr.bf16.mxu0 0
        %1251 = vmatpush1.bf16.msra.mxu0 0
        %1252 = vmatprep.subr.bf16.mxu0 0
        %1253 = vmatpush1.bf16.msra.mxu0 0
        %1254 = vmatprep.subr.bf16.mxu0 0
        %1255 = vmatpush1.bf16.msra.mxu0 0
        %1256 = vmatprep.subr.bf16.mxu0 0
        %1257 = vmatpush1.bf16.msra.mxu0 0
        %1258 = vmatprep.subr.bf16.mxu0 0
        %1259 = vmatpush1.bf16.msra.mxu0 0
        %1260 = vmatprep.subr.bf16.mxu0 0
        %1261 = vmatpush1.bf16.msra.mxu0 0
        %1262 = vmatprep.mubr.bf16.mxu0 0
        %1263 = vmatmul.mubr.bf16.gmra.mrb[0].mxu0 %v1174
        %v1264 = vpop.f32.mrb[0].mxu0
        %v1265 = vadd.f32 %v1128, %v1264
        %v1266 = vpop.f32.mrb[0].mxu0
        %v1267 = vpop.f32.mrb[0].mxu0
        %v1268 = vadd.f32 %v1131, %v1267
        %v1269 = vpop.f32.mrb[0].mxu0
        %1270 = vmatprep.mubr.bf16.mxu0 0
        %1271 = vmatmul.mubr.bf16.gmra.mrb[0].mxu0 %v1175
        %v1272 = vpop.f32.mrb[0].mxu0
        %v1273 = vadd.f32 %v1136, %v1272
        %v1274 = vpop.f32.mrb[0].mxu0
        %v1275 = vpop.f32.mrb[0].mxu0
        %v1276 = vadd.f32 %v1139, %v1275
        %v1277 = vpop.f32.mrb[0].mxu0
        %1278 = vmatprep.mubr.bf16.mxu0 0
        %1279 = vmatmul.mubr.bf16.gmra.mrb[0].mxu0 %v1176
        %v1280 = vpop.f32.mrb[0].mxu0
        %v1281 = vadd.f32 %v1144, %v1280
        %v1282 = vpop.f32.mrb[0].mxu0
        %v1283 = vpop.f32.mrb[0].mxu0
        %v1284 = vadd.f32 %v1147, %v1283
        %v1285 = vpop.f32.mrb[0].mxu0
        %1286 = vmatprep.mubr.bf16.mxu0 0
        %1287 = vmatmul.mubr.bf16.gmra.mrb[0].mxu0 %v1177
        %v1288 = vpop.f32.mrb[0].mxu0
        %v1289 = vadd.f32 %v1152, %v1288
        %v1290 = vpop.f32.mrb[0].mxu0
        %v1291 = vpop.f32.mrb[0].mxu0
        %v1292 = vadd.f32 %v1155, %v1291
        %v1293 = vpop.f32.mrb[0].mxu0
        %1294 = vdwg.mxu0
        %v1295 = vld [vmem:[#allocation2] sm:$0xe]
        %v1296 = vld [vmem:[#allocation2 + $0xc] sm:$0xe]
        %v1297 = vld [vmem:[#allocation2 + $0x18] sm:$0xe]
        %v1298 = vld [vmem:[#allocation2 + $0x24] sm:$0xe]
        %vm1307 = vcmask 1042432
        %vm1308 = vcmask 1046532
        %vm1309 = vmor %vm1307, %vm1308
        %v1310 = vrot.slane %v1295, 5
        %v1311 = vrot.slane %v1310, 4
        %v1312 = vrot.slane %v886, 5
        %v1313 = vsel %vm1309, %v1311, %v1312
        %v1314 = vrot.slane %v1312, 4
        %v1315 = vrot.slane %v909, 5
        %v1316 = vsel %vm1309, %v1314, %v1315
        %v1317 = vrot.slane %v1296, 5
        %v1318 = vrot.slane %v1317, 4
        %v1319 = vrot.slane %v888, 5
        %v1320 = vsel %vm1309, %v1318, %v1319
        %v1321 = vrot.slane %v1319, 4
        %v1322 = vrot.slane %v910, 5
        %v1323 = vsel %vm1309, %v1321, %v1322
        %v1324 = vrot.slane %v1297, 5
        %v1325 = vrot.slane %v1324, 4
        %v1326 = vrot.slane %v890, 5
        %v1327 = vsel %vm1309, %v1325, %v1326
        %v1328 = vrot.slane %v1326, 4
        %v1329 = vrot.slane %v911, 5
        %v1330 = vsel %vm1309, %v1328, %v1329
        %v1331 = vrot.slane %v1298, 5
        %v1332 = vrot.slane %v1331, 4
        %v1333 = vrot.slane %v892, 5
        %v1334 = vsel %vm1309, %v1332, %v1333
        %v1335 = vrot.slane %v1333, 4
        %v1336 = vrot.slane %v912, 5
        %v1337 = vsel %vm1309, %v1335, %v1336
        %s1338 = scalar_lea.vmem [#allocation11], 128
        %v1339 = vld [vmem:[%s1338] sm:$0xf]
        %v1340 = vld [vmem:[%s1338 + $0x4] sm:$0xf]
        %v1341 = vld [vmem:[%s1338 + $0x8] sm:$0xf]
        %v1342 = vld [vmem:[%s1338 + $0xc] sm:$0xf]
        %v1343 = vld [vmem:[%s1338 + $0x10] sm:$0xf]
        %v1344 = vld [vmem:[%s1338 + $0x14] sm:$0xf]
        %v1345 = vld [vmem:[%s1338 + $0x18] sm:$0xf]
        %v1346 = vld [vmem:[%s1338 + $0x1c] sm:$0xf]
        %v1347 = vld [vmem:[%s1338 + $0x20] sm:$0xf]
        %v1348 = vld [vmem:[%s1338 + $0x24] sm:$0xf]
        %v1349 = vld [vmem:[%s1338 + $0x28] sm:$0xf]
        %v1350 = vld [vmem:[%s1338 + $0x2c] sm:$0xf]
        %v1351 = vld [vmem:[%s1338 + $0x30] sm:$0xf]
        %v1352 = vld [vmem:[%s1338 + $0x34] sm:$0xf]
        %v1353 = vld [vmem:[%s1338 + $0x38] sm:$0xf]
        %v1354 = vld [vmem:[%s1338 + $0x3c] sm:$0xf]
        %v1355 = vunpack.c.l.b16 %v1313
        %v1356 = vunpack.c.l.b16 %v1316
        %v1357 = vunpack.c.l.b16 %v1320
        %v1358 = vunpack.c.l.b16 %v1323
        %v1359 = vunpack.c.l.b16 %v1327
        %v1360 = vunpack.c.l.b16 %v1330
        %v1361 = vunpack.c.l.b16 %v1334
        %v1362 = vunpack.c.l.b16 %v1337
        %v1363 = vpack.c.b16 %v1356, %v1355
        %v1364 = vpack.c.b16 %v1358, %v1357
        %v1365 = vpack.c.b16 %v1360, %v1359
        %v1366 = vpack.c.b16 %v1362, %v1361
        %v1387 = vunpack.c.l.b16 %v1339
        %v1388 = vunpack.c.l.b16 %v1340
        %v1389 = vunpack.c.l.b16 %v1341
        %v1390 = vunpack.c.l.b16 %v1342
        %v1391 = vunpack.c.l.b16 %v1343
        %v1392 = vunpack.c.l.b16 %v1344
        %v1393 = vunpack.c.l.b16 %v1345
        %v1394 = vunpack.c.l.b16 %v1346
        %v1395 = vunpack.c.l.b16 %v1347
        %v1396 = vunpack.c.l.b16 %v1348
        %v1397 = vunpack.c.l.b16 %v1349
        %v1398 = vunpack.c.l.b16 %v1350
        %v1399 = vunpack.c.l.b16 %v1351
        %v1400 = vunpack.c.l.b16 %v1352
        %v1401 = vunpack.c.l.b16 %v1353
        %v1402 = vunpack.c.l.b16 %v1354
        %v1403 = vpack.c.b16 %v1388, %v1387
        %v1404 = vpack.c.b16 %v1390, %v1389
        %v1405 = vpack.c.b16 %v1392, %v1391
        %v1406 = vpack.c.b16 %v1394, %v1393
        %v1407 = vpack.c.b16 %v1396, %v1395
        %v1408 = vpack.c.b16 %v1398, %v1397
        %v1409 = vpack.c.b16 %v1400, %v1399
        %v1410 = vpack.c.b16 %v1402, %v1401
        %1419 = vmatprep.subr.bf16.mxu0 0
        %1420 = vmatpush1.bf16.msra.mxu0 %v1403
        %1421 = vmatprep.subr.bf16.mxu0 0
        %1422 = vmatpush1.bf16.msra.mxu0 %v1404
        %1423 = vmatprep.subr.bf16.mxu0 0
        %1424 = vmatpush1.bf16.msra.mxu0 %v1405
        %1425 = vmatprep.subr.bf16.mxu0 0
        %1426 = vmatpush1.bf16.msra.mxu0 %v1406
        %1427 = vmatprep.subr.bf16.mxu0 0
        %1428 = vmatpush1.bf16.msra.mxu0 %v1407
        %1429 = vmatprep.subr.bf16.mxu0 0
        %1430 = vmatpush1.bf16.msra.mxu0 %v1408
        %1431 = vmatprep.subr.bf16.mxu0 0
        %1432 = vmatpush1.bf16.msra.mxu0 %v1409
        %1433 = vmatprep.subr.bf16.mxu0 0
        %1434 = vmatpush1.bf16.msra.mxu0 %v1410
        %1435 = vmatprep.subr.bf16.mxu0 0
        %1436 = vmatpush1.bf16.msra.mxu0 0
        %1437 = vmatprep.subr.bf16.mxu0 0
        %1438 = vmatpush1.bf16.msra.mxu0 0
        %1439 = vmatprep.subr.bf16.mxu0 0
        %1440 = vmatpush1.bf16.msra.mxu0 0
        %1441 = vmatprep.subr.bf16.mxu0 0
        %1442 = vmatpush1.bf16.msra.mxu0 0
        %1443 = vmatprep.subr.bf16.mxu0 0
        %1444 = vmatpush1.bf16.msra.mxu0 0
        %1445 = vmatprep.subr.bf16.mxu0 0
        %1446 = vmatpush1.bf16.msra.mxu0 0
        %1447 = vmatprep.subr.bf16.mxu0 0
        %1448 = vmatpush1.bf16.msra.mxu0 0
        %1449 = vmatprep.subr.bf16.mxu0 0
        %1450 = vmatpush1.bf16.msra.mxu0 0
        %1451 = vmatprep.mubr.bf16.mxu0 0
        %1452 = vmatmul.mubr.bf16.gmra.mrb[0].mxu0 %v1363
        %v1453 = vpop.f32.mrb[0].mxu0
        %v1454 = vadd.f32 0.0, %v1453
        %v1455 = vpop.f32.mrb[0].mxu0
        %v1456 = vpop.f32.mrb[0].mxu0
        %v1457 = vadd.f32 0.0, %v1456
        %v1458 = vpop.f32.mrb[0].mxu0
        %1459 = vmatprep.mubr.bf16.mxu0 0
        %1460 = vmatmul.mubr.bf16.gmra.mrb[0].mxu0 %v1364
        %v1461 = vpop.f32.mrb[0].mxu0
        %v1462 = vadd.f32 0.0, %v1461
        %v1463 = vpop.f32.mrb[0].mxu0
        %v1464 = vpop.f32.mrb[0].mxu0
        %v1465 = vadd.f32 0.0, %v1464
        %v1466 = vpop.f32.mrb[0].mxu0
        %1467 = vmatprep.mubr.bf16.mxu0 0
        %1468 = vmatmul.mubr.bf16.gmra.mrb[0].mxu0 %v1365
        %v1469 = vpop.f32.mrb[0].mxu0
        %v1470 = vadd.f32 0.0, %v1469
        %v1471 = vpop.f32.mrb[0].mxu0
        %v1472 = vpop.f32.mrb[0].mxu0
        %v1473 = vadd.f32 0.0, %v1472
        %v1474 = vpop.f32.mrb[0].mxu0
        %1475 = vmatprep.mubr.bf16.mxu0 0
        %1476 = vmatmul.mubr.bf16.gmra.mrb[0].mxu0 %v1366
        %v1477 = vpop.f32.mrb[0].mxu0
        %v1478 = vadd.f32 0.0, %v1477
        %v1479 = vpop.f32.mrb[0].mxu0
        %v1480 = vpop.f32.mrb[0].mxu0
        %v1481 = vadd.f32 0.0, %v1480
        %v1482 = vpop.f32.mrb[0].mxu0
        %1483 = vdwg.mxu0
        %v1484 = vadd.f32 %v1265, %v1454
        %v1485 = vadd.f32 %v1268, %v1457
        %v1486 = vadd.f32 %v1273, %v1462
        %v1487 = vadd.f32 %v1276, %v1465
        %v1488 = vadd.f32 %v1281, %v1470
        %v1489 = vadd.f32 %v1284, %v1473
        %v1490 = vadd.f32 %v1289, %v1478
        %v1491 = vadd.f32 %v1292, %v1481
        %s1492 = scalar_lea.vmem [#allocation2], 12
        %v1493 = vld [vmem:[%s1492] sm:$0xf]
        %v1494 = vld [vmem:[%s1492 + $0x4] sm:$0xf]
        %v1495 = vld [vmem:[%s1492 + $0xc] sm:$0xf]
        %v1496 = vld [vmem:[%s1492 + $0x10] sm:$0xf]
        %v1497 = vld [vmem:[%s1492 + $0x18] sm:$0xf]
        %v1498 = vld [vmem:[%s1492 + $0x1c] sm:$0xf]
        %v1499 = vld [vmem:[%s1492 + $0x24] sm:$0xf]
        %v1500 = vld [vmem:[%s1492 + $0x28] sm:$0xf]
        %s1501 = scalar_lea.vmem [#allocation11], 192
        %v1502 = vld [vmem:[%s1501] sm:$0xf]
        %v1503 = vld [vmem:[%s1501 + $0x4] sm:$0xf]
        %v1504 = vld [vmem:[%s1501 + $0x8] sm:$0xf]
        %v1505 = vld [vmem:[%s1501 + $0xc] sm:$0xf]
        %v1506 = vld [vmem:[%s1501 + $0x10] sm:$0xf]
        %v1507 = vld [vmem:[%s1501 + $0x14] sm:$0xf]
        %v1508 = vld [vmem:[%s1501 + $0x18] sm:$0xf]
        %v1509 = vld [vmem:[%s1501 + $0x1c] sm:$0xf]
        %v1510 = vld [vmem:[%s1501 + $0x20] sm:$0xf]
        %v1511 = vld [vmem:[%s1501 + $0x24] sm:$0xf]
        %v1512 = vld [vmem:[%s1501 + $0x28] sm:$0xf]
        %v1513 = vld [vmem:[%s1501 + $0x2c] sm:$0xf]
        %v1514 = vld [vmem:[%s1501 + $0x30] sm:$0xf]
        %v1515 = vld [vmem:[%s1501 + $0x34] sm:$0xf]
        %v1516 = vld [vmem:[%s1501 + $0x38] sm:$0xf]
        %v1517 = vld [vmem:[%s1501 + $0x3c] sm:$0xf]
        %v1526 = vunpack.c.l.b16 %v1493
        %v1527 = vunpack.c.l.b16 %v1494
        %v1528 = vunpack.c.l.b16 %v1495
        %v1529 = vunpack.c.l.b16 %v1496
        %v1530 = vunpack.c.l.b16 %v1497
        %v1531 = vunpack.c.l.b16 %v1498
        %v1532 = vunpack.c.l.b16 %v1499
        %v1533 = vunpack.c.l.b16 %v1500
        %v1534 = vpack.c.b16 %v1527, %v1526
        %v1535 = vpack.c.b16 %v1529, %v1528
        %v1536 = vpack.c.b16 %v1531, %v1530
        %v1537 = vpack.c.b16 %v1533, %v1532
        %v1558 = vunpack.c.l.b16 %v1502
        %v1559 = vunpack.c.l.b16 %v1503
        %v1560 = vunpack.c.l.b16 %v1504
        %v1561 = vunpack.c.l.b16 %v1505
        %v1562 = vunpack.c.l.b16 %v1506
        %v1563 = vunpack.c.l.b16 %v1507
        %v1564 = vunpack.c.l.b16 %v1508
        %v1565 = vunpack.c.l.b16 %v1509
        %v1566 = vunpack.c.l.b16 %v1510
        %v1567 = vunpack.c.l.b16 %v1511
        %v1568 = vunpack.c.l.b16 %v1512
        %v1569 = vunpack.c.l.b16 %v1513
        %v1570 = vunpack.c.l.b16 %v1514
        %v1571 = vunpack.c.l.b16 %v1515
        %v1572 = vunpack.c.l.b16 %v1516
        %v1573 = vunpack.c.l.b16 %v1517
        %v1574 = vpack.c.b16 %v1559, %v1558
        %v1575 = vpack.c.b16 %v1561, %v1560
        %v1576 = vpack.c.b16 %v1563, %v1562
        %v1577 = vpack.c.b16 %v1565, %v1564
        %v1578 = vpack.c.b16 %v1567, %v1566
        %v1579 = vpack.c.b16 %v1569, %v1568
        %v1580 = vpack.c.b16 %v1571, %v1570
        %v1581 = vpack.c.b16 %v1573, %v1572
        %1590 = vmatprep.subr.bf16.mxu0 0
        %1591 = vmatpush1.bf16.msra.mxu0 %v1574
        %1592 = vmatprep.subr.bf16.mxu0 0
        %1593 = vmatpush1.bf16.msra.mxu0 %v1575
        %1594 = vmatprep.subr.bf16.mxu0 0
        %1595 = vmatpush1.bf16.msra.mxu0 %v1576
        %1596 = vmatprep.subr.bf16.mxu0 0
        %1597 = vmatpush1.bf16.msra.mxu0 %v1577
        %1598 = vmatprep.subr.bf16.mxu0 0
        %1599 = vmatpush1.bf16.msra.mxu0 %v1578
        %1600 = vmatprep.subr.bf16.mxu0 0
        %1601 = vmatpush1.bf16.msra.mxu0 %v1579
        %1602 = vmatprep.subr.bf16.mxu0 0
        %1603 = vmatpush1.bf16.msra.mxu0 %v1580
        %1604 = vmatprep.subr.bf16.mxu0 0
        %1605 = vmatpush1.bf16.msra.mxu0 %v1581
        %1606 = vmatprep.subr.bf16.mxu0 0
        %1607 = vmatpush1.bf16.msra.mxu0 0
        %1608 = vmatprep.subr.bf16.mxu0 0
        %1609 = vmatpush1.bf16.msra.mxu0 0
        %1610 = vmatprep.subr.bf16.mxu0 0
        %1611 = vmatpush1.bf16.msra.mxu0 0
        %1612 = vmatprep.subr.bf16.mxu0 0
        %1613 = vmatpush1.bf16.msra.mxu0 0
        %1614 = vmatprep.subr.bf16.mxu0 0
        %1615 = vmatpush1.bf16.msra.mxu0 0
        %1616 = vmatprep.subr.bf16.mxu0 0
        %1617 = vmatpush1.bf16.msra.mxu0 0
        %1618 = vmatprep.subr.bf16.mxu0 0
        %1619 = vmatpush1.bf16.msra.mxu0 0
        %1620 = vmatprep.subr.bf16.mxu0 0
        %1621 = vmatpush1.bf16.msra.mxu0 0
        %1622 = vmatprep.mubr.bf16.mxu0 0
        %1623 = vmatmul.mubr.bf16.gmra.mrb[0].mxu0 %v1534
        %v1624 = vpop.f32.mrb[0].mxu0
        %v1625 = vadd.f32 0.0, %v1624
        %v1626 = vpop.f32.mrb[0].mxu0
        %v1627 = vpop.f32.mrb[0].mxu0
        %v1628 = vadd.f32 0.0, %v1627
        %v1629 = vpop.f32.mrb[0].mxu0
        %1630 = vmatprep.mubr.bf16.mxu0 0
        %1631 = vmatmul.mubr.bf16.gmra.mrb[0].mxu0 %v1535
        %v1632 = vpop.f32.mrb[0].mxu0
        %v1633 = vadd.f32 0.0, %v1632
        %v1634 = vpop.f32.mrb[0].mxu0
        %v1635 = vpop.f32.mrb[0].mxu0
        %v1636 = vadd.f32 0.0, %v1635
        %v1637 = vpop.f32.mrb[0].mxu0
        %1638 = vmatprep.mubr.bf16.mxu0 0
        %1639 = vmatmul.mubr.bf16.gmra.mrb[0].mxu0 %v1536
        %v1640 = vpop.f32.mrb[0].mxu0
        %v1641 = vadd.f32 0.0, %v1640
        %v1642 = vpop.f32.mrb[0].mxu0
        %v1643 = vpop.f32.mrb[0].mxu0
        %v1644 = vadd.f32 0.0, %v1643
        %v1645 = vpop.f32.mrb[0].mxu0
        %1646 = vmatprep.mubr.bf16.mxu0 0
        %1647 = vmatmul.mubr.bf16.gmra.mrb[0].mxu0 %v1537
        %v1648 = vpop.f32.mrb[0].mxu0
        %v1649 = vadd.f32 0.0, %v1648
        %v1650 = vpop.f32.mrb[0].mxu0
        %v1651 = vpop.f32.mrb[0].mxu0
        %v1652 = vadd.f32 0.0, %v1651
        %v1653 = vpop.f32.mrb[0].mxu0
        %1654 = vdwg.mxu0
        %v1655 = vadd.f32 %v1484, %v1625
        %v1656 = vadd.f32 %v1485, %v1628
        %v1657 = vadd.f32 %v1486, %v1633
        %v1658 = vadd.f32 %v1487, %v1636
        %v1659 = vadd.f32 %v1488, %v1641
        %v1660 = vadd.f32 %v1489, %v1644
        %v1661 = vadd.f32 %v1490, %v1649
        %v1662 = vadd.f32 %v1491, %v1652
        %v1663 = vld [vmem:[%s1492] sm:$0xf]
        %v1664 = vld [vmem:[%s1492 + $0x4] sm:$0xf]
        %v1665 = vld [vmem:[%s1492 + $0x8] sm:$0x1]
        %v1666 = vld [vmem:[%s1492 + $0xc] sm:$0xf]
        %v1667 = vld [vmem:[%s1492 + $0x10] sm:$0xf]
        %v1668 = vld [vmem:[%s1492 + $0x14] sm:$0x1]
        %v1669 = vld [vmem:[%s1492 + $0x18] sm:$0xf]
        %v1670 = vld [vmem:[%s1492 + $0x1c] sm:$0xf]
        %v1671 = vld [vmem:[%s1492 + $0x20] sm:$0x1]
        %v1672 = vld [vmem:[%s1492 + $0x24] sm:$0xf]
        %v1673 = vld [vmem:[%s1492 + $0x28] sm:$0xf]
        %v1674 = vld [vmem:[%s1492 + $0x2c] sm:$0x1]
        %v1676 = vshrl.u32 %v1663, 16
        %v1678 = vrot.slane %v1676, 4
        %v1679 = vshll.u32 %v1663, 16
        %v1681 = vrot.slane %v1679, 5
        %v1682 = vor.u32 %v1678, %v1681
        %v1683 = vrot.slane %v1682, 4
        %v1685 = vshll.u32 %v1664, 16
        %v1687 = vrot.slane %v1685, 5
        %v1688 = vsel %vm915, %v1683, %v1687
        %v1689 = vshrl.u32 %v1664, 16
        %v1691 = vrot.slane %v1689, 4
        %v1692 = vor.u32 %v1691, %v1687
        %v1693 = vrot.slane %v1692, 4
        %v1695 = vshll.u32 %v1665, 16
        %v1697 = vrot.slane %v1695, 5
        %v1698 = vsel %vm915, %v1693, %v1697
        %v1700 = vshrl.u32 %v1666, 16
        %v1702 = vrot.slane %v1700, 4
        %v1703 = vshll.u32 %v1666, 16
        %v1705 = vrot.slane %v1703, 5
        %v1706 = vor.u32 %v1702, %v1705
        %v1707 = vrot.slane %v1706, 4
        %v1709 = vshll.u32 %v1667, 16
        %v1711 = vrot.slane %v1709, 5
        %v1712 = vsel %vm915, %v1707, %v1711
        %v1713 = vshrl.u32 %v1667, 16
        %v1715 = vrot.slane %v1713, 4
        %v1716 = vor.u32 %v1715, %v1711
        %v1717 = vrot.slane %v1716, 4
        %v1719 = vshll.u32 %v1668, 16
        %v1721 = vrot.slane %v1719, 5
        %v1722 = vsel %vm915, %v1717, %v1721
        %v1724 = vshrl.u32 %v1669, 16
        %v1726 = vrot.slane %v1724, 4
        %v1727 = vshll.u32 %v1669, 16
        %v1729 = vrot.slane %v1727, 5
        %v1730 = vor.u32 %v1726, %v1729
        %v1731 = vrot.slane %v1730, 4
        %v1733 = vshll.u32 %v1670, 16
        %v1735 = vrot.slane %v1733, 5
        %v1736 = vsel %vm915, %v1731, %v1735
        %v1737 = vshrl.u32 %v1670, 16
        %v1739 = vrot.slane %v1737, 4
        %v1740 = vor.u32 %v1739, %v1735
        %v1741 = vrot.slane %v1740, 4
        %v1743 = vshll.u32 %v1671, 16
        %v1745 = vrot.slane %v1743, 5
        %v1746 = vsel %vm915, %v1741, %v1745
        %v1748 = vshrl.u32 %v1672, 16
        %v1750 = vrot.slane %v1748, 4
        %v1751 = vshll.u32 %v1672, 16
        %v1753 = vrot.slane %v1751, 5
        %v1754 = vor.u32 %v1750, %v1753
        %v1755 = vrot.slane %v1754, 4
        %v1757 = vshll.u32 %v1673, 16
        %v1759 = vrot.slane %v1757, 5
        %v1760 = vsel %vm915, %v1755, %v1759
        %v1761 = vshrl.u32 %v1673, 16
        %v1763 = vrot.slane %v1761, 4
        %v1764 = vor.u32 %v1763, %v1759
        %v1765 = vrot.slane %v1764, 4
        %v1767 = vshll.u32 %v1674, 16
        %v1769 = vrot.slane %v1767, 5
        %v1770 = vsel %vm915, %v1765, %v1769
        %s1771 = scalar_lea.vmem [#allocation11], 256
        %v1772 = vld [vmem:[%s1771] sm:$0xf]
        %v1773 = vld [vmem:[%s1771 + $0x4] sm:$0xf]
        %v1774 = vld [vmem:[%s1771 + $0x8] sm:$0xf]
        %v1775 = vld [vmem:[%s1771 + $0xc] sm:$0xf]
        %v1776 = vld [vmem:[%s1771 + $0x10] sm:$0xf]
        %v1777 = vld [vmem:[%s1771 + $0x14] sm:$0xf]
        %v1778 = vld [vmem:[%s1771 + $0x18] sm:$0xf]
        %v1779 = vld [vmem:[%s1771 + $0x1c] sm:$0xf]
        %v1780 = vld [vmem:[%s1771 + $0x20] sm:$0xf]
        %v1781 = vld [vmem:[%s1771 + $0x24] sm:$0xf]
        %v1782 = vld [vmem:[%s1771 + $0x28] sm:$0xf]
        %v1783 = vld [vmem:[%s1771 + $0x2c] sm:$0xf]
        %v1784 = vld [vmem:[%s1771 + $0x30] sm:$0xf]
        %v1785 = vld [vmem:[%s1771 + $0x34] sm:$0xf]
        %v1786 = vld [vmem:[%s1771 + $0x38] sm:$0xf]
        %v1787 = vld [vmem:[%s1771 + $0x3c] sm:$0xf]
        %v1788 = vunpack.c.l.b16 %v1688
        %v1789 = vunpack.c.l.b16 %v1698
        %v1790 = vunpack.c.l.b16 %v1712
        %v1791 = vunpack.c.l.b16 %v1722
        %v1792 = vunpack.c.l.b16 %v1736
        %v1793 = vunpack.c.l.b16 %v1746
        %v1794 = vunpack.c.l.b16 %v1760
        %v1795 = vunpack.c.l.b16 %v1770
        %v1796 = vpack.c.b16 %v1789, %v1788
        %v1797 = vpack.c.b16 %v1791, %v1790
        %v1798 = vpack.c.b16 %v1793, %v1792
        %v1799 = vpack.c.b16 %v1795, %v1794
        %v1820 = vunpack.c.l.b16 %v1772
        %v1821 = vunpack.c.l.b16 %v1773
        %v1822 = vunpack.c.l.b16 %v1774
        %v1823 = vunpack.c.l.b16 %v1775
        %v1824 = vunpack.c.l.b16 %v1776
        %v1825 = vunpack.c.l.b16 %v1777
        %v1826 = vunpack.c.l.b16 %v1778
        %v1827 = vunpack.c.l.b16 %v1779
        %v1828 = vunpack.c.l.b16 %v1780
        %v1829 = vunpack.c.l.b16 %v1781
        %v1830 = vunpack.c.l.b16 %v1782
        %v1831 = vunpack.c.l.b16 %v1783
        %v1832 = vunpack.c.l.b16 %v1784
        %v1833 = vunpack.c.l.b16 %v1785
        %v1834 = vunpack.c.l.b16 %v1786
        %v1835 = vunpack.c.l.b16 %v1787
        %v1836 = vpack.c.b16 %v1821, %v1820
        %v1837 = vpack.c.b16 %v1823, %v1822
        %v1838 = vpack.c.b16 %v1825, %v1824
        %v1839 = vpack.c.b16 %v1827, %v1826
        %v1840 = vpack.c.b16 %v1829, %v1828
        %v1841 = vpack.c.b16 %v1831, %v1830
        %v1842 = vpack.c.b16 %v1833, %v1832
        %v1843 = vpack.c.b16 %v1835, %v1834
        %1852 = vmatprep.subr.bf16.mxu0 0
        %1853 = vmatpush1.bf16.msra.mxu0 %v1836
        %1854 = vmatprep.subr.bf16.mxu0 0
        %1855 = vmatpush1.bf16.msra.mxu0 %v1837
        %1856 = vmatprep.subr.bf16.mxu0 0
        %1857 = vmatpush1.bf16.msra.mxu0 %v1838
        %1858 = vmatprep.subr.bf16.mxu0 0
        %1859 = vmatpush1.bf16.msra.mxu0 %v1839
        %1860 = vmatprep.subr.bf16.mxu0 0
        %1861 = vmatpush1.bf16.msra.mxu0 %v1840
        %1862 = vmatprep.subr.bf16.mxu0 0
        %1863 = vmatpush1.bf16.msra.mxu0 %v1841
        %1864 = vmatprep.subr.bf16.mxu0 0
        %1865 = vmatpush1.bf16.msra.mxu0 %v1842
        %1866 = vmatprep.subr.bf16.mxu0 0
        %1867 = vmatpush1.bf16.msra.mxu0 %v1843
        %1868 = vmatprep.subr.bf16.mxu0 0
        %1869 = vmatpush1.bf16.msra.mxu0 0
        %1870 = vmatprep.subr.bf16.mxu0 0
        %1871 = vmatpush1.bf16.msra.mxu0 0
        %1872 = vmatprep.subr.bf16.mxu0 0
        %1873 = vmatpush1.bf16.msra.mxu0 0
        %1874 = vmatprep.subr.bf16.mxu0 0
        %1875 = vmatpush1.bf16.msra.mxu0 0
        %1876 = vmatprep.subr.bf16.mxu0 0
        %1877 = vmatpush1.bf16.msra.mxu0 0
        %1878 = vmatprep.subr.bf16.mxu0 0
        %1879 = vmatpush1.bf16.msra.mxu0 0
        %1880 = vmatprep.subr.bf16.mxu0 0
        %1881 = vmatpush1.bf16.msra.mxu0 0
        %1882 = vmatprep.subr.bf16.mxu0 0
        %1883 = vmatpush1.bf16.msra.mxu0 0
        %1884 = vmatprep.mubr.bf16.mxu0 0
        %1885 = vmatmul.mubr.bf16.gmra.mrb[0].mxu0 %v1796
        %v1886 = vpop.f32.mrb[0].mxu0
        %v1887 = vadd.f32 0.0, %v1886
        %v1888 = vpop.f32.mrb[0].mxu0
        %v1889 = vpop.f32.mrb[0].mxu0
        %v1890 = vadd.f32 0.0, %v1889
        %v1891 = vpop.f32.mrb[0].mxu0
        %1892 = vmatprep.mubr.bf16.mxu0 0
        %1893 = vmatmul.mubr.bf16.gmra.mrb[0].mxu0 %v1797
        %v1894 = vpop.f32.mrb[0].mxu0
        %v1895 = vadd.f32 0.0, %v1894
        %v1896 = vpop.f32.mrb[0].mxu0
        %v1897 = vpop.f32.mrb[0].mxu0
        %v1898 = vadd.f32 0.0, %v1897
        %v1899 = vpop.f32.mrb[0].mxu0
        %1900 = vmatprep.mubr.bf16.mxu0 0
        %1901 = vmatmul.mubr.bf16.gmra.mrb[0].mxu0 %v1798
        %v1902 = vpop.f32.mrb[0].mxu0
        %v1903 = vadd.f32 0.0, %v1902
        %v1904 = vpop.f32.mrb[0].mxu0
        %v1905 = vpop.f32.mrb[0].mxu0
        %v1906 = vadd.f32 0.0, %v1905
        %v1907 = vpop.f32.mrb[0].mxu0
        %1908 = vmatprep.mubr.bf16.mxu0 0
        %1909 = vmatmul.mubr.bf16.gmra.mrb[0].mxu0 %v1799
        %v1910 = vpop.f32.mrb[0].mxu0
        %v1911 = vadd.f32 0.0, %v1910
        %v1912 = vpop.f32.mrb[0].mxu0
        %v1913 = vpop.f32.mrb[0].mxu0
        %v1914 = vadd.f32 0.0, %v1913
        %v1915 = vpop.f32.mrb[0].mxu0
        %1916 = vdwg.mxu0
        %v1917 = vadd.f32 %v1655, %v1887
        %v1918 = vadd.f32 %v1656, %v1890
        %v1919 = vadd.f32 %v1657, %v1895
        %v1920 = vadd.f32 %v1658, %v1898
        %v1921 = vadd.f32 %v1659, %v1903
        %v1922 = vadd.f32 %v1660, %v1906
        %v1923 = vadd.f32 %v1661, %v1911
        %v1924 = vadd.f32 %v1662, %v1914
        %v1925 = vld [vmem:[%s1492] sm:$0xe]
        %v1926 = vld [vmem:[%s1492 + $0xc] sm:$0xe]
        %v1927 = vld [vmem:[%s1492 + $0x18] sm:$0xe]
        %v1928 = vld [vmem:[%s1492 + $0x24] sm:$0xe]
        %v1941 = vrot.slane %v1925, 5
        %v1942 = vrot.slane %v1941, 4
        %v1943 = vrot.slane %v1664, 5
        %v1944 = vsel %vm1309, %v1942, %v1943
        %v1945 = vrot.slane %v1943, 4
        %v1946 = vrot.slane %v1665, 5
        %v1947 = vsel %vm1309, %v1945, %v1946
        %v1948 = vrot.slane %v1926, 5
        %v1949 = vrot.slane %v1948, 4
        %v1950 = vrot.slane %v1667, 5
        %v1951 = vsel %vm1309, %v1949, %v1950
        %v1952 = vrot.slane %v1950, 4
        %v1953 = vrot.slane %v1668, 5
        %v1954 = vsel %vm1309, %v1952, %v1953
        %v1955 = vrot.slane %v1927, 5
        %v1956 = vrot.slane %v1955, 4
        %v1957 = vrot.slane %v1670, 5
        %v1958 = vsel %vm1309, %v1956, %v1957
        %v1959 = vrot.slane %v1957, 4
        %v1960 = vrot.slane %v1671, 5
        %v1961 = vsel %vm1309, %v1959, %v1960
        %v1962 = vrot.slane %v1928, 5
        %v1963 = vrot.slane %v1962, 4
        %v1964 = vrot.slane %v1673, 5
        %v1965 = vsel %vm1309, %v1963, %v1964
        %v1966 = vrot.slane %v1964, 4
        %v1967 = vrot.slane %v1674, 5
        %v1968 = vsel %vm1309, %v1966, %v1967
        %s1969 = scalar_lea.vmem [#allocation11], 320
        %v1970 = vld [vmem:[%s1969] sm:$0xf]
        %v1971 = vld [vmem:[%s1969 + $0x4] sm:$0xf]
        %v1972 = vld [vmem:[%s1969 + $0x8] sm:$0xf]
        %v1973 = vld [vmem:[%s1969 + $0xc] sm:$0xf]
        %v1974 = vld [vmem:[%s1969 + $0x10] sm:$0xf]
        %v1975 = vld [vmem:[%s1969 + $0x14] sm:$0xf]
        %v1976 = vld [vmem:[%s1969 + $0x18] sm:$0xf]
        %v1977 = vld [vmem:[%s1969 + $0x1c] sm:$0xf]
        %v1978 = vld [vmem:[%s1969 + $0x20] sm:$0xf]
        %v1979 = vld [vmem:[%s1969 + $0x24] sm:$0xf]
        %v1980 = vld [vmem:[%s1969 + $0x28] sm:$0xf]
        %v1981 = vld [vmem:[%s1969 + $0x2c] sm:$0xf]
        %v1982 = vld [vmem:[%s1969 + $0x30] sm:$0xf]
        %v1983 = vld [vmem:[%s1969 + $0x34] sm:$0xf]
        %v1984 = vld [vmem:[%s1969 + $0x38] sm:$0xf]
        %v1985 = vld [vmem:[%s1969 + $0x3c] sm:$0xf]
        %v1986 = vunpack.c.l.b16 %v1944
        %v1987 = vunpack.c.l.b16 %v1947
        %v1988 = vunpack.c.l.b16 %v1951
        %v1989 = vunpack.c.l.b16 %v1954
        %v1990 = vunpack.c.l.b16 %v1958
        %v1991 = vunpack.c.l.b16 %v1961
        %v1992 = vunpack.c.l.b16 %v1965
        %v1993 = vunpack.c.l.b16 %v1968
        %v1994 = vpack.c.b16 %v1987, %v1986
        %v1995 = vpack.c.b16 %v1989, %v1988
        %v1996 = vpack.c.b16 %v1991, %v1990
        %v1997 = vpack.c.b16 %v1993, %v1992
        %v2018 = vunpack.c.l.b16 %v1970
        %v2019 = vunpack.c.l.b16 %v1971
        %v2020 = vunpack.c.l.b16 %v1972
        %v2021 = vunpack.c.l.b16 %v1973
        %v2022 = vunpack.c.l.b16 %v1974
        %v2023 = vunpack.c.l.b16 %v1975
        %v2024 = vunpack.c.l.b16 %v1976
        %v2025 = vunpack.c.l.b16 %v1977
        %v2026 = vunpack.c.l.b16 %v1978
        %v2027 = vunpack.c.l.b16 %v1979
        %v2028 = vunpack.c.l.b16 %v1980
        %v2029 = vunpack.c.l.b16 %v1981
        %v2030 = vunpack.c.l.b16 %v1982
        %v2031 = vunpack.c.l.b16 %v1983
        %v2032 = vunpack.c.l.b16 %v1984
        %v2033 = vunpack.c.l.b16 %v1985
        %v2034 = vpack.c.b16 %v2019, %v2018
        %v2035 = vpack.c.b16 %v2021, %v2020
        %v2036 = vpack.c.b16 %v2023, %v2022
        %v2037 = vpack.c.b16 %v2025, %v2024
        %v2038 = vpack.c.b16 %v2027, %v2026
        %v2039 = vpack.c.b16 %v2029, %v2028
        %v2040 = vpack.c.b16 %v2031, %v2030
        %v2041 = vpack.c.b16 %v2033, %v2032
        %2050 = vmatprep.subr.bf16.mxu0 0
        %2051 = vmatpush1.bf16.msra.mxu0 %v2034
        %2052 = vmatprep.subr.bf16.mxu0 0
        %2053 = vmatpush1.bf16.msra.mxu0 %v2035
        %2054 = vmatprep.subr.bf16.mxu0 0
        %2055 = vmatpush1.bf16.msra.mxu0 %v2036
        %2056 = vmatprep.subr.bf16.mxu0 0
        %2057 = vmatpush1.bf16.msra.mxu0 %v2037
        %2058 = vmatprep.subr.bf16.mxu0 0
        %2059 = vmatpush1.bf16.msra.mxu0 %v2038
        %2060 = vmatprep.subr.bf16.mxu0 0
        %2061 = vmatpush1.bf16.msra.mxu0 %v2039
        %2062 = vmatprep.subr.bf16.mxu0 0
        %2063 = vmatpush1.bf16.msra.mxu0 %v2040
        %2064 = vmatprep.subr.bf16.mxu0 0
        %2065 = vmatpush1.bf16.msra.mxu0 %v2041
        %2066 = vmatprep.subr.bf16.mxu0 0
        %2067 = vmatpush1.bf16.msra.mxu0 0
        %2068 = vmatprep.subr.bf16.mxu0 0
        %2069 = vmatpush1.bf16.msra.mxu0 0
        %2070 = vmatprep.subr.bf16.mxu0 0
        %2071 = vmatpush1.bf16.msra.mxu0 0
        %2072 = vmatprep.subr.bf16.mxu0 0
        %2073 = vmatpush1.bf16.msra.mxu0 0
        %2074 = vmatprep.subr.bf16.mxu0 0
        %2075 = vmatpush1.bf16.msra.mxu0 0
        %2076 = vmatprep.subr.bf16.mxu0 0
        %2077 = vmatpush1.bf16.msra.mxu0 0
        %2078 = vmatprep.subr.bf16.mxu0 0
        %2079 = vmatpush1.bf16.msra.mxu0 0
        %2080 = vmatprep.subr.bf16.mxu0 0
        %2081 = vmatpush1.bf16.msra.mxu0 0
        %2082 = vmatprep.mubr.bf16.mxu0 0
        %2083 = vmatmul.mubr.bf16.gmra.mrb[0].mxu0 %v1994
        %v2084 = vpop.f32.mrb[0].mxu0
        %v2085 = vadd.f32 0.0, %v2084
        %v2086 = vpop.f32.mrb[0].mxu0
        %v2087 = vpop.f32.mrb[0].mxu0
        %v2088 = vadd.f32 0.0, %v2087
        %v2089 = vpop.f32.mrb[0].mxu0
        %2090 = vmatprep.mubr.bf16.mxu0 0
        %2091 = vmatmul.mubr.bf16.gmra.mrb[0].mxu0 %v1995
        %v2092 = vpop.f32.mrb[0].mxu0
        %v2093 = vadd.f32 0.0, %v2092
        %v2094 = vpop.f32.mrb[0].mxu0
        %v2095 = vpop.f32.mrb[0].mxu0
        %v2096 = vadd.f32 0.0, %v2095
        %v2097 = vpop.f32.mrb[0].mxu0
        %2098 = vmatprep.mubr.bf16.mxu0 0
        %2099 = vmatmul.mubr.bf16.gmra.mrb[0].mxu0 %v1996
        %v2100 = vpop.f32.mrb[0].mxu0
        %v2101 = vadd.f32 0.0, %v2100
        %v2102 = vpop.f32.mrb[0].mxu0
        %v2103 = vpop.f32.mrb[0].mxu0
        %v2104 = vadd.f32 0.0, %v2103
        %v2105 = vpop.f32.mrb[0].mxu0
        %2106 = vmatprep.mubr.bf16.mxu0 0
        %2107 = vmatmul.mubr.bf16.gmra.mrb[0].mxu0 %v1997
        %v2108 = vpop.f32.mrb[0].mxu0
        %v2109 = vadd.f32 0.0, %v2108
        %v2110 = vpop.f32.mrb[0].mxu0
        %v2111 = vpop.f32.mrb[0].mxu0
        %v2112 = vadd.f32 0.0, %v2111
        %v2113 = vpop.f32.mrb[0].mxu0
        %2114 = vdwg.mxu0
        %v2115 = vadd.f32 %v1917, %v2085
        %v2116 = vadd.f32 %v1918, %v2088
        %v2117 = vadd.f32 %v1919, %v2093
        %v2118 = vadd.f32 %v1920, %v2096
        %v2119 = vadd.f32 %v1921, %v2101
        %v2120 = vadd.f32 %v1922, %v2104
        %v2121 = vadd.f32 %v1923, %v2109
        %v2122 = vadd.f32 %v1924, %v2112
        %s2123 = scalar_lea.vmem [#allocation2], 24
        %v2124 = vld [vmem:[%s2123] sm:$0xf]
        %v2125 = vld [vmem:[%s2123 + $0x4] sm:$0xf]
        %v2126 = vld [vmem:[%s2123 + $0xc] sm:$0xf]
        %v2127 = vld [vmem:[%s2123 + $0x10] sm:$0xf]
        %v2128 = vld [vmem:[%s2123 + $0x18] sm:$0xf]
        %v2129 = vld [vmem:[%s2123 + $0x1c] sm:$0xf]
        %v2130 = vld [vmem:[%s2123 + $0x24] sm:$0xf]
        %v2131 = vld [vmem:[%s2123 + $0x28] sm:$0xf]
        %s2132 = scalar_lea.vmem [#allocation11], 384
        %v2133 = vld [vmem:[%s2132] sm:$0xf]
        %v2134 = vld [vmem:[%s2132 + $0x4] sm:$0xf]
        %v2135 = vld [vmem:[%s2132 + $0x8] sm:$0xf]
        %v2136 = vld [vmem:[%s2132 + $0xc] sm:$0xf]
        %v2137 = vld [vmem:[%s2132 + $0x10] sm:$0xf]
        %v2138 = vld [vmem:[%s2132 + $0x14] sm:$0xf]
        %v2139 = vld [vmem:[%s2132 + $0x18] sm:$0xf]
        %v2140 = vld [vmem:[%s2132 + $0x1c] sm:$0xf]
        %v2141 = vld [vmem:[%s2132 + $0x20] sm:$0xf]
        %v2142 = vld [vmem:[%s2132 + $0x24] sm:$0xf]
        %v2143 = vld [vmem:[%s2132 + $0x28] sm:$0xf]
        %v2144 = vld [vmem:[%s2132 + $0x2c] sm:$0xf]
        %v2145 = vld [vmem:[%s2132 + $0x30] sm:$0xf]
        %v2146 = vld [vmem:[%s2132 + $0x34] sm:$0xf]
        %v2147 = vld [vmem:[%s2132 + $0x38] sm:$0xf]
        %v2148 = vld [vmem:[%s2132 + $0x3c] sm:$0xf]
        %v2157 = vunpack.c.l.b16 %v2124
        %v2158 = vunpack.c.l.b16 %v2125
        %v2159 = vunpack.c.l.b16 %v2126
        %v2160 = vunpack.c.l.b16 %v2127
        %v2161 = vunpack.c.l.b16 %v2128
        %v2162 = vunpack.c.l.b16 %v2129
        %v2163 = vunpack.c.l.b16 %v2130
        %v2164 = vunpack.c.l.b16 %v2131
        %v2165 = vpack.c.b16 %v2158, %v2157
        %v2166 = vpack.c.b16 %v2160, %v2159
        %v2167 = vpack.c.b16 %v2162, %v2161
        %v2168 = vpack.c.b16 %v2164, %v2163
        %v2189 = vunpack.c.l.b16 %v2133
        %v2190 = vunpack.c.l.b16 %v2134
        %v2191 = vunpack.c.l.b16 %v2135
        %v2192 = vunpack.c.l.b16 %v2136
        %v2193 = vunpack.c.l.b16 %v2137
        %v2194 = vunpack.c.l.b16 %v2138
        %v2195 = vunpack.c.l.b16 %v2139
        %v2196 = vunpack.c.l.b16 %v2140
        %v2197 = vunpack.c.l.b16 %v2141
        %v2198 = vunpack.c.l.b16 %v2142
        %v2199 = vunpack.c.l.b16 %v2143
        %v2200 = vunpack.c.l.b16 %v2144
        %v2201 = vunpack.c.l.b16 %v2145
        %v2202 = vunpack.c.l.b16 %v2146
        %v2203 = vunpack.c.l.b16 %v2147
        %v2204 = vunpack.c.l.b16 %v2148
        %v2205 = vpack.c.b16 %v2190, %v2189
        %v2206 = vpack.c.b16 %v2192, %v2191
        %v2207 = vpack.c.b16 %v2194, %v2193
        %v2208 = vpack.c.b16 %v2196, %v2195
        %v2209 = vpack.c.b16 %v2198, %v2197
        %v2210 = vpack.c.b16 %v2200, %v2199
        %v2211 = vpack.c.b16 %v2202, %v2201
        %v2212 = vpack.c.b16 %v2204, %v2203
        %2221 = vmatprep.subr.bf16.mxu0 0
        %2222 = vmatpush1.bf16.msra.mxu0 %v2205
        %2223 = vmatprep.subr.bf16.mxu0 0
        %2224 = vmatpush1.bf16.msra.mxu0 %v2206
        %2225 = vmatprep.subr.bf16.mxu0 0
        %2226 = vmatpush1.bf16.msra.mxu0 %v2207
        %2227 = vmatprep.subr.bf16.mxu0 0
        %2228 = vmatpush1.bf16.msra.mxu0 %v2208
        %2229 = vmatprep.subr.bf16.mxu0 0
        %2230 = vmatpush1.bf16.msra.mxu0 %v2209
        %2231 = vmatprep.subr.bf16.mxu0 0
        %2232 = vmatpush1.bf16.msra.mxu0 %v2210
        %2233 = vmatprep.subr.bf16.mxu0 0
        %2234 = vmatpush1.bf16.msra.mxu0 %v2211
        %2235 = vmatprep.subr.bf16.mxu0 0
        %2236 = vmatpush1.bf16.msra.mxu0 %v2212
        %2237 = vmatprep.subr.bf16.mxu0 0
        %2238 = vmatpush1.bf16.msra.mxu0 0
        %2239 = vmatprep.subr.bf16.mxu0 0
        %2240 = vmatpush1.bf16.msra.mxu0 0
        %2241 = vmatprep.subr.bf16.mxu0 0
        %2242 = vmatpush1.bf16.msra.mxu0 0
        %2243 = vmatprep.subr.bf16.mxu0 0
        %2244 = vmatpush1.bf16.msra.mxu0 0
        %2245 = vmatprep.subr.bf16.mxu0 0
        %2246 = vmatpush1.bf16.msra.mxu0 0
        %2247 = vmatprep.subr.bf16.mxu0 0
        %2248 = vmatpush1.bf16.msra.mxu0 0
        %2249 = vmatprep.subr.bf16.mxu0 0
        %2250 = vmatpush1.bf16.msra.mxu0 0
        %2251 = vmatprep.subr.bf16.mxu0 0
        %2252 = vmatpush1.bf16.msra.mxu0 0
        %2253 = vmatprep.mubr.bf16.mxu0 0
        %2254 = vmatmul.mubr.bf16.gmra.mrb[0].mxu0 %v2165
        %v2255 = vpop.f32.mrb[0].mxu0
        %v2256 = vadd.f32 0.0, %v2255
        %v2257 = vpop.f32.mrb[0].mxu0
        %v2258 = vpop.f32.mrb[0].mxu0
        %v2259 = vadd.f32 0.0, %v2258
        %v2260 = vpop.f32.mrb[0].mxu0
        %2261 = vmatprep.mubr.bf16.mxu0 0
        %2262 = vmatmul.mubr.bf16.gmra.mrb[0].mxu0 %v2166
        %v2263 = vpop.f32.mrb[0].mxu0
        %v2264 = vadd.f32 0.0, %v2263
        %v2265 = vpop.f32.mrb[0].mxu0
        %v2266 = vpop.f32.mrb[0].mxu0
        %v2267 = vadd.f32 0.0, %v2266
        %v2268 = vpop.f32.mrb[0].mxu0
        %2269 = vmatprep.mubr.bf16.mxu0 0
        %2270 = vmatmul.mubr.bf16.gmra.mrb[0].mxu0 %v2167
        %v2271 = vpop.f32.mrb[0].mxu0
        %v2272 = vadd.f32 0.0, %v2271
        %v2273 = vpop.f32.mrb[0].mxu0
        %v2274 = vpop.f32.mrb[0].mxu0
        %v2275 = vadd.f32 0.0, %v2274
        %v2276 = vpop.f32.mrb[0].mxu0
        %2277 = vmatprep.mubr.bf16.mxu0 0
        %2278 = vmatmul.mubr.bf16.gmra.mrb[0].mxu0 %v2168
        %v2279 = vpop.f32.mrb[0].mxu0
        %v2280 = vadd.f32 0.0, %v2279
        %v2281 = vpop.f32.mrb[0].mxu0
        %v2282 = vpop.f32.mrb[0].mxu0
        %v2283 = vadd.f32 0.0, %v2282
        %v2284 = vpop.f32.mrb[0].mxu0
        %2285 = vdwg.mxu0
        %v2286 = vadd.f32 %v2115, %v2256
        %v2287 = vadd.f32 %v2116, %v2259
        %v2288 = vadd.f32 %v2117, %v2264
        %v2289 = vadd.f32 %v2118, %v2267
        %v2290 = vadd.f32 %v2119, %v2272
        %v2291 = vadd.f32 %v2120, %v2275
        %v2292 = vadd.f32 %v2121, %v2280
        %v2293 = vadd.f32 %v2122, %v2283
        %v2294 = vld [vmem:[%s2123] sm:$0xf]
        %v2295 = vld [vmem:[%s2123 + $0x4] sm:$0xf]
        %v2296 = vld [vmem:[%s2123 + $0x8] sm:$0x1]
        %v2297 = vld [vmem:[%s2123 + $0xc] sm:$0xf]
        %v2298 = vld [vmem:[%s2123 + $0x10] sm:$0xf]
        %v2299 = vld [vmem:[%s2123 + $0x14] sm:$0x1]
        %v2300 = vld [vmem:[%s2123 + $0x18] sm:$0xf]
        %v2301 = vld [vmem:[%s2123 + $0x1c] sm:$0xf]
        %v2302 = vld [vmem:[%s2123 + $0x20] sm:$0x1]
        %v2303 = vld [vmem:[%s2123 + $0x24] sm:$0xf]
        %v2304 = vld [vmem:[%s2123 + $0x28] sm:$0xf]
        %v2305 = vld [vmem:[%s2123 + $0x2c] sm:$0x1]
        %v2307 = vshrl.u32 %v2294, 16
        %v2309 = vrot.slane %v2307, 4
        %v2310 = vshll.u32 %v2294, 16
        %v2312 = vrot.slane %v2310, 5
        %v2313 = vor.u32 %v2309, %v2312
        %v2314 = vrot.slane %v2313, 4
        %v2316 = vshll.u32 %v2295, 16
        %v2318 = vrot.slane %v2316, 5
        %v2319 = vsel %vm915, %v2314, %v2318
        %v2320 = vshrl.u32 %v2295, 16
        %v2322 = vrot.slane %v2320, 4
        %v2323 = vor.u32 %v2322, %v2318
        %v2324 = vrot.slane %v2323, 4
        %v2326 = vshll.u32 %v2296, 16
        %v2328 = vrot.slane %v2326, 5
        %v2329 = vsel %vm915, %v2324, %v2328
        %v2331 = vshrl.u32 %v2297, 16
        %v2333 = vrot.slane %v2331, 4
        %v2334 = vshll.u32 %v2297, 16
        %v2336 = vrot.slane %v2334, 5
        %v2337 = vor.u32 %v2333, %v2336
        %v2338 = vrot.slane %v2337, 4
        %v2340 = vshll.u32 %v2298, 16
        %v2342 = vrot.slane %v2340, 5
        %v2343 = vsel %vm915, %v2338, %v2342
        %v2344 = vshrl.u32 %v2298, 16
        %v2346 = vrot.slane %v2344, 4
        %v2347 = vor.u32 %v2346, %v2342
        %v2348 = vrot.slane %v2347, 4
        %v2350 = vshll.u32 %v2299, 16
        %v2352 = vrot.slane %v2350, 5
        %v2353 = vsel %vm915, %v2348, %v2352
        %v2355 = vshrl.u32 %v2300, 16
        %v2357 = vrot.slane %v2355, 4
        %v2358 = vshll.u32 %v2300, 16
        %v2360 = vrot.slane %v2358, 5
        %v2361 = vor.u32 %v2357, %v2360
        %v2362 = vrot.slane %v2361, 4
        %v2364 = vshll.u32 %v2301, 16
        %v2366 = vrot.slane %v2364, 5
        %v2367 = vsel %vm915, %v2362, %v2366
        %v2368 = vshrl.u32 %v2301, 16
        %v2370 = vrot.slane %v2368, 4
        %v2371 = vor.u32 %v2370, %v2366
        %v2372 = vrot.slane %v2371, 4
        %v2374 = vshll.u32 %v2302, 16
        %v2376 = vrot.slane %v2374, 5
        %v2377 = vsel %vm915, %v2372, %v2376
        %v2379 = vshrl.u32 %v2303, 16
        %v2381 = vrot.slane %v2379, 4
        %v2382 = vshll.u32 %v2303, 16
        %v2384 = vrot.slane %v2382, 5
        %v2385 = vor.u32 %v2381, %v2384
        %v2386 = vrot.slane %v2385, 4
        %v2388 = vshll.u32 %v2304, 16
        %v2390 = vrot.slane %v2388, 5
        %v2391 = vsel %vm915, %v2386, %v2390
        %v2392 = vshrl.u32 %v2304, 16
        %v2394 = vrot.slane %v2392, 4
        %v2395 = vor.u32 %v2394, %v2390
        %v2396 = vrot.slane %v2395, 4
        %v2398 = vshll.u32 %v2305, 16
        %v2400 = vrot.slane %v2398, 5
        %v2401 = vsel %vm915, %v2396, %v2400
        %s2402 = scalar_lea.vmem [#allocation11], 448
        %v2403 = vld [vmem:[%s2402] sm:$0xf]
        %v2404 = vld [vmem:[%s2402 + $0x4] sm:$0xf]
        %v2405 = vld [vmem:[%s2402 + $0x8] sm:$0xf]
        %v2406 = vld [vmem:[%s2402 + $0xc] sm:$0xf]
        %v2407 = vld [vmem:[%s2402 + $0x10] sm:$0xf]
        %v2408 = vld [vmem:[%s2402 + $0x14] sm:$0xf]
        %v2409 = vld [vmem:[%s2402 + $0x18] sm:$0xf]
        %v2410 = vld [vmem:[%s2402 + $0x1c] sm:$0xf]
        %v2411 = vld [vmem:[%s2402 + $0x20] sm:$0xf]
        %v2412 = vld [vmem:[%s2402 + $0x24] sm:$0xf]
        %v2413 = vld [vmem:[%s2402 + $0x28] sm:$0xf]
        %v2414 = vld [vmem:[%s2402 + $0x2c] sm:$0xf]
        %v2415 = vld [vmem:[%s2402 + $0x30] sm:$0xf]
        %v2416 = vld [vmem:[%s2402 + $0x34] sm:$0xf]
        %v2417 = vld [vmem:[%s2402 + $0x38] sm:$0xf]
        %v2418 = vld [vmem:[%s2402 + $0x3c] sm:$0xf]
        %v2419 = vunpack.c.l.b16 %v2319
        %v2420 = vunpack.c.l.b16 %v2329
        %v2421 = vunpack.c.l.b16 %v2343
        %v2422 = vunpack.c.l.b16 %v2353
        %v2423 = vunpack.c.l.b16 %v2367
        %v2424 = vunpack.c.l.b16 %v2377
        %v2425 = vunpack.c.l.b16 %v2391
        %v2426 = vunpack.c.l.b16 %v2401
        %v2427 = vpack.c.b16 %v2420, %v2419
        %v2428 = vpack.c.b16 %v2422, %v2421
        %v2429 = vpack.c.b16 %v2424, %v2423
        %v2430 = vpack.c.b16 %v2426, %v2425
        %v2451 = vunpack.c.l.b16 %v2403
        %v2452 = vunpack.c.l.b16 %v2404
        %v2453 = vunpack.c.l.b16 %v2405
        %v2454 = vunpack.c.l.b16 %v2406
        %v2455 = vunpack.c.l.b16 %v2407
        %v2456 = vunpack.c.l.b16 %v2408
        %v2457 = vunpack.c.l.b16 %v2409
        %v2458 = vunpack.c.l.b16 %v2410
        %v2459 = vunpack.c.l.b16 %v2411
        %v2460 = vunpack.c.l.b16 %v2412
        %v2461 = vunpack.c.l.b16 %v2413
        %v2462 = vunpack.c.l.b16 %v2414
        %v2463 = vunpack.c.l.b16 %v2415
        %v2464 = vunpack.c.l.b16 %v2416
        %v2465 = vunpack.c.l.b16 %v2417
        %v2466 = vunpack.c.l.b16 %v2418
        %v2467 = vpack.c.b16 %v2452, %v2451
        %v2468 = vpack.c.b16 %v2454, %v2453
        %v2469 = vpack.c.b16 %v2456, %v2455
        %v2470 = vpack.c.b16 %v2458, %v2457
        %v2471 = vpack.c.b16 %v2460, %v2459
        %v2472 = vpack.c.b16 %v2462, %v2461
        %v2473 = vpack.c.b16 %v2464, %v2463
        %v2474 = vpack.c.b16 %v2466, %v2465
        %2483 = vmatprep.subr.bf16.mxu0 0
        %2484 = vmatpush1.bf16.msra.mxu0 %v2467
        %2485 = vmatprep.subr.bf16.mxu0 0
        %2486 = vmatpush1.bf16.msra.mxu0 %v2468
        %2487 = vmatprep.subr.bf16.mxu0 0
        %2488 = vmatpush1.bf16.msra.mxu0 %v2469
        %2489 = vmatprep.subr.bf16.mxu0 0
        %2490 = vmatpush1.bf16.msra.mxu0 %v2470
        %2491 = vmatprep.subr.bf16.mxu0 0
        %2492 = vmatpush1.bf16.msra.mxu0 %v2471
        %2493 = vmatprep.subr.bf16.mxu0 0
        %2494 = vmatpush1.bf16.msra.mxu0 %v2472
        %2495 = vmatprep.subr.bf16.mxu0 0
        %2496 = vmatpush1.bf16.msra.mxu0 %v2473
        %2497 = vmatprep.subr.bf16.mxu0 0
        %2498 = vmatpush1.bf16.msra.mxu0 %v2474
        %2499 = vmatprep.subr.bf16.mxu0 0
        %2500 = vmatpush1.bf16.msra.mxu0 0
        %2501 = vmatprep.subr.bf16.mxu0 0
        %2502 = vmatpush1.bf16.msra.mxu0 0
        %2503 = vmatprep.subr.bf16.mxu0 0
        %2504 = vmatpush1.bf16.msra.mxu0 0
        %2505 = vmatprep.subr.bf16.mxu0 0
        %2506 = vmatpush1.bf16.msra.mxu0 0
        %2507 = vmatprep.subr.bf16.mxu0 0
        %2508 = vmatpush1.bf16.msra.mxu0 0
        %2509 = vmatprep.subr.bf16.mxu0 0
        %2510 = vmatpush1.bf16.msra.mxu0 0
        %2511 = vmatprep.subr.bf16.mxu0 0
        %2512 = vmatpush1.bf16.msra.mxu0 0
        %2513 = vmatprep.subr.bf16.mxu0 0
        %2514 = vmatpush1.bf16.msra.mxu0 0
        %2515 = vmatprep.mubr.bf16.mxu0 0
        %2516 = vmatmul.mubr.bf16.gmra.mrb[0].mxu0 %v2427
        %v2517 = vpop.f32.mrb[0].mxu0
        %v2518 = vadd.f32 0.0, %v2517
        %v2519 = vpop.f32.mrb[0].mxu0
        %v2520 = vpop.f32.mrb[0].mxu0
        %v2521 = vadd.f32 0.0, %v2520
        %v2522 = vpop.f32.mrb[0].mxu0
        %2523 = vmatprep.mubr.bf16.mxu0 0
        %2524 = vmatmul.mubr.bf16.gmra.mrb[0].mxu0 %v2428
        %v2525 = vpop.f32.mrb[0].mxu0
        %v2526 = vadd.f32 0.0, %v2525
        %v2527 = vpop.f32.mrb[0].mxu0
        %v2528 = vpop.f32.mrb[0].mxu0
        %v2529 = vadd.f32 0.0, %v2528
        %v2530 = vpop.f32.mrb[0].mxu0
        %2531 = vmatprep.mubr.bf16.mxu0 0
        %2532 = vmatmul.mubr.bf16.gmra.mrb[0].mxu0 %v2429
        %v2533 = vpop.f32.mrb[0].mxu0
        %v2534 = vadd.f32 0.0, %v2533
        %v2535 = vpop.f32.mrb[0].mxu0
        %v2536 = vpop.f32.mrb[0].mxu0
        %v2537 = vadd.f32 0.0, %v2536
        %v2538 = vpop.f32.mrb[0].mxu0
        %2539 = vmatprep.mubr.bf16.mxu0 0
        %2540 = vmatmul.mubr.bf16.gmra.mrb[0].mxu0 %v2430
        %v2541 = vpop.f32.mrb[0].mxu0
        %v2542 = vadd.f32 0.0, %v2541
        %v2543 = vpop.f32.mrb[0].mxu0
        %v2544 = vpop.f32.mrb[0].mxu0
        %v2545 = vadd.f32 0.0, %v2544
        %v2546 = vpop.f32.mrb[0].mxu0
        %2547 = vdwg.mxu0
        %v2548 = vadd.f32 %v2286, %v2518
        %v2549 = vadd.f32 %v2287, %v2521
        %v2550 = vadd.f32 %v2288, %v2526
        %v2551 = vadd.f32 %v2289, %v2529
        %v2552 = vadd.f32 %v2290, %v2534
        %v2553 = vadd.f32 %v2291, %v2537
        %v2554 = vadd.f32 %v2292, %v2542
        %v2555 = vadd.f32 %v2293, %v2545
        %v2556 = vld [vmem:[%s2123] sm:$0xe]
        %v2557 = vld [vmem:[%s2123 + $0xc] sm:$0xe]
        %v2558 = vld [vmem:[%s2123 + $0x18] sm:$0xe]
        %v2559 = vld [vmem:[%s2123 + $0x24] sm:$0xe]
        %v2572 = vrot.slane %v2556, 5
        %v2573 = vrot.slane %v2572, 4
        %v2574 = vrot.slane %v2295, 5
        %v2575 = vsel %vm1309, %v2573, %v2574
        %v2576 = vrot.slane %v2574, 4
        %v2577 = vrot.slane %v2296, 5
        %v2578 = vsel %vm1309, %v2576, %v2577
        %v2579 = vrot.slane %v2557, 5
        %v2580 = vrot.slane %v2579, 4
        %v2581 = vrot.slane %v2298, 5
        %v2582 = vsel %vm1309, %v2580, %v2581
        %v2583 = vrot.slane %v2581, 4
        %v2584 = vrot.slane %v2299, 5
        %v2585 = vsel %vm1309, %v2583, %v2584
        %v2586 = vrot.slane %v2558, 5
        %v2587 = vrot.slane %v2586, 4
        %v2588 = vrot.slane %v2301, 5
        %v2589 = vsel %vm1309, %v2587, %v2588
        %v2590 = vrot.slane %v2588, 4
        %v2591 = vrot.slane %v2302, 5
        %v2592 = vsel %vm1309, %v2590, %v2591
        %v2593 = vrot.slane %v2559, 5
        %v2594 = vrot.slane %v2593, 4
        %v2595 = vrot.slane %v2304, 5
        %v2596 = vsel %vm1309, %v2594, %v2595
        %v2597 = vrot.slane %v2595, 4
        %v2598 = vrot.slane %v2305, 5
        %v2599 = vsel %vm1309, %v2597, %v2598
        %s2600 = scalar_lea.vmem [#allocation11], 512
        %v2601 = vld [vmem:[%s2600] sm:$0xf]
        %v2602 = vld [vmem:[%s2600 + $0x4] sm:$0xf]
        %v2603 = vld [vmem:[%s2600 + $0x8] sm:$0xf]
        %v2604 = vld [vmem:[%s2600 + $0xc] sm:$0xf]
        %v2605 = vld [vmem:[%s2600 + $0x10] sm:$0xf]
        %v2606 = vld [vmem:[%s2600 + $0x14] sm:$0xf]
        %v2607 = vld [vmem:[%s2600 + $0x18] sm:$0xf]
        %v2608 = vld [vmem:[%s2600 + $0x1c] sm:$0xf]
        %v2609 = vld [vmem:[%s2600 + $0x20] sm:$0xf]
        %v2610 = vld [vmem:[%s2600 + $0x24] sm:$0xf]
        %v2611 = vld [vmem:[%s2600 + $0x28] sm:$0xf]
        %v2612 = vld [vmem:[%s2600 + $0x2c] sm:$0xf]
        %v2613 = vld [vmem:[%s2600 + $0x30] sm:$0xf]
        %v2614 = vld [vmem:[%s2600 + $0x34] sm:$0xf]
        %v2615 = vld [vmem:[%s2600 + $0x38] sm:$0xf]
        %v2616 = vld [vmem:[%s2600 + $0x3c] sm:$0xf]
        %v2617 = vunpack.c.l.b16 %v2575
        %v2618 = vunpack.c.l.b16 %v2578
        %v2619 = vunpack.c.l.b16 %v2582
        %v2620 = vunpack.c.l.b16 %v2585
        %v2621 = vunpack.c.l.b16 %v2589
        %v2622 = vunpack.c.l.b16 %v2592
        %v2623 = vunpack.c.l.b16 %v2596
        %v2624 = vunpack.c.l.b16 %v2599
        %v2625 = vpack.c.b16 %v2618, %v2617
        %v2626 = vpack.c.b16 %v2620, %v2619
        %v2627 = vpack.c.b16 %v2622, %v2621
        %v2628 = vpack.c.b16 %v2624, %v2623
        %v2649 = vunpack.c.l.b16 %v2601
        %v2650 = vunpack.c.l.b16 %v2602
        %v2651 = vunpack.c.l.b16 %v2603
        %v2652 = vunpack.c.l.b16 %v2604
        %v2653 = vunpack.c.l.b16 %v2605
        %v2654 = vunpack.c.l.b16 %v2606
        %v2655 = vunpack.c.l.b16 %v2607
        %v2656 = vunpack.c.l.b16 %v2608
        %v2657 = vunpack.c.l.b16 %v2609
        %v2658 = vunpack.c.l.b16 %v2610
        %v2659 = vunpack.c.l.b16 %v2611
        %v2660 = vunpack.c.l.b16 %v2612
        %v2661 = vunpack.c.l.b16 %v2613
        %v2662 = vunpack.c.l.b16 %v2614
        %v2663 = vunpack.c.l.b16 %v2615
        %v2664 = vunpack.c.l.b16 %v2616
        %v2665 = vpack.c.b16 %v2650, %v2649
        %v2666 = vpack.c.b16 %v2652, %v2651
        %v2667 = vpack.c.b16 %v2654, %v2653
        %v2668 = vpack.c.b16 %v2656, %v2655
        %v2669 = vpack.c.b16 %v2658, %v2657
        %v2670 = vpack.c.b16 %v2660, %v2659
        %v2671 = vpack.c.b16 %v2662, %v2661
        %v2672 = vpack.c.b16 %v2664, %v2663
        %2681 = vmatprep.subr.bf16.mxu0 0
        %2682 = vmatpush1.bf16.msra.mxu0 %v2665
        %2683 = vmatprep.subr.bf16.mxu0 0
        %2684 = vmatpush1.bf16.msra.mxu0 %v2666
        %2685 = vmatprep.subr.bf16.mxu0 0
        %2686 = vmatpush1.bf16.msra.mxu0 %v2667
        %2687 = vmatprep.subr.bf16.mxu0 0
        %2688 = vmatpush1.bf16.msra.mxu0 %v2668
        %2689 = vmatprep.subr.bf16.mxu0 0
        %2690 = vmatpush1.bf16.msra.mxu0 %v2669
        %2691 = vmatprep.subr.bf16.mxu0 0
        %2692 = vmatpush1.bf16.msra.mxu0 %v2670
        %2693 = vmatprep.subr.bf16.mxu0 0
        %2694 = vmatpush1.bf16.msra.mxu0 %v2671
        %2695 = vmatprep.subr.bf16.mxu0 0
        %2696 = vmatpush1.bf16.msra.mxu0 %v2672
        %2697 = vmatprep.subr.bf16.mxu0 0
        %2698 = vmatpush1.bf16.msra.mxu0 0
        %2699 = vmatprep.subr.bf16.mxu0 0
        %2700 = vmatpush1.bf16.msra.mxu0 0
        %2701 = vmatprep.subr.bf16.mxu0 0
        %2702 = vmatpush1.bf16.msra.mxu0 0
        %2703 = vmatprep.subr.bf16.mxu0 0
        %2704 = vmatpush1.bf16.msra.mxu0 0
        %2705 = vmatprep.subr.bf16.mxu0 0
        %2706 = vmatpush1.bf16.msra.mxu0 0
        %2707 = vmatprep.subr.bf16.mxu0 0
        %2708 = vmatpush1.bf16.msra.mxu0 0
        %2709 = vmatprep.subr.bf16.mxu0 0
        %2710 = vmatpush1.bf16.msra.mxu0 0
        %2711 = vmatprep.subr.bf16.mxu0 0
        %2712 = vmatpush1.bf16.msra.mxu0 0
        %2713 = vmatprep.mubr.bf16.mxu0 0
        %2714 = vmatmul.mubr.bf16.gmra.mrb[0].mxu0 %v2625
        %v2715 = vpop.f32.mrb[0].mxu0
        %v2716 = vadd.f32 0.0, %v2715
        %v2717 = vpop.f32.mrb[0].mxu0
        %v2718 = vpop.f32.mrb[0].mxu0
        %v2719 = vadd.f32 0.0, %v2718
        %v2720 = vpop.f32.mrb[0].mxu0
        %2721 = vmatprep.mubr.bf16.mxu0 0
        %2722 = vmatmul.mubr.bf16.gmra.mrb[0].mxu0 %v2626
        %v2723 = vpop.f32.mrb[0].mxu0
        %v2724 = vadd.f32 0.0, %v2723
        %v2725 = vpop.f32.mrb[0].mxu0
        %v2726 = vpop.f32.mrb[0].mxu0
        %v2727 = vadd.f32 0.0, %v2726
        %v2728 = vpop.f32.mrb[0].mxu0
        %2729 = vmatprep.mubr.bf16.mxu0 0
        %2730 = vmatmul.mubr.bf16.gmra.mrb[0].mxu0 %v2627
        %v2731 = vpop.f32.mrb[0].mxu0
        %v2732 = vadd.f32 0.0, %v2731
        %v2733 = vpop.f32.mrb[0].mxu0
        %v2734 = vpop.f32.mrb[0].mxu0
        %v2735 = vadd.f32 0.0, %v2734
        %v2736 = vpop.f32.mrb[0].mxu0
        %2737 = vmatprep.mubr.bf16.mxu0 0
        %2738 = vmatmul.mubr.bf16.gmra.mrb[0].mxu0 %v2628
        %v2739 = vpop.f32.mrb[0].mxu0
        %v2740 = vadd.f32 0.0, %v2739
        %v2741 = vpop.f32.mrb[0].mxu0
        %v2742 = vpop.f32.mrb[0].mxu0
        %v2743 = vadd.f32 0.0, %v2742
        %v2744 = vpop.f32.mrb[0].mxu0
        %2745 = vdwg.mxu0
        %v2746 = vadd.f32 %v2548, %v2716
        %v2747 = vadd.f32 %v2549, %v2719
        %v2748 = vadd.f32 %v2550, %v2724
        %v2749 = vadd.f32 %v2551, %v2727
        %v2750 = vadd.f32 %v2552, %v2732
        %v2751 = vadd.f32 %v2553, %v2735
        %v2752 = vadd.f32 %v2554, %v2740
        %v2753 = vadd.f32 %v2555, %v2743
        %v2754 = vld [vmem:[%s6] sm:$0x1]
        %v2756 = vlaneseq
        %v2757 = vshrl.u32 %v2756, 7
        %v2758 = vsub.s32 0, %v2757
        %v2759 = vrot.slane %v2754, %v2758
        %v2761 = vadd.f32 %v2746, %v2759
        %v2762 = vadd.f32 %v2747, %v2759
        %v2763 = vadd.f32 %v2748, %v2759
        %v2764 = vadd.f32 %v2749, %v2759
        %v2765 = vadd.f32 %v2750, %v2759
        %v2766 = vadd.f32 %v2751, %v2759
        %v2767 = vadd.f32 %v2752, %v2759
        %v2768 = vadd.f32 %v2753, %v2759
        %v2769 = vmax.f32 %v2761, 0.0
        %v2770 = vmax.f32 %v2762, 0.0
        %v2771 = vmax.f32 %v2763, 0.0
        %v2772 = vmax.f32 %v2764, 0.0
        %v2773 = vmax.f32 %v2765, 0.0
        %v2774 = vmax.f32 %v2766, 0.0
        %v2775 = vmax.f32 %v2767, 0.0
        %v2776 = vmax.f32 %v2768, 0.0
        %v2777 = vpack.c.bf16 %v2770, %v2769
        %v2778 = vpack.c.bf16 %v2772, %v2771
        %v2779 = vpack.c.bf16 %v2774, %v2773
        %v2780 = vpack.c.bf16 %v2776, %v2775
        %v2781 = vld [vmem:[#allocation12] sm:$0xf]
        %v2782 = vld [vmem:[#allocation12 + $0x4] sm:$0xf]
        %v2783 = vld [vmem:[#allocation12 + $0x8] sm:$0xf]
        %v2784 = vld [vmem:[#allocation12 + $0xc] sm:$0xf]
        %v2785 = vld [vmem:[#allocation12 + $0x10] sm:$0xf]
        %v2786 = vld [vmem:[#allocation12 + $0x14] sm:$0xf]
        %v2787 = vld [vmem:[#allocation12 + $0x18] sm:$0xf]
        %v2788 = vld [vmem:[#allocation12 + $0x1c] sm:$0xf]
        %v2789 = vld [vmem:[#allocation12 + $0x20] sm:$0xf]
        %v2790 = vld [vmem:[#allocation12 + $0x24] sm:$0xf]
        %v2791 = vld [vmem:[#allocation12 + $0x28] sm:$0xf]
        %v2792 = vld [vmem:[#allocation12 + $0x2c] sm:$0xf]
        %v2793 = vld [vmem:[#allocation12 + $0x30] sm:$0xf]
        %v2794 = vld [vmem:[#allocation12 + $0x34] sm:$0xf]
        %v2795 = vld [vmem:[#allocation12 + $0x38] sm:$0xf]
        %v2796 = vld [vmem:[#allocation12 + $0x3c] sm:$0xf]
        %v2797 = vld [vmem:[%s8] sm:$0x1]
        %v2799 = vlaneseq
        %v2800 = vshrl.u32 %v2799, 7
        %v2801 = vsub.s32 0, %v2800
        %v2802 = vrot.slane %v2797, %v2801
        %v2820 = vunpack.c.l.b16 %v2781
        %v2821 = vunpack.c.l.b16 %v2782
        %v2822 = vunpack.c.l.b16 %v2783
        %v2823 = vunpack.c.l.b16 %v2784
        %v2824 = vunpack.c.l.b16 %v2785
        %v2825 = vunpack.c.l.b16 %v2786
        %v2826 = vunpack.c.l.b16 %v2787
        %v2827 = vunpack.c.l.b16 %v2788
        %v2828 = vunpack.c.l.b16 %v2789
        %v2829 = vunpack.c.l.b16 %v2790
        %v2830 = vunpack.c.l.b16 %v2791
        %v2831 = vunpack.c.l.b16 %v2792
        %v2832 = vunpack.c.l.b16 %v2793
        %v2833 = vunpack.c.l.b16 %v2794
        %v2834 = vunpack.c.l.b16 %v2795
        %v2835 = vunpack.c.l.b16 %v2796
        %v2836 = vpack.c.b16 %v2821, %v2820
        %v2837 = vpack.c.b16 %v2823, %v2822
        %v2838 = vpack.c.b16 %v2825, %v2824
        %v2839 = vpack.c.b16 %v2827, %v2826
        %v2840 = vpack.c.b16 %v2829, %v2828
        %v2841 = vpack.c.b16 %v2831, %v2830
        %v2842 = vpack.c.b16 %v2833, %v2832
        %v2843 = vpack.c.b16 %v2835, %v2834
        %2852 = vmatprep.subr.bf16.mxu0 0
        %2853 = vmatpush1.bf16.msra.mxu0 %v2836
        %2854 = vmatprep.subr.bf16.mxu0 0
        %2855 = vmatpush1.bf16.msra.mxu0 %v2837
        %2856 = vmatprep.subr.bf16.mxu0 0
        %2857 = vmatpush1.bf16.msra.mxu0 %v2838
        %2858 = vmatprep.subr.bf16.mxu0 0
        %2859 = vmatpush1.bf16.msra.mxu0 %v2839
        %2860 = vmatprep.subr.bf16.mxu0 0
        %2861 = vmatpush1.bf16.msra.mxu0 %v2840
        %2862 = vmatprep.subr.bf16.mxu0 0
        %2863 = vmatpush1.bf16.msra.mxu0 %v2841
        %2864 = vmatprep.subr.bf16.mxu0 0
        %2865 = vmatpush1.bf16.msra.mxu0 %v2842
        %2866 = vmatprep.subr.bf16.mxu0 0
        %2867 = vmatpush1.bf16.msra.mxu0 %v2843
        %2868 = vmatprep.subr.bf16.mxu0 0
        %2869 = vmatpush1.bf16.msra.mxu0 0
        %2870 = vmatprep.subr.bf16.mxu0 0
        %2871 = vmatpush1.bf16.msra.mxu0 0
        %2872 = vmatprep.subr.bf16.mxu0 0
        %2873 = vmatpush1.bf16.msra.mxu0 0
        %2874 = vmatprep.subr.bf16.mxu0 0
        %2875 = vmatpush1.bf16.msra.mxu0 0
        %2876 = vmatprep.subr.bf16.mxu0 0
        %2877 = vmatpush1.bf16.msra.mxu0 0
        %2878 = vmatprep.subr.bf16.mxu0 0
        %2879 = vmatpush1.bf16.msra.mxu0 0
        %2880 = vmatprep.subr.bf16.mxu0 0
        %2881 = vmatpush1.bf16.msra.mxu0 0
        %2882 = vmatprep.subr.bf16.mxu0 0
        %2883 = vmatpush1.bf16.msra.mxu0 0
        %2884 = vmatprep.mubr.bf16.mxu0 0
        %2885 = vmatmul.mubr.bf16.gmra.mrb[0].mxu0 %v2777
        %v2886 = vpop.f32.mrb[0].mxu0
        %v2887 = vadd.f32 %v2802, %v2886
        %v2888 = vpop.f32.mrb[0].mxu0
        %v2889 = vpop.f32.mrb[0].mxu0
        %v2890 = vadd.f32 %v2802, %v2889
        %v2891 = vpop.f32.mrb[0].mxu0
        %2892 = vmatprep.mubr.bf16.mxu0 0
        %2893 = vmatmul.mubr.bf16.gmra.mrb[0].mxu0 %v2778
        %v2894 = vpop.f32.mrb[0].mxu0
        %v2895 = vadd.f32 %v2802, %v2894
        %v2896 = vpop.f32.mrb[0].mxu0
        %v2897 = vpop.f32.mrb[0].mxu0
        %v2898 = vadd.f32 %v2802, %v2897
        %v2899 = vpop.f32.mrb[0].mxu0
        %2900 = vmatprep.mubr.bf16.mxu0 0
        %2901 = vmatmul.mubr.bf16.gmra.mrb[0].mxu0 %v2779
        %v2902 = vpop.f32.mrb[0].mxu0
        %v2903 = vadd.f32 %v2802, %v2902
        %v2904 = vpop.f32.mrb[0].mxu0
        %v2905 = vpop.f32.mrb[0].mxu0
        %v2906 = vadd.f32 %v2802, %v2905
        %v2907 = vpop.f32.mrb[0].mxu0
        %2908 = vmatprep.mubr.bf16.mxu0 0
        %2909 = vmatmul.mubr.bf16.gmra.mrb[0].mxu0 %v2780
        %v2910 = vpop.f32.mrb[0].mxu0
        %v2911 = vadd.f32 %v2802, %v2910
        %v2912 = vpop.f32.mrb[0].mxu0
        %v2913 = vpop.f32.mrb[0].mxu0
        %v2914 = vadd.f32 %v2802, %v2913
        %v2915 = vpop.f32.mrb[0].mxu0
        %2916 = vdwg.mxu0
        %v2917 = vadd.f32 %v2887, %v534
        %v2918 = vadd.f32 %v2890, %v535
        %v2919 = vadd.f32 %v2895, %v536
        %v2920 = vadd.f32 %v2898, %v537
        %v2921 = vadd.f32 %v2903, %v538
        %v2922 = vadd.f32 %v2906, %v539
        %v2923 = vadd.f32 %v2911, %v540
        %v2924 = vadd.f32 %v2914, %v541
        %v2925 = vmax.f32 %v2917, 0.0
        %v2926 = vmax.f32 %v2918, 0.0
        %v2927 = vmax.f32 %v2919, 0.0
        %v2928 = vmax.f32 %v2920, 0.0
        %v2929 = vmax.f32 %v2921, 0.0
        %v2930 = vmax.f32 %v2922, 0.0
        %v2931 = vmax.f32 %v2923, 0.0
        %v2932 = vmax.f32 %v2924, 0.0
        %2933 = vst [vmem:[%s522] sm:$0xff] %v2925
        %2934 = vst [vmem:[%s522 + $0x8] sm:$0xff] %v2926
        %2935 = vst [vmem:[%s522 + $0x10] sm:$0xff] %v2927
        %2936 = vst [vmem:[%s522 + $0x18] sm:$0xff] %v2928
        %2937 = vst [vmem:[%s522 + $0x20] sm:$0xff] %v2929
        %2938 = vst [vmem:[%s522 + $0x28] sm:$0xff] %v2930
        %2939 = vst [vmem:[%s522 + $0x30] sm:$0xff] %v2931
        %2940 = vst [vmem:[%s522 + $0x38] sm:$0xff] %v2932
        %s2941 = sand.u32 %s279, 1
        %s2942 = scalar_lea.sflag [#allocation5], %s2941
        %s2943 = sand.u32 %s279, 1
        %s2944 = smul.addr %s2943, 64
        %s2945 = scalar_lea.vmem [#allocation14], %s2944
        // Predicated region
        $region81: #{tpu_custom_call.1} parent=55 // pred_check
          %p2946 = pneg %p289
        $region82: #{tpu_custom_call.1} parent=55 // pred_check_branch
          %2948 = sbr.rel (%p2946) target = $region84
        $region83: #{tpu_custom_call.1} parent=55 // pred_region
          %s2949 = smul.u32 4, %s36
          %s2951 = ssub.s32 1024, 1024
          %2952 = vsyncadd %s2942, %s2951
          %s2953 = smul.addr %s2949, 2
          %s2954 = smul.addr %s35, 32
          %s2955 = sadd.s32 %s2953, %s2954
          %s2956 = smul.addr %s2955, 128
          %s2957 = scalar_lea.hbm %s9, %s2956
          %s2958 = sshll.u32 %s2945, 4
          %s2959 = int_to_ptr.vmem [resolvable:$true] %s2958
          %2964 = dma.vmem_to_hbm [thread:$0]  %s2959, 1024, %s2957, %s2942, 128, 128, 8
        $region84: #{tpu_custom_call.1} parent=55 // pred_fallthru
          _
      $region56: #{tpu_custom_call.1} parent=5 // pred_fallthru
        _
      %p2965 = scmp.le.s32.totalorder 2, %s26
      // Predicated region
      $region85: #{tpu_custom_call.1} parent=5 // pred_check
        %p2966 = pneg %p2965
      $region86: #{tpu_custom_call.1} parent=5 // pred_check_branch
        %2968 = sbr.rel (%p2966) target = $region88
      $region87: #{tpu_custom_call.1} parent=5 // pred_region
        %s2969 = ssub.s32 %s26, 2
        // Predicated region
        $region89: #{tpu_custom_call.1} parent=87 // pred_check
          %p2970 = pneg %p295
        $region90: #{tpu_custom_call.1} parent=87 // pred_check_branch
          %2972 = sbr.rel (%p2970) target = $region92
        $region91: #{tpu_custom_call.1} parent=87 // pred_region
          %s2973 = sand.u32 %s280, 1
          %s2974 = scalar_lea.sflag [#allocation5], %s2973
          %s2975 = sand.u32 %s280, 1
          %s2976 = smul.addr %s2975, 64
          %s2977 = scalar_lea.vmem [#allocation14], %s2976
          %2978 = dma.done %s2974, 1024
        $region92: #{tpu_custom_call.1} parent=87 // pred_fallthru
          _
      $region88: #{tpu_custom_call.1} parent=5 // pred_fallthru
        _
    $region6: #{tpu_custom_call.1} parent=1 // loop_footer
      %s30 = sadd.s32 1, %s26
    $region7: #{tpu_custom_call.1} parent=1 // loop_footer_branch
      %25 = sbr.rel target = $region3
    $region8: #{tpu_custom_call.1} parent=1 // loop_exit
      _
    %2979 = vsyncpa [#allocation4], 1
    %s2980 = scalar_lea.sflag [#allocation4], 1
    %2981 = vsyncpa %s2980, 1
    %2982 = vsyncpa [#allocation7], 1
    %s2983 = scalar_lea.sflag [#allocation7], 1
    %2984 = vsyncpa %s2983, 1
    %2985 = vsyncpa [#allocation10], 1
    %2986 = vsyncpa [#allocation13], 1
    %2987 = vsyncpa [#allocation5], 1
    %s2988 = scalar_lea.sflag [#allocation5], 1
    %2989 = vsyncpa %s2988, 1

</llo_original>
